<compile_context>
chip_gen: v5e
topology: v5e:2x2
jax: 0.10.0
libtpu: 0.0.40
codegen_flags: <defaults>
</compile_context>

<pallas_src>
import jax
import jax.numpy as jnp
from jax.experimental import pallas as pl
from jax.experimental.pallas import tpu as pltpu


def _unet_up_kernel(xpad_ref, w_ref, out_ref):
    # xpad_ref: (1, H+2, W+2, C_in)   bf16, spatially padded NHWC input (one batch)
    # w_ref:    (16, C_in, C_out_p)   bf16, packed ConvTranspose2d taps
    # out_ref:  (1, 4*P, C_out_p)     f32, row = (r*2+s)*P + (m*W + p)
    H = xpad_ref.shape[1] - 2
    W = xpad_ref.shape[2] - 2
    C_in = xpad_ref.shape[3]
    P = H * W

    # Fused im2col: 9 shifted views of the padded input, built in VMEM only.
    taps = {}
    for dh in range(3):
        for dw in range(3):
            taps[(dh, dw)] = xpad_ref[0, dh:dh + H, dw:dw + W, :].reshape(P, C_in)

    # ConvTranspose2d(4, 2, 1, bias=False) via parity decomposition:
    # 16 exact tap matmuls (bf16 MXU, f32 accumulate), one f32 block per parity.
    accs = []
    for r in range(2):
        for s in range(2):
            acc = None
            for a in range(2):
                for b in range(2):
                    t = (r * 2 + s) * 4 + a * 2 + b
                    part = jnp.dot(taps[(r + a, s + b)], w_ref[t],
                                   preferred_element_type=jnp.float32)
                    acc = part if acc is None else acc + part
            accs.append(acc)  # (P, C_out_p) f32

    # InstanceNorm2d (affine=False, eps=1e-5): stats over the full 2H x 2W
    # spatial extent == over all rows of all 4 parity blocks. Single-pass f32.
    s1 = accs[0].sum(axis=0, keepdims=True)
    s2 = (accs[0] * accs[0]).sum(axis=0, keepdims=True)
    for acc in accs[1:]:
        s1 = s1 + acc.sum(axis=0, keepdims=True)
        s2 = s2 + (acc * acc).sum(axis=0, keepdims=True)
    n = jnp.float32(4 * P)
    mean = s1 / n
    var = s2 / n - mean * mean
    inv = jax.lax.rsqrt(var + 1e-5)
    beta = -mean * inv

    # Fused normalize + ReLU; lane-dense (C_out_p % 128 == 0) unmasked stores.
    for i, acc in enumerate(accs):
        y = jnp.maximum(acc * inv + beta, 0.0)
        out_ref[0, i * P:(i + 1) * P, :] = y.astype(out_ref.dtype)


def unet_up(x, weight, skip):
    """
    x:      (N, C_in, H, W)        float32, NCHW
    weight: (C_in, C_out, 4, 4)    ConvTranspose2d weight (bias=False)
    skip:   (N, C_skip, 2H, 2W)    skip connection (concatenated on channels)
    returns (N, C_out + C_skip, 2H, 2W)
    """
    N, C_in, H, W = x.shape
    C_out = weight.shape[1]
    P = H * W
    C_out_p = ((C_out + 127) // 128) * 128  # lane-dense output channels

    # NCHW -> NHWC + spatial pad of 1 (cheap; no 9x im2col replication in HBM),
    # cast to bf16 for the MXU.
    x_nhwc = jnp.transpose(x, (0, 2, 3, 1))
    xpad = jnp.pad(x_nhwc, ((0, 0), (1, 1), (1, 1), (0, 0))).astype(jnp.bfloat16)

    # Pack the 16 kernel taps: t = (r*2+s)*4 + a*2 + b -> (C_in, C_out_p), zero
    # padded on the channel (lane) dim, bf16.
    w_flat = jnp.zeros((16, C_in, C_out_p), jnp.float32)
    for r in range(2):
        for s in range(2):
            for a in range(2):
                for b in range(2):
                    t = (r * 2 + s) * 4 + a * 2 + b
                    w_flat = w_flat.at[t, :, :C_out].set(
                        weight[:, :, 3 - r - 2 * a, 3 - s - 2 * b])
    w_flat = w_flat.astype(jnp.bfloat16)

    conv = pl.pallas_call(
        _unet_up_kernel,
        out_shape=jax.ShapeDtypeStruct((N, 4 * P, C_out_p), jnp.float32),
        grid_spec=pltpu.PrefetchScalarGridSpec(
            num_scalar_prefetch=0,
            grid=(N,),
            in_specs=[
                pl.BlockSpec((1, H + 2, W + 2, C_in), lambda n: (n, 0, 0, 0)),
                pl.BlockSpec((16, C_in, C_out_p), lambda n: (0, 0, 0)),
            ],
            out_specs=pl.BlockSpec((1, 4 * P, C_out_p), lambda n: (n, 0, 0)),
        ),
        compiler_params=pltpu.CompilerParams(
            dimension_semantics=("parallel",),
            vmem_limit_bytes=32 * 1024 * 1024,
        ),
    )(xpad, w_flat)

    # Pixel-shuffle un-interleave (pure layout op in XLA), drop padded channels,
    # then concat with the skip connection on the channel dim.
    y = conv.reshape(N, 2, 2, H, W, C_out_p)[..., :C_out]
    y = jnp.transpose(y, (0, 5, 3, 1, 4, 2)).reshape(N, C_out, 2 * H, 2 * W)
    return jnp.concatenate([y, skip.astype(y.dtype)], axis=1)


if __name__ == "__main__":
    key = jax.random.PRNGKey(0)
    kx, kw, ks = jax.random.split(key, 3)

    # UNetUp(in_size=4, out_size=8) at small spatial size.
    N, C_in, C_out, H, W = 2, 4, 8, 16, 16
    x = jax.random.normal(kx, (N, C_in, H, W), dtype=jnp.float32)
    weight = jax.random.normal(kw, (C_in, C_out, 4, 4), dtype=jnp.float32) * 0.05
    skip = jax.random.normal(ks, (N, C_out, 2 * H, 2 * W), dtype=jnp.float32)

    out = jax.jit(unet_up)(x, weight, skip)
    jax.block_until_ready(out)
    assert out.shape == (N, 2 * C_out, 2 * H, 2 * W)

    # Reference: ConvTranspose2d == lhs-dilated conv with flipped/transposed kernel.
    rhs = jnp.transpose(jnp.flip(weight, (2, 3)), (1, 0, 2, 3))  # (C_out, C_in, 4, 4)
    conv_ref = jax.lax.conv_general_dilated(
        x, rhs, window_strides=(1, 1), padding=((2, 2), (2, 2)),
        lhs_dilation=(2, 2), rhs_dilation=(1, 1),
        dimension_numbers=("NCHW", "OIHW", "NCHW"),
        precision=jax.lax.Precision.HIGHEST)
    mean = conv_ref.mean(axis=(2, 3), keepdims=True)
    var = conv_ref.var(axis=(2, 3), keepdims=True)
    ref = jnp.maximum((conv_ref - mean) * jax.lax.rsqrt(var + 1e-5), 0.0)
    ref = jnp.concatenate([ref, skip], axis=1)

    err = float(jnp.max(jnp.abs(out - ref)))
    assert err < 1e-1, f"max abs err {err}"
    print("KERNEL_OK")
</pallas_src>

<mosaic_0001>
module attributes {stable_mosaic.version = 11 : i64} {
  func.func @_unet_up_kernel(%arg0: i32, %arg1: memref<1x18x18x4xbf16, #tpu.memory_space<vmem>>, %arg2: memref<16x4x128xbf16, #tpu.memory_space<vmem>>, %arg3: memref<1x1024x128xf32, #tpu.memory_space<vmem>>) attributes {dimension_semantics = [#tpu.dimension_semantics<parallel>], iteration_bounds = array<i64: 2>, scalar_prefetch = 0 : i64, scratch_operands = 0 : i64, tpu.core_type = #tpu.core_type<tc>, window_params = [{transform_indices = @transform_0, window_bounds = array<i64: 1, 18, 18, 4>}, {pipeline_mode = #tpu.pipeline_mode<synchronous>, transform_indices = @transform_1, window_bounds = array<i64: 16, 4, 128>}, {transform_indices = @transform_2, window_bounds = array<i64: 1, 1024, 128>}]} {
    %c0 = arith.constant 0 : index
    %c0_0 = arith.constant 0 : index
    %c0_1 = arith.constant 0 : index
    %c0_2 = arith.constant 0 : index
    %0 = vector.load %arg1[%c0, %c0_0, %c0_1, %c0_2] : memref<1x18x18x4xbf16, #tpu.memory_space<vmem>>, vector<1x16x16x4xbf16>
    %1 = vector.shape_cast %0 : vector<1x16x16x4xbf16> to vector<16x16x4xbf16>
    %2 = vector.shape_cast %1 : vector<16x16x4xbf16> to vector<256x4xbf16>
    %c0_3 = arith.constant 0 : index
    %c0_4 = arith.constant 0 : index
    %c1 = arith.constant 1 : index
    %c0_5 = arith.constant 0 : index
    %3 = vector.load %arg1[%c0_3, %c0_4, %c1, %c0_5] : memref<1x18x18x4xbf16, #tpu.memory_space<vmem>>, vector<1x16x16x4xbf16>
    %4 = vector.shape_cast %3 : vector<1x16x16x4xbf16> to vector<16x16x4xbf16>
    %5 = vector.shape_cast %4 : vector<16x16x4xbf16> to vector<256x4xbf16>
    %c0_6 = arith.constant 0 : index
    %c0_7 = arith.constant 0 : index
    %c2 = arith.constant 2 : index
    %c0_8 = arith.constant 0 : index
    %6 = vector.load %arg1[%c0_6, %c0_7, %c2, %c0_8] : memref<1x18x18x4xbf16, #tpu.memory_space<vmem>>, vector<1x16x16x4xbf16>
    %7 = vector.shape_cast %6 : vector<1x16x16x4xbf16> to vector<16x16x4xbf16>
    %8 = vector.shape_cast %7 : vector<16x16x4xbf16> to vector<256x4xbf16>
    %c0_9 = arith.constant 0 : index
    %c1_10 = arith.constant 1 : index
    %c0_11 = arith.constant 0 : index
    %c0_12 = arith.constant 0 : index
    %9 = vector.load %arg1[%c0_9, %c1_10, %c0_11, %c0_12] : memref<1x18x18x4xbf16, #tpu.memory_space<vmem>>, vector<1x16x16x4xbf16>
    %10 = vector.shape_cast %9 : vector<1x16x16x4xbf16> to vector<16x16x4xbf16>
    %11 = vector.shape_cast %10 : vector<16x16x4xbf16> to vector<256x4xbf16>
    %c0_13 = arith.constant 0 : index
    %c1_14 = arith.constant 1 : index
    %c1_15 = arith.constant 1 : index
    %c0_16 = arith.constant 0 : index
    %12 = vector.load %arg1[%c0_13, %c1_14, %c1_15, %c0_16] : memref<1x18x18x4xbf16, #tpu.memory_space<vmem>>, vector<1x16x16x4xbf16>
    %13 = vector.shape_cast %12 : vector<1x16x16x4xbf16> to vector<16x16x4xbf16>
    %14 = vector.shape_cast %13 : vector<16x16x4xbf16> to vector<256x4xbf16>
    %c0_17 = arith.constant 0 : index
    %c1_18 = arith.constant 1 : index
    %c2_19 = arith.constant 2 : index
    %c0_20 = arith.constant 0 : index
    %15 = vector.load %arg1[%c0_17, %c1_18, %c2_19, %c0_20] : memref<1x18x18x4xbf16, #tpu.memory_space<vmem>>, vector<1x16x16x4xbf16>
    %16 = vector.shape_cast %15 : vector<1x16x16x4xbf16> to vector<16x16x4xbf16>
    %17 = vector.shape_cast %16 : vector<16x16x4xbf16> to vector<256x4xbf16>
    %c0_21 = arith.constant 0 : index
    %c2_22 = arith.constant 2 : index
    %c0_23 = arith.constant 0 : index
    %c0_24 = arith.constant 0 : index
    %18 = vector.load %arg1[%c0_21, %c2_22, %c0_23, %c0_24] : memref<1x18x18x4xbf16, #tpu.memory_space<vmem>>, vector<1x16x16x4xbf16>
    %19 = vector.shape_cast %18 : vector<1x16x16x4xbf16> to vector<16x16x4xbf16>
    %20 = vector.shape_cast %19 : vector<16x16x4xbf16> to vector<256x4xbf16>
    %c0_25 = arith.constant 0 : index
    %c2_26 = arith.constant 2 : index
    %c1_27 = arith.constant 1 : index
    %c0_28 = arith.constant 0 : index
    %21 = vector.load %arg1[%c0_25, %c2_26, %c1_27, %c0_28] : memref<1x18x18x4xbf16, #tpu.memory_space<vmem>>, vector<1x16x16x4xbf16>
    %22 = vector.shape_cast %21 : vector<1x16x16x4xbf16> to vector<16x16x4xbf16>
    %23 = vector.shape_cast %22 : vector<16x16x4xbf16> to vector<256x4xbf16>
    %c0_29 = arith.constant 0 : index
    %c2_30 = arith.constant 2 : index
    %c2_31 = arith.constant 2 : index
    %c0_32 = arith.constant 0 : index
    %24 = vector.load %arg1[%c0_29, %c2_30, %c2_31, %c0_32] : memref<1x18x18x4xbf16, #tpu.memory_space<vmem>>, vector<1x16x16x4xbf16>
    %25 = vector.shape_cast %24 : vector<1x16x16x4xbf16> to vector<16x16x4xbf16>
    %26 = vector.shape_cast %25 : vector<16x16x4xbf16> to vector<256x4xbf16>
    %c0_33 = arith.constant 0 : index
    %c0_34 = arith.constant 0 : index
    %c0_35 = arith.constant 0 : index
    %27 = vector.load %arg2[%c0_33, %c0_34, %c0_35] : memref<16x4x128xbf16, #tpu.memory_space<vmem>>, vector<1x4x128xbf16>
    %28 = vector.shape_cast %27 : vector<1x4x128xbf16> to vector<4x128xbf16>
    %cst = arith.constant dense<0.000000e+00> : vector<256x128xf32>
    %29 = tpu.matmul %2, %28, %cst {dimension_numbers = #tpu.dot_dimension_numbers<[1], [0], [0], [1], [0, 0, 1, 1], [], []>} : vector<256x4xbf16>, vector<4x128xbf16>, vector<256x128xf32> -> vector<256x128xf32>
    %c1_36 = arith.constant 1 : index
    %c0_37 = arith.constant 0 : index
    %c0_38 = arith.constant 0 : index
    %30 = vector.load %arg2[%c1_36, %c0_37, %c0_38] : memref<16x4x128xbf16, #tpu.memory_space<vmem>>, vector<1x4x128xbf16>
    %31 = vector.shape_cast %30 : vector<1x4x128xbf16> to vector<4x128xbf16>
    %cst_39 = arith.constant dense<0.000000e+00> : vector<256x128xf32>
    %32 = tpu.matmul %5, %31, %cst_39 {dimension_numbers = #tpu.dot_dimension_numbers<[1], [0], [0], [1], [0, 0, 1, 1], [], []>} : vector<256x4xbf16>, vector<4x128xbf16>, vector<256x128xf32> -> vector<256x128xf32>
    %33 = arith.addf %29, %32 : vector<256x128xf32>
    %c2_40 = arith.constant 2 : index
    %c0_41 = arith.constant 0 : index
    %c0_42 = arith.constant 0 : index
    %34 = vector.load %arg2[%c2_40, %c0_41, %c0_42] : memref<16x4x128xbf16, #tpu.memory_space<vmem>>, vector<1x4x128xbf16>
    %35 = vector.shape_cast %34 : vector<1x4x128xbf16> to vector<4x128xbf16>
    %cst_43 = arith.constant dense<0.000000e+00> : vector<256x128xf32>
    %36 = tpu.matmul %11, %35, %cst_43 {dimension_numbers = #tpu.dot_dimension_numbers<[1], [0], [0], [1], [0, 0, 1, 1], [], []>} : vector<256x4xbf16>, vector<4x128xbf16>, vector<256x128xf32> -> vector<256x128xf32>
    %37 = arith.addf %33, %36 : vector<256x128xf32>
    %c3 = arith.constant 3 : index
    %c0_44 = arith.constant 0 : index
    %c0_45 = arith.constant 0 : index
    %38 = vector.load %arg2[%c3, %c0_44, %c0_45] : memref<16x4x128xbf16, #tpu.memory_space<vmem>>, vector<1x4x128xbf16>
    %39 = vector.shape_cast %38 : vector<1x4x128xbf16> to vector<4x128xbf16>
    %cst_46 = arith.constant dense<0.000000e+00> : vector<256x128xf32>
    %40 = tpu.matmul %14, %39, %cst_46 {dimension_numbers = #tpu.dot_dimension_numbers<[1], [0], [0], [1], [0, 0, 1, 1], [], []>} : vector<256x4xbf16>, vector<4x128xbf16>, vector<256x128xf32> -> vector<256x128xf32>
    %41 = arith.addf %37, %40 : vector<256x128xf32>
    %c4 = arith.constant 4 : index
    %c0_47 = arith.constant 0 : index
    %c0_48 = arith.constant 0 : index
    %42 = vector.load %arg2[%c4, %c0_47, %c0_48] : memref<16x4x128xbf16, #tpu.memory_space<vmem>>, vector<1x4x128xbf16>
    %43 = vector.shape_cast %42 : vector<1x4x128xbf16> to vector<4x128xbf16>
    %cst_49 = arith.constant dense<0.000000e+00> : vector<256x128xf32>
    %44 = tpu.matmul %5, %43, %cst_49 {dimension_numbers = #tpu.dot_dimension_numbers<[1], [0], [0], [1], [0, 0, 1, 1], [], []>} : vector<256x4xbf16>, vector<4x128xbf16>, vector<256x128xf32> -> vector<256x128xf32>
    %c5 = arith.constant 5 : index
    %c0_50 = arith.constant 0 : index
    %c0_51 = arith.constant 0 : index
    %45 = vector.load %arg2[%c5, %c0_50, %c0_51] : memref<16x4x128xbf16, #tpu.memory_space<vmem>>, vector<1x4x128xbf16>
    %46 = vector.shape_cast %45 : vector<1x4x128xbf16> to vector<4x128xbf16>
    %cst_52 = arith.constant dense<0.000000e+00> : vector<256x128xf32>
    %47 = tpu.matmul %8, %46, %cst_52 {dimension_numbers = #tpu.dot_dimension_numbers<[1], [0], [0], [1], [0, 0, 1, 1], [], []>} : vector<256x4xbf16>, vector<4x128xbf16>, vector<256x128xf32> -> vector<256x128xf32>
    %48 = arith.addf %44, %47 : vector<256x128xf32>
    %c6 = arith.constant 6 : index
    %c0_53 = arith.constant 0 : index
    %c0_54 = arith.constant 0 : index
    %49 = vector.load %arg2[%c6, %c0_53, %c0_54] : memref<16x4x128xbf16, #tpu.memory_space<vmem>>, vector<1x4x128xbf16>
    %50 = vector.shape_cast %49 : vector<1x4x128xbf16> to vector<4x128xbf16>
    %cst_55 = arith.constant dense<0.000000e+00> : vector<256x128xf32>
    %51 = tpu.matmul %14, %50, %cst_55 {dimension_numbers = #tpu.dot_dimension_numbers<[1], [0], [0], [1], [0, 0, 1, 1], [], []>} : vector<256x4xbf16>, vector<4x128xbf16>, vector<256x128xf32> -> vector<256x128xf32>
    %52 = arith.addf %48, %51 : vector<256x128xf32>
    %c7 = arith.constant 7 : index
    %c0_56 = arith.constant 0 : index
    %c0_57 = arith.constant 0 : index
    %53 = vector.load %arg2[%c7, %c0_56, %c0_57] : memref<16x4x128xbf16, #tpu.memory_space<vmem>>, vector<1x4x128xbf16>
    %54 = vector.shape_cast %53 : vector<1x4x128xbf16> to vector<4x128xbf16>
    %cst_58 = arith.constant dense<0.000000e+00> : vector<256x128xf32>
    %55 = tpu.matmul %17, %54, %cst_58 {dimension_numbers = #tpu.dot_dimension_numbers<[1], [0], [0], [1], [0, 0, 1, 1], [], []>} : vector<256x4xbf16>, vector<4x128xbf16>, vector<256x128xf32> -> vector<256x128xf32>
    %56 = arith.addf %52, %55 : vector<256x128xf32>
    %c8 = arith.constant 8 : index
    %c0_59 = arith.constant 0 : index
    %c0_60 = arith.constant 0 : index
    %57 = vector.load %arg2[%c8, %c0_59, %c0_60] : memref<16x4x128xbf16, #tpu.memory_space<vmem>>, vector<1x4x128xbf16>
    %58 = vector.shape_cast %57 : vector<1x4x128xbf16> to vector<4x128xbf16>
    %cst_61 = arith.constant dense<0.000000e+00> : vector<256x128xf32>
    %59 = tpu.matmul %11, %58, %cst_61 {dimension_numbers = #tpu.dot_dimension_numbers<[1], [0], [0], [1], [0, 0, 1, 1], [], []>} : vector<256x4xbf16>, vector<4x128xbf16>, vector<256x128xf32> -> vector<256x128xf32>
    %c9 = arith.constant 9 : index
    %c0_62 = arith.constant 0 : index
    %c0_63 = arith.constant 0 : index
    %60 = vector.load %arg2[%c9, %c0_62, %c0_63] : memref<16x4x128xbf16, #tpu.memory_space<vmem>>, vector<1x4x128xbf16>
    %61 = vector.shape_cast %60 : vector<1x4x128xbf16> to vector<4x128xbf16>
    %cst_64 = arith.constant dense<0.000000e+00> : vector<256x128xf32>
    %62 = tpu.matmul %14, %61, %cst_64 {dimension_numbers = #tpu.dot_dimension_numbers<[1], [0], [0], [1], [0, 0, 1, 1], [], []>} : vector<256x4xbf16>, vector<4x128xbf16>, vector<256x128xf32> -> vector<256x128xf32>
    %63 = arith.addf %59, %62 : vector<256x128xf32>
    %c10 = arith.constant 10 : index
    %c0_65 = arith.constant 0 : index
    %c0_66 = arith.constant 0 : index
    %64 = vector.load %arg2[%c10, %c0_65, %c0_66] : memref<16x4x128xbf16, #tpu.memory_space<vmem>>, vector<1x4x128xbf16>
    %65 = vector.shape_cast %64 : vector<1x4x128xbf16> to vector<4x128xbf16>
    %cst_67 = arith.constant dense<0.000000e+00> : vector<256x128xf32>
    %66 = tpu.matmul %20, %65, %cst_67 {dimension_numbers = #tpu.dot_dimension_numbers<[1], [0], [0], [1], [0, 0, 1, 1], [], []>} : vector<256x4xbf16>, vector<4x128xbf16>, vector<256x128xf32> -> vector<256x128xf32>
    %67 = arith.addf %63, %66 : vector<256x128xf32>
    %c11 = arith.constant 11 : index
    %c0_68 = arith.constant 0 : index
    %c0_69 = arith.constant 0 : index
    %68 = vector.load %arg2[%c11, %c0_68, %c0_69] : memref<16x4x128xbf16, #tpu.memory_space<vmem>>, vector<1x4x128xbf16>
    %69 = vector.shape_cast %68 : vector<1x4x128xbf16> to vector<4x128xbf16>
    %cst_70 = arith.constant dense<0.000000e+00> : vector<256x128xf32>
    %70 = tpu.matmul %23, %69, %cst_70 {dimension_numbers = #tpu.dot_dimension_numbers<[1], [0], [0], [1], [0, 0, 1, 1], [], []>} : vector<256x4xbf16>, vector<4x128xbf16>, vector<256x128xf32> -> vector<256x128xf32>
    %71 = arith.addf %67, %70 : vector<256x128xf32>
    %c12 = arith.constant 12 : index
    %c0_71 = arith.constant 0 : index
    %c0_72 = arith.constant 0 : index
    %72 = vector.load %arg2[%c12, %c0_71, %c0_72] : memref<16x4x128xbf16, #tpu.memory_space<vmem>>, vector<1x4x128xbf16>
    %73 = vector.shape_cast %72 : vector<1x4x128xbf16> to vector<4x128xbf16>
    %cst_73 = arith.constant dense<0.000000e+00> : vector<256x128xf32>
    %74 = tpu.matmul %14, %73, %cst_73 {dimension_numbers = #tpu.dot_dimension_numbers<[1], [0], [0], [1], [0, 0, 1, 1], [], []>} : vector<256x4xbf16>, vector<4x128xbf16>, vector<256x128xf32> -> vector<256x128xf32>
    %c13 = arith.constant 13 : index
    %c0_74 = arith.constant 0 : index
    %c0_75 = arith.constant 0 : index
    %75 = vector.load %arg2[%c13, %c0_74, %c0_75] : memref<16x4x128xbf16, #tpu.memory_space<vmem>>, vector<1x4x128xbf16>
    %76 = vector.shape_cast %75 : vector<1x4x128xbf16> to vector<4x128xbf16>
    %cst_76 = arith.constant dense<0.000000e+00> : vector<256x128xf32>
    %77 = tpu.matmul %17, %76, %cst_76 {dimension_numbers = #tpu.dot_dimension_numbers<[1], [0], [0], [1], [0, 0, 1, 1], [], []>} : vector<256x4xbf16>, vector<4x128xbf16>, vector<256x128xf32> -> vector<256x128xf32>
    %78 = arith.addf %74, %77 : vector<256x128xf32>
    %c14 = arith.constant 14 : index
    %c0_77 = arith.constant 0 : index
    %c0_78 = arith.constant 0 : index
    %79 = vector.load %arg2[%c14, %c0_77, %c0_78] : memref<16x4x128xbf16, #tpu.memory_space<vmem>>, vector<1x4x128xbf16>
    %80 = vector.shape_cast %79 : vector<1x4x128xbf16> to vector<4x128xbf16>
    %cst_79 = arith.constant dense<0.000000e+00> : vector<256x128xf32>
    %81 = tpu.matmul %23, %80, %cst_79 {dimension_numbers = #tpu.dot_dimension_numbers<[1], [0], [0], [1], [0, 0, 1, 1], [], []>} : vector<256x4xbf16>, vector<4x128xbf16>, vector<256x128xf32> -> vector<256x128xf32>
    %82 = arith.addf %78, %81 : vector<256x128xf32>
    %c15 = arith.constant 15 : index
    %c0_80 = arith.constant 0 : index
    %c0_81 = arith.constant 0 : index
    %83 = vector.load %arg2[%c15, %c0_80, %c0_81] : memref<16x4x128xbf16, #tpu.memory_space<vmem>>, vector<1x4x128xbf16>
    %84 = vector.shape_cast %83 : vector<1x4x128xbf16> to vector<4x128xbf16>
    %cst_82 = arith.constant dense<0.000000e+00> : vector<256x128xf32>
    %85 = tpu.matmul %26, %84, %cst_82 {dimension_numbers = #tpu.dot_dimension_numbers<[1], [0], [0], [1], [0, 0, 1, 1], [], []>} : vector<256x4xbf16>, vector<4x128xbf16>, vector<256x128xf32> -> vector<256x128xf32>
    %86 = arith.addf %82, %85 : vector<256x128xf32>
    %cst_83 = arith.constant dense<0.000000e+00> : vector<128xf32>
    %87 = vector.multi_reduction <add>, %41, %cst_83 [0] : vector<256x128xf32> to vector<128xf32>
    %88 = vector.shape_cast %87 : vector<128xf32> to vector<1x128xf32>
    %89 = arith.mulf %41, %41 : vector<256x128xf32>
    %cst_84 = arith.constant dense<0.000000e+00> : vector<128xf32>
    %90 = vector.multi_reduction <add>, %89, %cst_84 [0] : vector<256x128xf32> to vector<128xf32>
    %91 = vector.shape_cast %90 : vector<128xf32> to vector<1x128xf32>
    %cst_85 = arith.constant dense<0.000000e+00> : vector<128xf32>
    %92 = vector.multi_reduction <add>, %56, %cst_85 [0] : vector<256x128xf32> to vector<128xf32>
    %93 = vector.shape_cast %92 : vector<128xf32> to vector<1x128xf32>
    %94 = arith.addf %88, %93 : vector<1x128xf32>
    %95 = arith.mulf %56, %56 : vector<256x128xf32>
    %cst_86 = arith.constant dense<0.000000e+00> : vector<128xf32>
    %96 = vector.multi_reduction <add>, %95, %cst_86 [0] : vector<256x128xf32> to vector<128xf32>
    %97 = vector.shape_cast %96 : vector<128xf32> to vector<1x128xf32>
    %98 = arith.addf %91, %97 : vector<1x128xf32>
    %cst_87 = arith.constant dense<0.000000e+00> : vector<128xf32>
    %99 = vector.multi_reduction <add>, %71, %cst_87 [0] : vector<256x128xf32> to vector<128xf32>
    %100 = vector.shape_cast %99 : vector<128xf32> to vector<1x128xf32>
    %101 = arith.addf %94, %100 : vector<1x128xf32>
    %102 = arith.mulf %71, %71 : vector<256x128xf32>
    %cst_88 = arith.constant dense<0.000000e+00> : vector<128xf32>
    %103 = vector.multi_reduction <add>, %102, %cst_88 [0] : vector<256x128xf32> to vector<128xf32>
    %104 = vector.shape_cast %103 : vector<128xf32> to vector<1x128xf32>
    %105 = arith.addf %98, %104 : vector<1x128xf32>
    %cst_89 = arith.constant dense<0.000000e+00> : vector<128xf32>
    %106 = vector.multi_reduction <add>, %86, %cst_89 [0] : vector<256x128xf32> to vector<128xf32>
    %107 = vector.shape_cast %106 : vector<128xf32> to vector<1x128xf32>
    %108 = arith.addf %101, %107 : vector<1x128xf32>
    %109 = arith.mulf %86, %86 : vector<256x128xf32>
    %cst_90 = arith.constant dense<0.000000e+00> : vector<128xf32>
    %110 = vector.multi_reduction <add>, %109, %cst_90 [0] : vector<256x128xf32> to vector<128xf32>
    %111 = vector.shape_cast %110 : vector<128xf32> to vector<1x128xf32>
    %112 = arith.addf %105, %111 : vector<1x128xf32>
    %cst_91 = arith.constant 1.024000e+03 : f32
    %113 = vector.broadcast %cst_91 : f32 to vector<1x128xf32>
    %114 = arith.divf %108, %113 : vector<1x128xf32>
    %cst_92 = arith.constant 1.024000e+03 : f32
    %115 = vector.broadcast %cst_92 : f32 to vector<1x128xf32>
    %116 = arith.divf %112, %115 : vector<1x128xf32>
    %117 = arith.mulf %114, %114 : vector<1x128xf32>
    %118 = arith.subf %116, %117 : vector<1x128xf32>
    %cst_93 = arith.constant 9.99999974E-6 : f32
    %119 = vector.broadcast %cst_93 : f32 to vector<1x128xf32>
    %120 = arith.addf %118, %119 : vector<1x128xf32>
    %121 = math.rsqrt %120 : vector<1x128xf32>
    %cst_94 = arith.constant 0.000000e+00 : f32
    %122 = vector.broadcast %cst_94 : f32 to vector<1x128xf32>
    %123 = arith.subf %122, %114 : vector<1x128xf32>
    %124 = arith.mulf %123, %121 : vector<1x128xf32>
    %125 = vector.broadcast %121 : vector<1x128xf32> to vector<256x128xf32>
    %126 = arith.mulf %41, %125 : vector<256x128xf32>
    %127 = vector.broadcast %124 : vector<1x128xf32> to vector<256x128xf32>
    %128 = arith.addf %126, %127 : vector<256x128xf32>
    %cst_95 = arith.constant 0.000000e+00 : f32
    %129 = vector.broadcast %cst_95 : f32 to vector<256x128xf32>
    %130 = arith.maximumf %128, %129 : vector<256x128xf32>
    %c0_96 = arith.constant 0 : index
    %c0_97 = arith.constant 0 : index
    %c0_98 = arith.constant 0 : index
    %131 = vector.load %arg3[%c0_96, %c0_97, %c0_98] : memref<1x1024x128xf32, #tpu.memory_space<vmem>>, vector<1x256x128xf32>
    %132 = vector.shape_cast %131 : vector<1x256x128xf32> to vector<256x128xf32>
    %133 = vector.shape_cast %130 : vector<256x128xf32> to vector<1x256x128xf32>
    tpu.vector_store %arg3[%c0_96, %c0_97, %c0_98], %133 {strides = array<i32>} : memref<1x1024x128xf32, #tpu.memory_space<vmem>>, vector<1x256x128xf32>,
    %134 = vector.broadcast %121 : vector<1x128xf32> to vector<256x128xf32>
    %135 = arith.mulf %56, %134 : vector<256x128xf32>
    %136 = vector.broadcast %124 : vector<1x128xf32> to vector<256x128xf32>
    %137 = arith.addf %135, %136 : vector<256x128xf32>
    %cst_99 = arith.constant 0.000000e+00 : f32
    %138 = vector.broadcast %cst_99 : f32 to vector<256x128xf32>
    %139 = arith.maximumf %137, %138 : vector<256x128xf32>
    %c0_100 = arith.constant 0 : index
    %c256 = arith.constant 256 : index
    %c0_101 = arith.constant 0 : index
    %140 = vector.load %arg3[%c0_100, %c256, %c0_101] : memref<1x1024x128xf32, #tpu.memory_space<vmem>>, vector<1x256x128xf32>
    %141 = vector.shape_cast %140 : vector<1x256x128xf32> to vector<256x128xf32>
    %142 = vector.shape_cast %139 : vector<256x128xf32> to vector<1x256x128xf32>
    tpu.vector_store %arg3[%c0_100, %c256, %c0_101], %142 {strides = array<i32>} : memref<1x1024x128xf32, #tpu.memory_space<vmem>>, vector<1x256x128xf32>,
    %143 = vector.broadcast %121 : vector<1x128xf32> to vector<256x128xf32>
    %144 = arith.mulf %71, %143 : vector<256x128xf32>
    %145 = vector.broadcast %124 : vector<1x128xf32> to vector<256x128xf32>
    %146 = arith.addf %144, %145 : vector<256x128xf32>
    %cst_102 = arith.constant 0.000000e+00 : f32
    %147 = vector.broadcast %cst_102 : f32 to vector<256x128xf32>
    %148 = arith.maximumf %146, %147 : vector<256x128xf32>
    %c0_103 = arith.constant 0 : index
    %c512 = arith.constant 512 : index
    %c0_104 = arith.constant 0 : index
    %149 = vector.load %arg3[%c0_103, %c512, %c0_104] : memref<1x1024x128xf32, #tpu.memory_space<vmem>>, vector<1x256x128xf32>
    %150 = vector.shape_cast %149 : vector<1x256x128xf32> to vector<256x128xf32>
    %151 = vector.shape_cast %148 : vector<256x128xf32> to vector<1x256x128xf32>
    tpu.vector_store %arg3[%c0_103, %c512, %c0_104], %151 {strides = array<i32>} : memref<1x1024x128xf32, #tpu.memory_space<vmem>>, vector<1x256x128xf32>,
    %152 = vector.broadcast %121 : vector<1x128xf32> to vector<256x128xf32>
    %153 = arith.mulf %86, %152 : vector<256x128xf32>
    %154 = vector.broadcast %124 : vector<1x128xf32> to vector<256x128xf32>
    %155 = arith.addf %153, %154 : vector<256x128xf32>
    %cst_105 = arith.constant 0.000000e+00 : f32
    %156 = vector.broadcast %cst_105 : f32 to vector<256x128xf32>
    %157 = arith.maximumf %155, %156 : vector<256x128xf32>
    %c0_106 = arith.constant 0 : index
    %c768 = arith.constant 768 : index
    %c0_107 = arith.constant 0 : index
    %158 = vector.load %arg3[%c0_106, %c768, %c0_107] : memref<1x1024x128xf32, #tpu.memory_space<vmem>>, vector<1x256x128xf32>
    %159 = vector.shape_cast %158 : vector<1x256x128xf32> to vector<256x128xf32>
    %160 = vector.shape_cast %157 : vector<256x128xf32> to vector<1x256x128xf32>
    tpu.vector_store %arg3[%c0_106, %c768, %c0_107], %160 {strides = array<i32>} : memref<1x1024x128xf32, #tpu.memory_space<vmem>>, vector<1x256x128xf32>,
    return
  }
  func.func @transform_0(%arg0: i32) -> (i32, i32, i32, i32) {
    %c0_i32 = arith.constant 0 : i32
    %c0_i32_0 = arith.constant 0 : i32
    %c0_i32_1 = arith.constant 0 : i32
    %c0_i32_2 = arith.constant 0 : i32
    return %arg0, %c0_i32, %c0_i32_0, %c0_i32_1 : i32, i32, i32, i32
  }
  func.func @transform_1(%arg0: i32) -> (i32, i32, i32) {
    %c0_i32 = arith.constant 0 : i32
    %c0_i32_0 = arith.constant 0 : i32
    %c0_i32_1 = arith.constant 0 : i32
    %c0_i32_2 = arith.constant 0 : i32
    return %c0_i32, %c0_i32_0, %c0_i32_1 : i32, i32, i32
  }
  func.func @transform_2(%arg0: i32) -> (i32, i32, i32) {
    %c0_i32 = arith.constant 0 : i32
    %c0_i32_0 = arith.constant 0 : i32
    %c0_i32_1 = arith.constant 0 : i32
    return %arg0, %c0_i32, %c0_i32_0 : i32, i32, i32
  }
}

</mosaic_0001>

<llo_original>
// kernel: unet_up.1
$region0: #{unet_up.1}
  #allocation0 [shape = 'u32[]', space=smem, size = 0x4, offset = 0x4, fixed_abs, tag = 'smem constant byte address 0x4 - core index']
  #allocation1 [shape = 'u32[72,128]{1,0:T(1,128)}', space=vmem, size = 0x9000, scoped, tag = 'internal scratch']
  %s0 = inlined_call_operand.vmem [shape: bf16[2,18,18,4], index: 0, kind: input, shape index: {}]
  %s1 = inlined_call_operand.vmem [shape: bf16[16,4,128], index: 1, kind: input, shape index: {}]
  %s2 = inlined_call_operand.vmem [shape: f32[2,1024,128], index: 2, kind: output, shape index: {}]
  %s3 = sld [smem:[#allocation0]]
  $region41: #{unet_up.1} parent=0
    _
  %s5 = ssub.s32 1, %s3
  %s6 = scalar_select 0, %s5, %s3
  loop: start=0, step=1, limit=4
  $region2: #{unet_up.1} parent=0 // loop_pre_header
    _
  $region3: #{unet_up.1} parent=0 // loop_header
    %s8 = sphi 0, %s12
    %p9 = scmp.ge.s32.totalorder %s8, 4
    %s18 = sphi 0, %s20
    %s21 = sphi 0, %s18
    %s22 = sphi 0, %s21
    %s38 = sphi 0, %s22
    %s42 = sphi 0, %s42
    %s44 = sphi 0, %s42
    %s45 = sphi 0, %s44
    %s59 = sphi 0, %s45
    %s65 = sphi 0, %s67
    %s68 = sphi 0, %s65
    %s69 = sphi 0, %s68
    %s85 = sphi 0, %s69
  $region4: #{unet_up.1} parent=0 // loop_header_branch
    %11 = sbr.rel (%p9) target = $region8
  $region5: #{unet_up.1} parent=0 // loop_body
    %s13 = ssub.s32 %s8, 1
    %s14 = ssub.s32 %s8, 2
    %s15 = sadd.s32 %s8, 1
    %s16 = ssub.s32 %s8, %s15
    %p17 = scmp.eq.s32.totalorder %s16, 0
    %s19 = sadd.s32 %s18, 1
    %s20 = scalar_select %p17, %s18, %s19
    %p23 = pneg %p17
    %p24 = scmp.eq.s32.totalorder %s8, 1
    %p25 = por %p23, %p24
    %p26 = scmp.ne.s32.totalorder %s18, %s21
    %p27 = scmp.eq.s32.totalorder %s8, 0
    %p28 = por %p26, %p27
    %p29 = scmp.ne.s32.totalorder %s18, %s21
    %p30 = scmp.eq.s32.totalorder %s13, 1
    %p31 = por %p29, %p30
    %p32 = scmp.ne.s32.totalorder %s21, %s22
    %p33 = scmp.eq.s32.totalorder %s13, 0
    %p34 = por %p32, %p33
    %p35 = scmp.ne.s32.totalorder %s21, %s22
    %p36 = scmp.eq.s32.totalorder %s14, 1
    %p37 = por %p35, %p36
    %p39 = scmp.ne.s32.totalorder %s22, %s38
    %p40 = scmp.eq.s32.totalorder %s14, 0
    %p41 = por %p39, %p40
    %s43 = sadd.s32 %s42, 1
    %p46 = scmp.eq.s32.totalorder %s8, 1
    %p47 = scmp.ne.s32.totalorder %s42, %s44
    %p48 = scmp.eq.s32.totalorder %s8, 0
    %p49 = por %p47, %p48
    %p50 = scmp.ne.s32.totalorder %s42, %s44
    %p51 = scmp.eq.s32.totalorder %s13, 1
    %p52 = por %p50, %p51
    %p53 = scmp.ne.s32.totalorder %s44, %s45
    %p54 = scmp.eq.s32.totalorder %s13, 0
    %p55 = por %p53, %p54
    %p56 = scmp.ne.s32.totalorder %s44, %s45
    %p57 = scmp.eq.s32.totalorder %s14, 1
    %p58 = por %p56, %p57
    %p60 = scmp.ne.s32.totalorder %s45, %s59
    %p61 = scmp.eq.s32.totalorder %s14, 0
    %p62 = por %p60, %p61
    %s63 = ssub.s32 %s8, %s15
    %p64 = scmp.eq.s32.totalorder %s63, 0
    %s66 = sadd.s32 %s65, 1
    %s67 = scalar_select %p64, %s65, %s66
    %p70 = pneg %p64
    %p71 = scmp.eq.s32.totalorder %s8, 1
    %p72 = por %p70, %p71
    %p73 = scmp.ne.s32.totalorder %s65, %s68
    %p74 = scmp.eq.s32.totalorder %s8, 0
    %p75 = por %p73, %p74
    %p76 = scmp.ne.s32.totalorder %s65, %s68
    %p77 = scmp.eq.s32.totalorder %s13, 1
    %p78 = por %p76, %p77
    %p79 = scmp.ne.s32.totalorder %s68, %s69
    %p80 = scmp.eq.s32.totalorder %s13, 0
    %p81 = por %p79, %p80
    %p82 = scmp.ne.s32.totalorder %s68, %s69
    %p83 = scmp.eq.s32.totalorder %s14, 1
    %p84 = por %p82, %p83
    %p86 = scmp.ne.s32.totalorder %s69, %s85
    %p87 = scmp.eq.s32.totalorder %s14, 0
    %p88 = por %p86, %p87
    %p89 = scmp.le.s32.totalorder 1, %s8
    %p90 = scmp.lt.s32.totalorder %s8, 3
    %p91 = pnand %p89, %p90
    %p92 = pneg %p91
    // Predicated region
    $region9: #{unet_up.1} parent=5 // pred_check
      _
    $region10: #{unet_up.1} parent=5 // pred_check_branch
      %94 = sbr.rel (%p91) target = $region12
    $region11: #{unet_up.1} parent=5 // pred_region
      %s95 = ssub.s32 %s8, 1
      // Predicated region
      $region13: #{unet_up.1} parent=11 // pred_check
        %p96 = pneg %p55
      $region14: #{unet_up.1} parent=11 // pred_check_branch
        %98 = sbr.rel (%p96) target = $region16
      $region15: #{unet_up.1} parent=11 // pred_region
        _
      $region16: #{unet_up.1} parent=11 // pred_fallthru
        _
    $region12: #{unet_up.1} parent=5 // pred_fallthru
      _
    %p99 = scmp.lt.s32.totalorder %s8, 2
    // Predicated region
    $region17: #{unet_up.1} parent=5 // pred_check
      %p100 = pneg %p99
    $region18: #{unet_up.1} parent=5 // pred_check_branch
      %102 = sbr.rel (%p100) target = $region20
    $region19: #{unet_up.1} parent=5 // pred_region
      // Predicated region
      $region21: #{unet_up.1} parent=19 // pred_check
        %p103 = pneg %p28
      $region22: #{unet_up.1} parent=19 // pred_check_branch
        %105 = sbr.rel (%p103) target = $region24
      $region23: #{unet_up.1} parent=19 // pred_region
        %p106 = scmp.lt.s32.totalorder %s8, 1
        %s107 = scalar_select %p106, %s8, 1
        %s108 = smul.addr %s107, 54
        %s109 = smul.addr %s108, 4
        %s110 = scalar_lea.vmem %s0, %s109
      $region24: #{unet_up.1} parent=19 // pred_fallthru
        _
    $region20: #{unet_up.1} parent=5 // pred_fallthru
      _
    %p111 = scmp.le.s32.totalorder 1, %s8
    %p112 = scmp.lt.s32.totalorder %s8, 3
    %p113 = pnand %p111, %p112
    %p114 = pneg %p113
    // Predicated region
    $region25: #{unet_up.1} parent=5 // pred_check
      _
    $region26: #{unet_up.1} parent=5 // pred_check_branch
      %116 = sbr.rel (%p113) target = $region28
    $region27: #{unet_up.1} parent=5 // pred_region
      %s117 = ssub.s32 %s8, 1
      %p118 = scmp.lt.s32.totalorder %s13, 1
      %s119 = scalar_select %p118, %s13, 1
      %s120 = smul.addr %s119, 54
      %s121 = smul.addr %s120, 4
      %s122 = scalar_lea.vmem %s0, %s121
      %p123 = pneg %p34
      %p124 = pneg %p31
      %p125 = pneg %p55
      %p126 = pneg %p52
      %p127 = pneg %p81
      %p128 = pneg %p78
      %p129 = scmp.lt.s32.totalorder %s13, 1
      %s130 = scalar_select %p129, %s13, 1
      %s131 = smul.addr %s130, 128
      %s132 = smul.addr %s131, 8
      %s133 = scalar_lea.vmem %s2, %s132
      %p134 = scmp.lt.s32.totalorder %s13, 1
      %s135 = scalar_select %p134, %s13, 1
      %s136 = smul.addr %s135, 54
      %s137 = smul.addr %s136, 4
      %s138 = scalar_lea.vmem %s0, %s137
      %p139 = scmp.lt.s32.totalorder %s13, 1
      %s140 = scalar_select %p139, %s13, 1
      %s141 = smul.addr %s140, 128
      %s142 = smul.addr %s141, 8
      %s143 = scalar_lea.vmem %s2, %s142
      %v145 = vld [vmem:[%s138] sm:$0xf]
      %v146 = vld [vmem:[%s138 + $0x4] sm:$0xf]
      %v147 = vld [vmem:[%s138 + $0xc] sm:$0xf]
      %v148 = vld [vmem:[%s138 + $0x10] sm:$0xf]
      %v149 = vld [vmem:[%s138 + $0x18] sm:$0xf]
      %v150 = vld [vmem:[%s138 + $0x1c] sm:$0xf]
      %v151 = vld [vmem:[%s138 + $0x24] sm:$0xf]
      %v152 = vld [vmem:[%s138 + $0x28] sm:$0xf]
      %v153 = vld [vmem:[%s138 + $0x30] sm:$0xf]
      %v154 = vld [vmem:[%s138 + $0x34] sm:$0xf]
      %v155 = vld [vmem:[%s138 + $0x3c] sm:$0xf]
      %v156 = vld [vmem:[%s138 + $0x40] sm:$0xf]
      %v157 = vld [vmem:[%s138 + $0x48] sm:$0xf]
      %v158 = vld [vmem:[%s138 + $0x4c] sm:$0xf]
      %v159 = vld [vmem:[%s138 + $0x54] sm:$0xf]
      %v160 = vld [vmem:[%s138 + $0x58] sm:$0xf]
      %v161 = vld [vmem:[%s138 + $0x60] sm:$0xf]
      %v162 = vld [vmem:[%s138 + $0x64] sm:$0xf]
      %v163 = vld [vmem:[%s138 + $0x6c] sm:$0xf]
      %v164 = vld [vmem:[%s138 + $0x70] sm:$0xf]
      %v165 = vld [vmem:[%s138 + $0x78] sm:$0xf]
      %v166 = vld [vmem:[%s138 + $0x7c] sm:$0xf]
      %v167 = vld [vmem:[%s138 + $0x84] sm:$0xf]
      %v168 = vld [vmem:[%s138 + $0x88] sm:$0xf]
      %v169 = vld [vmem:[%s138 + $0x90] sm:$0xf]
      %v170 = vld [vmem:[%s138 + $0x94] sm:$0xf]
      %v171 = vld [vmem:[%s138 + $0x9c] sm:$0xf]
      %v172 = vld [vmem:[%s138 + $0xa0] sm:$0xf]
      %v173 = vld [vmem:[%s138 + $0xa8] sm:$0xf]
      %v174 = vld [vmem:[%s138 + $0xac] sm:$0xf]
      %v175 = vld [vmem:[%s138 + $0xb4] sm:$0xf]
      %v176 = vld [vmem:[%s138 + $0xb8] sm:$0xf]
      %v177 = vld [vmem:[%s138 + $0x8] sm:$0x1]
      %v178 = vld [vmem:[%s138 + $0x14] sm:$0x1]
      %v179 = vld [vmem:[%s138 + $0x20] sm:$0x1]
      %v180 = vld [vmem:[%s138 + $0x2c] sm:$0x1]
      %v181 = vld [vmem:[%s138 + $0x38] sm:$0x1]
      %v182 = vld [vmem:[%s138 + $0x44] sm:$0x1]
      %v183 = vld [vmem:[%s138 + $0x50] sm:$0x1]
      %v184 = vld [vmem:[%s138 + $0x5c] sm:$0x1]
      %v185 = vld [vmem:[%s138 + $0x68] sm:$0x1]
      %v186 = vld [vmem:[%s138 + $0x74] sm:$0x1]
      %v187 = vld [vmem:[%s138 + $0x80] sm:$0x1]
      %v188 = vld [vmem:[%s138 + $0x8c] sm:$0x1]
      %v189 = vld [vmem:[%s138 + $0x98] sm:$0x1]
      %v190 = vld [vmem:[%s138 + $0xa4] sm:$0x1]
      %v191 = vld [vmem:[%s138 + $0xb0] sm:$0x1]
      %v192 = vld [vmem:[%s138 + $0xbc] sm:$0x1]
      %vm193 = vsmask.f32 3328
      %vm194 = vsmask.f32 7440
      %vm195 = vmor %vm193, %vm194
      %v197 = vshrl.u32 %v145, 16
      %v199 = vrot.slane %v197, 4
      %v200 = vshll.u32 %v145, 16
      %v202 = vrot.slane %v200, 5
      %v203 = vor.u32 %v199, %v202
      %v204 = vrot.slane %v203, 4
      %v206 = vshll.u32 %v146, 16
      %v208 = vrot.slane %v206, 5
      %v209 = vsel %vm195, %v204, %v208
      %v210 = vshrl.u32 %v146, 16
      %v212 = vrot.slane %v210, 4
      %v213 = vor.u32 %v212, %v208
      %v214 = vrot.slane %v213, 4
      %v216 = vshll.u32 %v177, 16
      %v218 = vrot.slane %v216, 5
      %v219 = vsel %vm195, %v214, %v218
      %v221 = vshrl.u32 %v147, 16
      %v223 = vrot.slane %v221, 4
      %v224 = vshll.u32 %v147, 16
      %v226 = vrot.slane %v224, 5
      %v227 = vor.u32 %v223, %v226
      %v228 = vrot.slane %v227, 4
      %v230 = vshll.u32 %v148, 16
      %v232 = vrot.slane %v230, 5
      %v233 = vsel %vm195, %v228, %v232
      %v234 = vshrl.u32 %v148, 16
      %v236 = vrot.slane %v234, 4
      %v237 = vor.u32 %v236, %v232
      %v238 = vrot.slane %v237, 4
      %v240 = vshll.u32 %v178, 16
      %v242 = vrot.slane %v240, 5
      %v243 = vsel %vm195, %v238, %v242
      %v245 = vshrl.u32 %v149, 16
      %v247 = vrot.slane %v245, 4
      %v248 = vshll.u32 %v149, 16
      %v250 = vrot.slane %v248, 5
      %v251 = vor.u32 %v247, %v250
      %v252 = vrot.slane %v251, 4
      %v254 = vshll.u32 %v150, 16
      %v256 = vrot.slane %v254, 5
      %v257 = vsel %vm195, %v252, %v256
      %v258 = vshrl.u32 %v150, 16
      %v260 = vrot.slane %v258, 4
      %v261 = vor.u32 %v260, %v256
      %v262 = vrot.slane %v261, 4
      %v264 = vshll.u32 %v179, 16
      %v266 = vrot.slane %v264, 5
      %v267 = vsel %vm195, %v262, %v266
      %v269 = vshrl.u32 %v151, 16
      %v271 = vrot.slane %v269, 4
      %v272 = vshll.u32 %v151, 16
      %v274 = vrot.slane %v272, 5
      %v275 = vor.u32 %v271, %v274
      %v276 = vrot.slane %v275, 4
      %v278 = vshll.u32 %v152, 16
      %v280 = vrot.slane %v278, 5
      %v281 = vsel %vm195, %v276, %v280
      %v282 = vshrl.u32 %v152, 16
      %v284 = vrot.slane %v282, 4
      %v285 = vor.u32 %v284, %v280
      %v286 = vrot.slane %v285, 4
      %v288 = vshll.u32 %v180, 16
      %v290 = vrot.slane %v288, 5
      %v291 = vsel %vm195, %v286, %v290
      %v293 = vshrl.u32 %v153, 16
      %v295 = vrot.slane %v293, 4
      %v296 = vshll.u32 %v153, 16
      %v298 = vrot.slane %v296, 5
      %v299 = vor.u32 %v295, %v298
      %v300 = vrot.slane %v299, 4
      %v302 = vshll.u32 %v154, 16
      %v304 = vrot.slane %v302, 5
      %v305 = vsel %vm195, %v300, %v304
      %v306 = vshrl.u32 %v154, 16
      %v308 = vrot.slane %v306, 4
      %v309 = vor.u32 %v308, %v304
      %v310 = vrot.slane %v309, 4
      %v312 = vshll.u32 %v181, 16
      %v314 = vrot.slane %v312, 5
      %v315 = vsel %vm195, %v310, %v314
      %v317 = vshrl.u32 %v155, 16
      %v319 = vrot.slane %v317, 4
      %v320 = vshll.u32 %v155, 16
      %v322 = vrot.slane %v320, 5
      %v323 = vor.u32 %v319, %v322
      %v324 = vrot.slane %v323, 4
      %v326 = vshll.u32 %v156, 16
      %v328 = vrot.slane %v326, 5
      %v329 = vsel %vm195, %v324, %v328
      %v330 = vshrl.u32 %v156, 16
      %v332 = vrot.slane %v330, 4
      %v333 = vor.u32 %v332, %v328
      %v334 = vrot.slane %v333, 4
      %v336 = vshll.u32 %v182, 16
      %v338 = vrot.slane %v336, 5
      %v339 = vsel %vm195, %v334, %v338
      %v341 = vshrl.u32 %v157, 16
      %v343 = vrot.slane %v341, 4
      %v344 = vshll.u32 %v157, 16
      %v346 = vrot.slane %v344, 5
      %v347 = vor.u32 %v343, %v346
      %v348 = vrot.slane %v347, 4
      %v350 = vshll.u32 %v158, 16
      %v352 = vrot.slane %v350, 5
      %v353 = vsel %vm195, %v348, %v352
      %v354 = vshrl.u32 %v158, 16
      %v356 = vrot.slane %v354, 4
      %v357 = vor.u32 %v356, %v352
      %v358 = vrot.slane %v357, 4
      %v360 = vshll.u32 %v183, 16
      %v362 = vrot.slane %v360, 5
      %v363 = vsel %vm195, %v358, %v362
      %v365 = vshrl.u32 %v159, 16
      %v367 = vrot.slane %v365, 4
      %v368 = vshll.u32 %v159, 16
      %v370 = vrot.slane %v368, 5
      %v371 = vor.u32 %v367, %v370
      %v372 = vrot.slane %v371, 4
      %v374 = vshll.u32 %v160, 16
      %v376 = vrot.slane %v374, 5
      %v377 = vsel %vm195, %v372, %v376
      %v378 = vshrl.u32 %v160, 16
      %v380 = vrot.slane %v378, 4
      %v381 = vor.u32 %v380, %v376
      %v382 = vrot.slane %v381, 4
      %v384 = vshll.u32 %v184, 16
      %v386 = vrot.slane %v384, 5
      %v387 = vsel %vm195, %v382, %v386
      %v389 = vshrl.u32 %v161, 16
      %v391 = vrot.slane %v389, 4
      %v392 = vshll.u32 %v161, 16
      %v394 = vrot.slane %v392, 5
      %v395 = vor.u32 %v391, %v394
      %v396 = vrot.slane %v395, 4
      %v398 = vshll.u32 %v162, 16
      %v400 = vrot.slane %v398, 5
      %v401 = vsel %vm195, %v396, %v400
      %v402 = vshrl.u32 %v162, 16
      %v404 = vrot.slane %v402, 4
      %v405 = vor.u32 %v404, %v400
      %v406 = vrot.slane %v405, 4
      %v408 = vshll.u32 %v185, 16
      %v410 = vrot.slane %v408, 5
      %v411 = vsel %vm195, %v406, %v410
      %v413 = vshrl.u32 %v163, 16
      %v415 = vrot.slane %v413, 4
      %v416 = vshll.u32 %v163, 16
      %v418 = vrot.slane %v416, 5
      %v419 = vor.u32 %v415, %v418
      %v420 = vrot.slane %v419, 4
      %v422 = vshll.u32 %v164, 16
      %v424 = vrot.slane %v422, 5
      %v425 = vsel %vm195, %v420, %v424
      %v426 = vshrl.u32 %v164, 16
      %v428 = vrot.slane %v426, 4
      %v429 = vor.u32 %v428, %v424
      %v430 = vrot.slane %v429, 4
      %v432 = vshll.u32 %v186, 16
      %v434 = vrot.slane %v432, 5
      %v435 = vsel %vm195, %v430, %v434
      %v437 = vshrl.u32 %v165, 16
      %v439 = vrot.slane %v437, 4
      %v440 = vshll.u32 %v165, 16
      %v442 = vrot.slane %v440, 5
      %v443 = vor.u32 %v439, %v442
      %v444 = vrot.slane %v443, 4
      %v446 = vshll.u32 %v166, 16
      %v448 = vrot.slane %v446, 5
      %v449 = vsel %vm195, %v444, %v448
      %v450 = vshrl.u32 %v166, 16
      %v452 = vrot.slane %v450, 4
      %v453 = vor.u32 %v452, %v448
      %v454 = vrot.slane %v453, 4
      %v456 = vshll.u32 %v187, 16
      %v458 = vrot.slane %v456, 5
      %v459 = vsel %vm195, %v454, %v458
      %v461 = vshrl.u32 %v167, 16
      %v463 = vrot.slane %v461, 4
      %v464 = vshll.u32 %v167, 16
      %v466 = vrot.slane %v464, 5
      %v467 = vor.u32 %v463, %v466
      %v468 = vrot.slane %v467, 4
      %v470 = vshll.u32 %v168, 16
      %v472 = vrot.slane %v470, 5
      %v473 = vsel %vm195, %v468, %v472
      %v474 = vshrl.u32 %v168, 16
      %v476 = vrot.slane %v474, 4
      %v477 = vor.u32 %v476, %v472
      %v478 = vrot.slane %v477, 4
      %v480 = vshll.u32 %v188, 16
      %v482 = vrot.slane %v480, 5
      %v483 = vsel %vm195, %v478, %v482
      %v485 = vshrl.u32 %v169, 16
      %v487 = vrot.slane %v485, 4
      %v488 = vshll.u32 %v169, 16
      %v490 = vrot.slane %v488, 5
      %v491 = vor.u32 %v487, %v490
      %v492 = vrot.slane %v491, 4
      %v494 = vshll.u32 %v170, 16
      %v496 = vrot.slane %v494, 5
      %v497 = vsel %vm195, %v492, %v496
      %v498 = vshrl.u32 %v170, 16
      %v500 = vrot.slane %v498, 4
      %v501 = vor.u32 %v500, %v496
      %v502 = vrot.slane %v501, 4
      %v504 = vshll.u32 %v189, 16
      %v506 = vrot.slane %v504, 5
      %v507 = vsel %vm195, %v502, %v506
      %v509 = vshrl.u32 %v171, 16
      %v511 = vrot.slane %v509, 4
      %v512 = vshll.u32 %v171, 16
      %v514 = vrot.slane %v512, 5
      %v515 = vor.u32 %v511, %v514
      %v516 = vrot.slane %v515, 4
      %v518 = vshll.u32 %v172, 16
      %v520 = vrot.slane %v518, 5
      %v521 = vsel %vm195, %v516, %v520
      %v522 = vshrl.u32 %v172, 16
      %v524 = vrot.slane %v522, 4
      %v525 = vor.u32 %v524, %v520
      %v526 = vrot.slane %v525, 4
      %v528 = vshll.u32 %v190, 16
      %v530 = vrot.slane %v528, 5
      %v531 = vsel %vm195, %v526, %v530
      %v533 = vshrl.u32 %v173, 16
      %v535 = vrot.slane %v533, 4
      %v536 = vshll.u32 %v173, 16
      %v538 = vrot.slane %v536, 5
      %v539 = vor.u32 %v535, %v538
      %v540 = vrot.slane %v539, 4
      %v542 = vshll.u32 %v174, 16
      %v544 = vrot.slane %v542, 5
      %v545 = vsel %vm195, %v540, %v544
      %v546 = vshrl.u32 %v174, 16
      %v548 = vrot.slane %v546, 4
      %v549 = vor.u32 %v548, %v544
      %v550 = vrot.slane %v549, 4
      %v552 = vshll.u32 %v191, 16
      %v554 = vrot.slane %v552, 5
      %v555 = vsel %vm195, %v550, %v554
      %v557 = vshrl.u32 %v175, 16
      %v559 = vrot.slane %v557, 4
      %v560 = vshll.u32 %v175, 16
      %v562 = vrot.slane %v560, 5
      %v563 = vor.u32 %v559, %v562
      %v564 = vrot.slane %v563, 4
      %v566 = vshll.u32 %v176, 16
      %v568 = vrot.slane %v566, 5
      %v569 = vsel %vm195, %v564, %v568
      %v570 = vshrl.u32 %v176, 16
      %v572 = vrot.slane %v570, 4
      %v573 = vor.u32 %v572, %v568
      %v574 = vrot.slane %v573, 4
      %v576 = vshll.u32 %v192, 16
      %v578 = vrot.slane %v576, 5
      %v579 = vsel %vm195, %v574, %v578
      %v580 = vld [vmem:[%s138] sm:$0xe]
      %v581 = vld [vmem:[%s138 + $0xc] sm:$0xe]
      %v582 = vld [vmem:[%s138 + $0x18] sm:$0xe]
      %v583 = vld [vmem:[%s138 + $0x24] sm:$0xe]
      %v584 = vld [vmem:[%s138 + $0x30] sm:$0xe]
      %v585 = vld [vmem:[%s138 + $0x3c] sm:$0xe]
      %v586 = vld [vmem:[%s138 + $0x48] sm:$0xe]
      %v587 = vld [vmem:[%s138 + $0x54] sm:$0xe]
      %v588 = vld [vmem:[%s138 + $0x60] sm:$0xe]
      %v589 = vld [vmem:[%s138 + $0x6c] sm:$0xe]
      %v590 = vld [vmem:[%s138 + $0x78] sm:$0xe]
      %v591 = vld [vmem:[%s138 + $0x84] sm:$0xe]
      %v592 = vld [vmem:[%s138 + $0x90] sm:$0xe]
      %v593 = vld [vmem:[%s138 + $0x9c] sm:$0xe]
      %v594 = vld [vmem:[%s138 + $0xa8] sm:$0xe]
      %v595 = vld [vmem:[%s138 + $0xb4] sm:$0xe]
      %vm644 = vcmask 1042432
      %vm645 = vcmask 1046532
      %vm646 = vmor %vm644, %vm645
      %v647 = vrot.slane %v580, 5
      %v648 = vrot.slane %v647, 4
      %v649 = vrot.slane %v146, 5
      %v650 = vsel %vm646, %v648, %v649
      %v651 = vrot.slane %v649, 4
      %v652 = vrot.slane %v177, 5
      %v653 = vsel %vm646, %v651, %v652
      %v654 = vrot.slane %v581, 5
      %v655 = vrot.slane %v654, 4
      %v656 = vrot.slane %v148, 5
      %v657 = vsel %vm646, %v655, %v656
      %v658 = vrot.slane %v656, 4
      %v659 = vrot.slane %v178, 5
      %v660 = vsel %vm646, %v658, %v659
      %v661 = vrot.slane %v582, 5
      %v662 = vrot.slane %v661, 4
      %v663 = vrot.slane %v150, 5
      %v664 = vsel %vm646, %v662, %v663
      %v665 = vrot.slane %v663, 4
      %v666 = vrot.slane %v179, 5
      %v667 = vsel %vm646, %v665, %v666
      %v668 = vrot.slane %v583, 5
      %v669 = vrot.slane %v668, 4
      %v670 = vrot.slane %v152, 5
      %v671 = vsel %vm646, %v669, %v670
      %v672 = vrot.slane %v670, 4
      %v673 = vrot.slane %v180, 5
      %v674 = vsel %vm646, %v672, %v673
      %v675 = vrot.slane %v584, 5
      %v676 = vrot.slane %v675, 4
      %v677 = vrot.slane %v154, 5
      %v678 = vsel %vm646, %v676, %v677
      %v679 = vrot.slane %v677, 4
      %v680 = vrot.slane %v181, 5
      %v681 = vsel %vm646, %v679, %v680
      %v682 = vrot.slane %v585, 5
      %v683 = vrot.slane %v682, 4
      %v684 = vrot.slane %v156, 5
      %v685 = vsel %vm646, %v683, %v684
      %v686 = vrot.slane %v684, 4
      %v687 = vrot.slane %v182, 5
      %v688 = vsel %vm646, %v686, %v687
      %v689 = vrot.slane %v586, 5
      %v690 = vrot.slane %v689, 4
      %v691 = vrot.slane %v158, 5
      %v692 = vsel %vm646, %v690, %v691
      %v693 = vrot.slane %v691, 4
      %v694 = vrot.slane %v183, 5
      %v695 = vsel %vm646, %v693, %v694
      %v696 = vrot.slane %v587, 5
      %v697 = vrot.slane %v696, 4
      %v698 = vrot.slane %v160, 5
      %v699 = vsel %vm646, %v697, %v698
      %v700 = vrot.slane %v698, 4
      %v701 = vrot.slane %v184, 5
      %v702 = vsel %vm646, %v700, %v701
      %v703 = vrot.slane %v588, 5
      %v704 = vrot.slane %v703, 4
      %v705 = vrot.slane %v162, 5
      %v706 = vsel %vm646, %v704, %v705
      %v707 = vrot.slane %v705, 4
      %v708 = vrot.slane %v185, 5
      %v709 = vsel %vm646, %v707, %v708
      %v710 = vrot.slane %v589, 5
      %v711 = vrot.slane %v710, 4
      %v712 = vrot.slane %v164, 5
      %v713 = vsel %vm646, %v711, %v712
      %v714 = vrot.slane %v712, 4
      %v715 = vrot.slane %v186, 5
      %v716 = vsel %vm646, %v714, %v715
      %v717 = vrot.slane %v590, 5
      %v718 = vrot.slane %v717, 4
      %v719 = vrot.slane %v166, 5
      %v720 = vsel %vm646, %v718, %v719
      %v721 = vrot.slane %v719, 4
      %v722 = vrot.slane %v187, 5
      %v723 = vsel %vm646, %v721, %v722
      %v724 = vrot.slane %v591, 5
      %v725 = vrot.slane %v724, 4
      %v726 = vrot.slane %v168, 5
      %v727 = vsel %vm646, %v725, %v726
      %v728 = vrot.slane %v726, 4
      %v729 = vrot.slane %v188, 5
      %v730 = vsel %vm646, %v728, %v729
      %v731 = vrot.slane %v592, 5
      %v732 = vrot.slane %v731, 4
      %v733 = vrot.slane %v170, 5
      %v734 = vsel %vm646, %v732, %v733
      %v735 = vrot.slane %v733, 4
      %v736 = vrot.slane %v189, 5
      %v737 = vsel %vm646, %v735, %v736
      %v738 = vrot.slane %v593, 5
      %v739 = vrot.slane %v738, 4
      %v740 = vrot.slane %v172, 5
      %v741 = vsel %vm646, %v739, %v740
      %v742 = vrot.slane %v740, 4
      %v743 = vrot.slane %v190, 5
      %v744 = vsel %vm646, %v742, %v743
      %v745 = vrot.slane %v594, 5
      %v746 = vrot.slane %v745, 4
      %v747 = vrot.slane %v174, 5
      %v748 = vsel %vm646, %v746, %v747
      %v749 = vrot.slane %v747, 4
      %v750 = vrot.slane %v191, 5
      %v751 = vsel %vm646, %v749, %v750
      %v752 = vrot.slane %v595, 5
      %v753 = vrot.slane %v752, 4
      %v754 = vrot.slane %v176, 5
      %v755 = vsel %vm646, %v753, %v754
      %v756 = vrot.slane %v754, 4
      %v757 = vrot.slane %v192, 5
      %v758 = vsel %vm646, %v756, %v757
      %s759 = scalar_lea.vmem %s138, 12
      %v760 = vld [vmem:[%s759] sm:$0xf]
      %v761 = vld [vmem:[%s759 + $0x4] sm:$0xf]
      %v762 = vld [vmem:[%s759 + $0xc] sm:$0xf]
      %v763 = vld [vmem:[%s759 + $0x10] sm:$0xf]
      %v764 = vld [vmem:[%s759 + $0x18] sm:$0xf]
      %v765 = vld [vmem:[%s759 + $0x1c] sm:$0xf]
      %v766 = vld [vmem:[%s759 + $0x24] sm:$0xf]
      %v767 = vld [vmem:[%s759 + $0x28] sm:$0xf]
      %v768 = vld [vmem:[%s759 + $0x30] sm:$0xf]
      %v769 = vld [vmem:[%s759 + $0x34] sm:$0xf]
      %v770 = vld [vmem:[%s759 + $0x3c] sm:$0xf]
      %v771 = vld [vmem:[%s759 + $0x40] sm:$0xf]
      %v772 = vld [vmem:[%s759 + $0x48] sm:$0xf]
      %v773 = vld [vmem:[%s759 + $0x4c] sm:$0xf]
      %v774 = vld [vmem:[%s759 + $0x54] sm:$0xf]
      %v775 = vld [vmem:[%s759 + $0x58] sm:$0xf]
      %v776 = vld [vmem:[%s759 + $0x60] sm:$0xf]
      %v777 = vld [vmem:[%s759 + $0x64] sm:$0xf]
      %v778 = vld [vmem:[%s759 + $0x6c] sm:$0xf]
      %v779 = vld [vmem:[%s759 + $0x70] sm:$0xf]
      %v780 = vld [vmem:[%s759 + $0x78] sm:$0xf]
      %v781 = vld [vmem:[%s759 + $0x7c] sm:$0xf]
      %v782 = vld [vmem:[%s759 + $0x84] sm:$0xf]
      %v783 = vld [vmem:[%s759 + $0x88] sm:$0xf]
      %v784 = vld [vmem:[%s759 + $0x90] sm:$0xf]
      %v785 = vld [vmem:[%s759 + $0x94] sm:$0xf]
      %v786 = vld [vmem:[%s759 + $0x9c] sm:$0xf]
      %v787 = vld [vmem:[%s759 + $0xa0] sm:$0xf]
      %v788 = vld [vmem:[%s759 + $0xa8] sm:$0xf]
      %v789 = vld [vmem:[%s759 + $0xac] sm:$0xf]
      %v790 = vld [vmem:[%s759 + $0xb4] sm:$0xf]
      %v791 = vld [vmem:[%s759 + $0xb8] sm:$0xf]
      %v792 = vld [vmem:[%s759 + $0x8] sm:$0x1]
      %v793 = vld [vmem:[%s759 + $0x14] sm:$0x1]
      %v794 = vld [vmem:[%s759 + $0x20] sm:$0x1]
      %v795 = vld [vmem:[%s759 + $0x2c] sm:$0x1]
      %v796 = vld [vmem:[%s759 + $0x38] sm:$0x1]
      %v797 = vld [vmem:[%s759 + $0x44] sm:$0x1]
      %v798 = vld [vmem:[%s759 + $0x50] sm:$0x1]
      %v799 = vld [vmem:[%s759 + $0x5c] sm:$0x1]
      %v800 = vld [vmem:[%s759 + $0x68] sm:$0x1]
      %v801 = vld [vmem:[%s759 + $0x74] sm:$0x1]
      %v802 = vld [vmem:[%s759 + $0x80] sm:$0x1]
      %v803 = vld [vmem:[%s759 + $0x8c] sm:$0x1]
      %v804 = vld [vmem:[%s759 + $0x98] sm:$0x1]
      %v805 = vld [vmem:[%s759 + $0xa4] sm:$0x1]
      %v806 = vld [vmem:[%s759 + $0xb0] sm:$0x1]
      %v807 = vld [vmem:[%s759 + $0xbc] sm:$0x1]
      %v809 = vshrl.u32 %v760, 16
      %v811 = vrot.slane %v809, 4
      %v812 = vshll.u32 %v760, 16
      %v814 = vrot.slane %v812, 5
      %v815 = vor.u32 %v811, %v814
      %v816 = vrot.slane %v815, 4
      %v818 = vshll.u32 %v761, 16
      %v820 = vrot.slane %v818, 5
      %v821 = vsel %vm195, %v816, %v820
      %v822 = vshrl.u32 %v761, 16
      %v824 = vrot.slane %v822, 4
      %v825 = vor.u32 %v824, %v820
      %v826 = vrot.slane %v825, 4
      %v828 = vshll.u32 %v792, 16
      %v830 = vrot.slane %v828, 5
      %v831 = vsel %vm195, %v826, %v830
      %v833 = vshrl.u32 %v762, 16
      %v835 = vrot.slane %v833, 4
      %v836 = vshll.u32 %v762, 16
      %v838 = vrot.slane %v836, 5
      %v839 = vor.u32 %v835, %v838
      %v840 = vrot.slane %v839, 4
      %v842 = vshll.u32 %v763, 16
      %v844 = vrot.slane %v842, 5
      %v845 = vsel %vm195, %v840, %v844
      %v846 = vshrl.u32 %v763, 16
      %v848 = vrot.slane %v846, 4
      %v849 = vor.u32 %v848, %v844
      %v850 = vrot.slane %v849, 4
      %v852 = vshll.u32 %v793, 16
      %v854 = vrot.slane %v852, 5
      %v855 = vsel %vm195, %v850, %v854
      %v857 = vshrl.u32 %v764, 16
      %v859 = vrot.slane %v857, 4
      %v860 = vshll.u32 %v764, 16
      %v862 = vrot.slane %v860, 5
      %v863 = vor.u32 %v859, %v862
      %v864 = vrot.slane %v863, 4
      %v866 = vshll.u32 %v765, 16
      %v868 = vrot.slane %v866, 5
      %v869 = vsel %vm195, %v864, %v868
      %v870 = vshrl.u32 %v765, 16
      %v872 = vrot.slane %v870, 4
      %v873 = vor.u32 %v872, %v868
      %v874 = vrot.slane %v873, 4
      %v876 = vshll.u32 %v794, 16
      %v878 = vrot.slane %v876, 5
      %v879 = vsel %vm195, %v874, %v878
      %v881 = vshrl.u32 %v766, 16
      %v883 = vrot.slane %v881, 4
      %v884 = vshll.u32 %v766, 16
      %v886 = vrot.slane %v884, 5
      %v887 = vor.u32 %v883, %v886
      %v888 = vrot.slane %v887, 4
      %v890 = vshll.u32 %v767, 16
      %v892 = vrot.slane %v890, 5
      %v893 = vsel %vm195, %v888, %v892
      %v894 = vshrl.u32 %v767, 16
      %v896 = vrot.slane %v894, 4
      %v897 = vor.u32 %v896, %v892
      %v898 = vrot.slane %v897, 4
      %v900 = vshll.u32 %v795, 16
      %v902 = vrot.slane %v900, 5
      %v903 = vsel %vm195, %v898, %v902
      %v905 = vshrl.u32 %v768, 16
      %v907 = vrot.slane %v905, 4
      %v908 = vshll.u32 %v768, 16
      %v910 = vrot.slane %v908, 5
      %v911 = vor.u32 %v907, %v910
      %v912 = vrot.slane %v911, 4
      %v914 = vshll.u32 %v769, 16
      %v916 = vrot.slane %v914, 5
      %v917 = vsel %vm195, %v912, %v916
      %v918 = vshrl.u32 %v769, 16
      %v920 = vrot.slane %v918, 4
      %v921 = vor.u32 %v920, %v916
      %v922 = vrot.slane %v921, 4
      %v924 = vshll.u32 %v796, 16
      %v926 = vrot.slane %v924, 5
      %v927 = vsel %vm195, %v922, %v926
      %v929 = vshrl.u32 %v770, 16
      %v931 = vrot.slane %v929, 4
      %v932 = vshll.u32 %v770, 16
      %v934 = vrot.slane %v932, 5
      %v935 = vor.u32 %v931, %v934
      %v936 = vrot.slane %v935, 4
      %v938 = vshll.u32 %v771, 16
      %v940 = vrot.slane %v938, 5
      %v941 = vsel %vm195, %v936, %v940
      %v942 = vshrl.u32 %v771, 16
      %v944 = vrot.slane %v942, 4
      %v945 = vor.u32 %v944, %v940
      %v946 = vrot.slane %v945, 4
      %v948 = vshll.u32 %v797, 16
      %v950 = vrot.slane %v948, 5
      %v951 = vsel %vm195, %v946, %v950
      %v953 = vshrl.u32 %v772, 16
      %v955 = vrot.slane %v953, 4
      %v956 = vshll.u32 %v772, 16
      %v958 = vrot.slane %v956, 5
      %v959 = vor.u32 %v955, %v958
      %v960 = vrot.slane %v959, 4
      %v962 = vshll.u32 %v773, 16
      %v964 = vrot.slane %v962, 5
      %v965 = vsel %vm195, %v960, %v964
      %v966 = vshrl.u32 %v773, 16
      %v968 = vrot.slane %v966, 4
      %v969 = vor.u32 %v968, %v964
      %v970 = vrot.slane %v969, 4
      %v972 = vshll.u32 %v798, 16
      %v974 = vrot.slane %v972, 5
      %v975 = vsel %vm195, %v970, %v974
      %v977 = vshrl.u32 %v774, 16
      %v979 = vrot.slane %v977, 4
      %v980 = vshll.u32 %v774, 16
      %v982 = vrot.slane %v980, 5
      %v983 = vor.u32 %v979, %v982
      %v984 = vrot.slane %v983, 4
      %v986 = vshll.u32 %v775, 16
      %v988 = vrot.slane %v986, 5
      %v989 = vsel %vm195, %v984, %v988
      %v990 = vshrl.u32 %v775, 16
      %v992 = vrot.slane %v990, 4
      %v993 = vor.u32 %v992, %v988
      %v994 = vrot.slane %v993, 4
      %v996 = vshll.u32 %v799, 16
      %v998 = vrot.slane %v996, 5
      %v999 = vsel %vm195, %v994, %v998
      %v1001 = vshrl.u32 %v776, 16
      %v1003 = vrot.slane %v1001, 4
      %v1004 = vshll.u32 %v776, 16
      %v1006 = vrot.slane %v1004, 5
      %v1007 = vor.u32 %v1003, %v1006
      %v1008 = vrot.slane %v1007, 4
      %v1010 = vshll.u32 %v777, 16
      %v1012 = vrot.slane %v1010, 5
      %v1013 = vsel %vm195, %v1008, %v1012
      %v1014 = vshrl.u32 %v777, 16
      %v1016 = vrot.slane %v1014, 4
      %v1017 = vor.u32 %v1016, %v1012
      %v1018 = vrot.slane %v1017, 4
      %v1020 = vshll.u32 %v800, 16
      %v1022 = vrot.slane %v1020, 5
      %v1023 = vsel %vm195, %v1018, %v1022
      %v1025 = vshrl.u32 %v778, 16
      %v1027 = vrot.slane %v1025, 4
      %v1028 = vshll.u32 %v778, 16
      %v1030 = vrot.slane %v1028, 5
      %v1031 = vor.u32 %v1027, %v1030
      %v1032 = vrot.slane %v1031, 4
      %v1034 = vshll.u32 %v779, 16
      %v1036 = vrot.slane %v1034, 5
      %v1037 = vsel %vm195, %v1032, %v1036
      %v1038 = vshrl.u32 %v779, 16
      %v1040 = vrot.slane %v1038, 4
      %v1041 = vor.u32 %v1040, %v1036
      %v1042 = vrot.slane %v1041, 4
      %v1044 = vshll.u32 %v801, 16
      %v1046 = vrot.slane %v1044, 5
      %v1047 = vsel %vm195, %v1042, %v1046
      %v1049 = vshrl.u32 %v780, 16
      %v1051 = vrot.slane %v1049, 4
      %v1052 = vshll.u32 %v780, 16
      %v1054 = vrot.slane %v1052, 5
      %v1055 = vor.u32 %v1051, %v1054
      %v1056 = vrot.slane %v1055, 4
      %v1058 = vshll.u32 %v781, 16
      %v1060 = vrot.slane %v1058, 5
      %v1061 = vsel %vm195, %v1056, %v1060
      %v1062 = vshrl.u32 %v781, 16
      %v1064 = vrot.slane %v1062, 4
      %v1065 = vor.u32 %v1064, %v1060
      %v1066 = vrot.slane %v1065, 4
      %v1068 = vshll.u32 %v802, 16
      %v1070 = vrot.slane %v1068, 5
      %v1071 = vsel %vm195, %v1066, %v1070
      %v1073 = vshrl.u32 %v782, 16
      %v1075 = vrot.slane %v1073, 4
      %v1076 = vshll.u32 %v782, 16
      %v1078 = vrot.slane %v1076, 5
      %v1079 = vor.u32 %v1075, %v1078
      %v1080 = vrot.slane %v1079, 4
      %v1082 = vshll.u32 %v783, 16
      %v1084 = vrot.slane %v1082, 5
      %v1085 = vsel %vm195, %v1080, %v1084
      %v1086 = vshrl.u32 %v783, 16
      %v1088 = vrot.slane %v1086, 4
      %v1089 = vor.u32 %v1088, %v1084
      %v1090 = vrot.slane %v1089, 4
      %v1092 = vshll.u32 %v803, 16
      %v1094 = vrot.slane %v1092, 5
      %v1095 = vsel %vm195, %v1090, %v1094
      %v1097 = vshrl.u32 %v784, 16
      %v1099 = vrot.slane %v1097, 4
      %v1100 = vshll.u32 %v784, 16
      %v1102 = vrot.slane %v1100, 5
      %v1103 = vor.u32 %v1099, %v1102
      %v1104 = vrot.slane %v1103, 4
      %v1106 = vshll.u32 %v785, 16
      %v1108 = vrot.slane %v1106, 5
      %v1109 = vsel %vm195, %v1104, %v1108
      %v1110 = vshrl.u32 %v785, 16
      %v1112 = vrot.slane %v1110, 4
      %v1113 = vor.u32 %v1112, %v1108
      %v1114 = vrot.slane %v1113, 4
      %v1116 = vshll.u32 %v804, 16
      %v1118 = vrot.slane %v1116, 5
      %v1119 = vsel %vm195, %v1114, %v1118
      %v1121 = vshrl.u32 %v786, 16
      %v1123 = vrot.slane %v1121, 4
      %v1124 = vshll.u32 %v786, 16
      %v1126 = vrot.slane %v1124, 5
      %v1127 = vor.u32 %v1123, %v1126
      %v1128 = vrot.slane %v1127, 4
      %v1130 = vshll.u32 %v787, 16
      %v1132 = vrot.slane %v1130, 5
      %v1133 = vsel %vm195, %v1128, %v1132
      %v1134 = vshrl.u32 %v787, 16
      %v1136 = vrot.slane %v1134, 4
      %v1137 = vor.u32 %v1136, %v1132
      %v1138 = vrot.slane %v1137, 4
      %v1140 = vshll.u32 %v805, 16
      %v1142 = vrot.slane %v1140, 5
      %v1143 = vsel %vm195, %v1138, %v1142
      %v1145 = vshrl.u32 %v788, 16
      %v1147 = vrot.slane %v1145, 4
      %v1148 = vshll.u32 %v788, 16
      %v1150 = vrot.slane %v1148, 5
      %v1151 = vor.u32 %v1147, %v1150
      %v1152 = vrot.slane %v1151, 4
      %v1154 = vshll.u32 %v789, 16
      %v1156 = vrot.slane %v1154, 5
      %v1157 = vsel %vm195, %v1152, %v1156
      %v1158 = vshrl.u32 %v789, 16
      %v1160 = vrot.slane %v1158, 4
      %v1161 = vor.u32 %v1160, %v1156
      %v1162 = vrot.slane %v1161, 4
      %v1164 = vshll.u32 %v806, 16
      %v1166 = vrot.slane %v1164, 5
      %v1167 = vsel %vm195, %v1162, %v1166
      %v1169 = vshrl.u32 %v790, 16
      %v1171 = vrot.slane %v1169, 4
      %v1172 = vshll.u32 %v790, 16
      %v1174 = vrot.slane %v1172, 5
      %v1175 = vor.u32 %v1171, %v1174
      %v1176 = vrot.slane %v1175, 4
      %v1178 = vshll.u32 %v791, 16
      %v1180 = vrot.slane %v1178, 5
      %v1181 = vsel %vm195, %v1176, %v1180
      %v1182 = vshrl.u32 %v791, 16
      %v1184 = vrot.slane %v1182, 4
      %v1185 = vor.u32 %v1184, %v1180
      %v1186 = vrot.slane %v1185, 4
      %v1188 = vshll.u32 %v807, 16
      %v1190 = vrot.slane %v1188, 5
      %v1191 = vsel %vm195, %v1186, %v1190
      %v1192 = vld [vmem:[%s759] sm:$0xe]
      %v1193 = vld [vmem:[%s759 + $0xc] sm:$0xe]
      %v1194 = vld [vmem:[%s759 + $0x18] sm:$0xe]
      %v1195 = vld [vmem:[%s759 + $0x24] sm:$0xe]
      %v1196 = vld [vmem:[%s759 + $0x30] sm:$0xe]
      %v1197 = vld [vmem:[%s759 + $0x3c] sm:$0xe]
      %v1198 = vld [vmem:[%s759 + $0x48] sm:$0xe]
      %v1199 = vld [vmem:[%s759 + $0x54] sm:$0xe]
      %v1200 = vld [vmem:[%s759 + $0x60] sm:$0xe]
      %v1201 = vld [vmem:[%s759 + $0x6c] sm:$0xe]
      %v1202 = vld [vmem:[%s759 + $0x78] sm:$0xe]
      %v1203 = vld [vmem:[%s759 + $0x84] sm:$0xe]
      %v1204 = vld [vmem:[%s759 + $0x90] sm:$0xe]
      %v1205 = vld [vmem:[%s759 + $0x9c] sm:$0xe]
      %v1206 = vld [vmem:[%s759 + $0xa8] sm:$0xe]
      %v1207 = vld [vmem:[%s759 + $0xb4] sm:$0xe]
      %v1256 = vrot.slane %v1192, 5
      %v1257 = vrot.slane %v1256, 4
      %v1258 = vrot.slane %v761, 5
      %v1259 = vsel %vm646, %v1257, %v1258
      %v1260 = vrot.slane %v1258, 4
      %v1261 = vrot.slane %v792, 5
      %v1262 = vsel %vm646, %v1260, %v1261
      %v1263 = vrot.slane %v1193, 5
      %v1264 = vrot.slane %v1263, 4
      %v1265 = vrot.slane %v763, 5
      %v1266 = vsel %vm646, %v1264, %v1265
      %v1267 = vrot.slane %v1265, 4
      %v1268 = vrot.slane %v793, 5
      %v1269 = vsel %vm646, %v1267, %v1268
      %v1270 = vrot.slane %v1194, 5
      %v1271 = vrot.slane %v1270, 4
      %v1272 = vrot.slane %v765, 5
      %v1273 = vsel %vm646, %v1271, %v1272
      %v1274 = vrot.slane %v1272, 4
      %v1275 = vrot.slane %v794, 5
      %v1276 = vsel %vm646, %v1274, %v1275
      %v1277 = vrot.slane %v1195, 5
      %v1278 = vrot.slane %v1277, 4
      %v1279 = vrot.slane %v767, 5
      %v1280 = vsel %vm646, %v1278, %v1279
      %v1281 = vrot.slane %v1279, 4
      %v1282 = vrot.slane %v795, 5
      %v1283 = vsel %vm646, %v1281, %v1282
      %v1284 = vrot.slane %v1196, 5
      %v1285 = vrot.slane %v1284, 4
      %v1286 = vrot.slane %v769, 5
      %v1287 = vsel %vm646, %v1285, %v1286
      %v1288 = vrot.slane %v1286, 4
      %v1289 = vrot.slane %v796, 5
      %v1290 = vsel %vm646, %v1288, %v1289
      %v1291 = vrot.slane %v1197, 5
      %v1292 = vrot.slane %v1291, 4
      %v1293 = vrot.slane %v771, 5
      %v1294 = vsel %vm646, %v1292, %v1293
      %v1295 = vrot.slane %v1293, 4
      %v1296 = vrot.slane %v797, 5
      %v1297 = vsel %vm646, %v1295, %v1296
      %v1298 = vrot.slane %v1198, 5
      %v1299 = vrot.slane %v1298, 4
      %v1300 = vrot.slane %v773, 5
      %v1301 = vsel %vm646, %v1299, %v1300
      %v1302 = vrot.slane %v1300, 4
      %v1303 = vrot.slane %v798, 5
      %v1304 = vsel %vm646, %v1302, %v1303
      %v1305 = vrot.slane %v1199, 5
      %v1306 = vrot.slane %v1305, 4
      %v1307 = vrot.slane %v775, 5
      %v1308 = vsel %vm646, %v1306, %v1307
      %v1309 = vrot.slane %v1307, 4
      %v1310 = vrot.slane %v799, 5
      %v1311 = vsel %vm646, %v1309, %v1310
      %v1312 = vrot.slane %v1200, 5
      %v1313 = vrot.slane %v1312, 4
      %v1314 = vrot.slane %v777, 5
      %v1315 = vsel %vm646, %v1313, %v1314
      %v1316 = vrot.slane %v1314, 4
      %v1317 = vrot.slane %v800, 5
      %v1318 = vsel %vm646, %v1316, %v1317
      %v1319 = vrot.slane %v1201, 5
      %v1320 = vrot.slane %v1319, 4
      %v1321 = vrot.slane %v779, 5
      %v1322 = vsel %vm646, %v1320, %v1321
      %v1323 = vrot.slane %v1321, 4
      %v1324 = vrot.slane %v801, 5
      %v1325 = vsel %vm646, %v1323, %v1324
      %v1326 = vrot.slane %v1202, 5
      %v1327 = vrot.slane %v1326, 4
      %v1328 = vrot.slane %v781, 5
      %v1329 = vsel %vm646, %v1327, %v1328
      %v1330 = vrot.slane %v1328, 4
      %v1331 = vrot.slane %v802, 5
      %v1332 = vsel %vm646, %v1330, %v1331
      %v1333 = vrot.slane %v1203, 5
      %v1334 = vrot.slane %v1333, 4
      %v1335 = vrot.slane %v783, 5
      %v1336 = vsel %vm646, %v1334, %v1335
      %v1337 = vrot.slane %v1335, 4
      %v1338 = vrot.slane %v803, 5
      %v1339 = vsel %vm646, %v1337, %v1338
      %v1340 = vrot.slane %v1204, 5
      %v1341 = vrot.slane %v1340, 4
      %v1342 = vrot.slane %v785, 5
      %v1343 = vsel %vm646, %v1341, %v1342
      %v1344 = vrot.slane %v1342, 4
      %v1345 = vrot.slane %v804, 5
      %v1346 = vsel %vm646, %v1344, %v1345
      %v1347 = vrot.slane %v1205, 5
      %v1348 = vrot.slane %v1347, 4
      %v1349 = vrot.slane %v787, 5
      %v1350 = vsel %vm646, %v1348, %v1349
      %v1351 = vrot.slane %v1349, 4
      %v1352 = vrot.slane %v805, 5
      %v1353 = vsel %vm646, %v1351, %v1352
      %v1354 = vrot.slane %v1206, 5
      %v1355 = vrot.slane %v1354, 4
      %v1356 = vrot.slane %v789, 5
      %v1357 = vsel %vm646, %v1355, %v1356
      %v1358 = vrot.slane %v1356, 4
      %v1359 = vrot.slane %v806, 5
      %v1360 = vsel %vm646, %v1358, %v1359
      %v1361 = vrot.slane %v1207, 5
      %v1362 = vrot.slane %v1361, 4
      %v1363 = vrot.slane %v791, 5
      %v1364 = vsel %vm646, %v1362, %v1363
      %v1365 = vrot.slane %v1363, 4
      %v1366 = vrot.slane %v807, 5
      %v1367 = vsel %vm646, %v1365, %v1366
      %s1368 = scalar_lea.vmem %s138, 24
      %v1369 = vld [vmem:[%s1368] sm:$0xf]
      %v1370 = vld [vmem:[%s1368 + $0x4] sm:$0xf]
      %v1371 = vld [vmem:[%s1368 + $0xc] sm:$0xf]
      %v1372 = vld [vmem:[%s1368 + $0x10] sm:$0xf]
      %v1373 = vld [vmem:[%s1368 + $0x18] sm:$0xf]
      %v1374 = vld [vmem:[%s1368 + $0x1c] sm:$0xf]
      %v1375 = vld [vmem:[%s1368 + $0x24] sm:$0xf]
      %v1376 = vld [vmem:[%s1368 + $0x28] sm:$0xf]
      %v1377 = vld [vmem:[%s1368 + $0x30] sm:$0xf]
      %v1378 = vld [vmem:[%s1368 + $0x34] sm:$0xf]
      %v1379 = vld [vmem:[%s1368 + $0x3c] sm:$0xf]
      %v1380 = vld [vmem:[%s1368 + $0x40] sm:$0xf]
      %v1381 = vld [vmem:[%s1368 + $0x48] sm:$0xf]
      %v1382 = vld [vmem:[%s1368 + $0x4c] sm:$0xf]
      %v1383 = vld [vmem:[%s1368 + $0x54] sm:$0xf]
      %v1384 = vld [vmem:[%s1368 + $0x58] sm:$0xf]
      %v1385 = vld [vmem:[%s1368 + $0x60] sm:$0xf]
      %v1386 = vld [vmem:[%s1368 + $0x64] sm:$0xf]
      %v1387 = vld [vmem:[%s1368 + $0x6c] sm:$0xf]
      %v1388 = vld [vmem:[%s1368 + $0x70] sm:$0xf]
      %v1389 = vld [vmem:[%s1368 + $0x78] sm:$0xf]
      %v1390 = vld [vmem:[%s1368 + $0x7c] sm:$0xf]
      %v1391 = vld [vmem:[%s1368 + $0x84] sm:$0xf]
      %v1392 = vld [vmem:[%s1368 + $0x88] sm:$0xf]
      %v1393 = vld [vmem:[%s1368 + $0x90] sm:$0xf]
      %v1394 = vld [vmem:[%s1368 + $0x94] sm:$0xf]
      %v1395 = vld [vmem:[%s1368 + $0x9c] sm:$0xf]
      %v1396 = vld [vmem:[%s1368 + $0xa0] sm:$0xf]
      %v1397 = vld [vmem:[%s1368 + $0xa8] sm:$0xf]
      %v1398 = vld [vmem:[%s1368 + $0xac] sm:$0xf]
      %v1399 = vld [vmem:[%s1368 + $0xb4] sm:$0xf]
      %v1400 = vld [vmem:[%s1368 + $0xb8] sm:$0xf]
      %v1401 = vld [vmem:[%s1368 + $0x8] sm:$0x1]
      %v1402 = vld [vmem:[%s1368 + $0x14] sm:$0x1]
      %v1403 = vld [vmem:[%s1368 + $0x20] sm:$0x1]
      %v1404 = vld [vmem:[%s1368 + $0x2c] sm:$0x1]
      %v1405 = vld [vmem:[%s1368 + $0x38] sm:$0x1]
      %v1406 = vld [vmem:[%s1368 + $0x44] sm:$0x1]
      %v1407 = vld [vmem:[%s1368 + $0x50] sm:$0x1]
      %v1408 = vld [vmem:[%s1368 + $0x5c] sm:$0x1]
      %v1409 = vld [vmem:[%s1368 + $0x68] sm:$0x1]
      %v1410 = vld [vmem:[%s1368 + $0x74] sm:$0x1]
      %v1411 = vld [vmem:[%s1368 + $0x80] sm:$0x1]
      %v1412 = vld [vmem:[%s1368 + $0x8c] sm:$0x1]
      %v1413 = vld [vmem:[%s1368 + $0x98] sm:$0x1]
      %v1414 = vld [vmem:[%s1368 + $0xa4] sm:$0x1]
      %v1415 = vld [vmem:[%s1368 + $0xb0] sm:$0x1]
      %v1416 = vld [vmem:[%s1368 + $0xbc] sm:$0x1]
      %v1418 = vshrl.u32 %v1369, 16
      %v1420 = vrot.slane %v1418, 4
      %v1421 = vshll.u32 %v1369, 16
      %v1423 = vrot.slane %v1421, 5
      %v1424 = vor.u32 %v1420, %v1423
      %v1425 = vrot.slane %v1424, 4
      %v1427 = vshll.u32 %v1370, 16
      %v1429 = vrot.slane %v1427, 5
      %v1430 = vsel %vm195, %v1425, %v1429
      %v1431 = vshrl.u32 %v1370, 16
      %v1433 = vrot.slane %v1431, 4
      %v1434 = vor.u32 %v1433, %v1429
      %v1435 = vrot.slane %v1434, 4
      %v1437 = vshll.u32 %v1401, 16
      %v1439 = vrot.slane %v1437, 5
      %v1440 = vsel %vm195, %v1435, %v1439
      %v1442 = vshrl.u32 %v1371, 16
      %v1444 = vrot.slane %v1442, 4
      %v1445 = vshll.u32 %v1371, 16
      %v1447 = vrot.slane %v1445, 5
      %v1448 = vor.u32 %v1444, %v1447
      %v1449 = vrot.slane %v1448, 4
      %v1451 = vshll.u32 %v1372, 16
      %v1453 = vrot.slane %v1451, 5
      %v1454 = vsel %vm195, %v1449, %v1453
      %v1455 = vshrl.u32 %v1372, 16
      %v1457 = vrot.slane %v1455, 4
      %v1458 = vor.u32 %v1457, %v1453
      %v1459 = vrot.slane %v1458, 4
      %v1461 = vshll.u32 %v1402, 16
      %v1463 = vrot.slane %v1461, 5
      %v1464 = vsel %vm195, %v1459, %v1463
      %v1466 = vshrl.u32 %v1373, 16
      %v1468 = vrot.slane %v1466, 4
      %v1469 = vshll.u32 %v1373, 16
      %v1471 = vrot.slane %v1469, 5
      %v1472 = vor.u32 %v1468, %v1471
      %v1473 = vrot.slane %v1472, 4
      %v1475 = vshll.u32 %v1374, 16
      %v1477 = vrot.slane %v1475, 5
      %v1478 = vsel %vm195, %v1473, %v1477
      %v1479 = vshrl.u32 %v1374, 16
      %v1481 = vrot.slane %v1479, 4
      %v1482 = vor.u32 %v1481, %v1477
      %v1483 = vrot.slane %v1482, 4
      %v1485 = vshll.u32 %v1403, 16
      %v1487 = vrot.slane %v1485, 5
      %v1488 = vsel %vm195, %v1483, %v1487
      %v1490 = vshrl.u32 %v1375, 16
      %v1492 = vrot.slane %v1490, 4
      %v1493 = vshll.u32 %v1375, 16
      %v1495 = vrot.slane %v1493, 5
      %v1496 = vor.u32 %v1492, %v1495
      %v1497 = vrot.slane %v1496, 4
      %v1499 = vshll.u32 %v1376, 16
      %v1501 = vrot.slane %v1499, 5
      %v1502 = vsel %vm195, %v1497, %v1501
      %v1503 = vshrl.u32 %v1376, 16
      %v1505 = vrot.slane %v1503, 4
      %v1506 = vor.u32 %v1505, %v1501
      %v1507 = vrot.slane %v1506, 4
      %v1509 = vshll.u32 %v1404, 16
      %v1511 = vrot.slane %v1509, 5
      %v1512 = vsel %vm195, %v1507, %v1511
      %v1514 = vshrl.u32 %v1377, 16
      %v1516 = vrot.slane %v1514, 4
      %v1517 = vshll.u32 %v1377, 16
      %v1519 = vrot.slane %v1517, 5
      %v1520 = vor.u32 %v1516, %v1519
      %v1521 = vrot.slane %v1520, 4
      %v1523 = vshll.u32 %v1378, 16
      %v1525 = vrot.slane %v1523, 5
      %v1526 = vsel %vm195, %v1521, %v1525
      %v1527 = vshrl.u32 %v1378, 16
      %v1529 = vrot.slane %v1527, 4
      %v1530 = vor.u32 %v1529, %v1525
      %v1531 = vrot.slane %v1530, 4
      %v1533 = vshll.u32 %v1405, 16
      %v1535 = vrot.slane %v1533, 5
      %v1536 = vsel %vm195, %v1531, %v1535
      %v1538 = vshrl.u32 %v1379, 16
      %v1540 = vrot.slane %v1538, 4
      %v1541 = vshll.u32 %v1379, 16
      %v1543 = vrot.slane %v1541, 5
      %v1544 = vor.u32 %v1540, %v1543
      %v1545 = vrot.slane %v1544, 4
      %v1547 = vshll.u32 %v1380, 16
      %v1549 = vrot.slane %v1547, 5
      %v1550 = vsel %vm195, %v1545, %v1549
      %v1551 = vshrl.u32 %v1380, 16
      %v1553 = vrot.slane %v1551, 4
      %v1554 = vor.u32 %v1553, %v1549
      %v1555 = vrot.slane %v1554, 4
      %v1557 = vshll.u32 %v1406, 16
      %v1559 = vrot.slane %v1557, 5
      %v1560 = vsel %vm195, %v1555, %v1559
      %v1562 = vshrl.u32 %v1381, 16
      %v1564 = vrot.slane %v1562, 4
      %v1565 = vshll.u32 %v1381, 16
      %v1567 = vrot.slane %v1565, 5
      %v1568 = vor.u32 %v1564, %v1567
      %v1569 = vrot.slane %v1568, 4
      %v1571 = vshll.u32 %v1382, 16
      %v1573 = vrot.slane %v1571, 5
      %v1574 = vsel %vm195, %v1569, %v1573
      %v1575 = vshrl.u32 %v1382, 16
      %v1577 = vrot.slane %v1575, 4
      %v1578 = vor.u32 %v1577, %v1573
      %v1579 = vrot.slane %v1578, 4
      %v1581 = vshll.u32 %v1407, 16
      %v1583 = vrot.slane %v1581, 5
      %v1584 = vsel %vm195, %v1579, %v1583
      %v1586 = vshrl.u32 %v1383, 16
      %v1588 = vrot.slane %v1586, 4
      %v1589 = vshll.u32 %v1383, 16
      %v1591 = vrot.slane %v1589, 5
      %v1592 = vor.u32 %v1588, %v1591
      %v1593 = vrot.slane %v1592, 4
      %v1595 = vshll.u32 %v1384, 16
      %v1597 = vrot.slane %v1595, 5
      %v1598 = vsel %vm195, %v1593, %v1597
      %v1599 = vshrl.u32 %v1384, 16
      %v1601 = vrot.slane %v1599, 4
      %v1602 = vor.u32 %v1601, %v1597
      %v1603 = vrot.slane %v1602, 4
      %v1605 = vshll.u32 %v1408, 16
      %v1607 = vrot.slane %v1605, 5
      %v1608 = vsel %vm195, %v1603, %v1607
      %v1610 = vshrl.u32 %v1385, 16
      %v1612 = vrot.slane %v1610, 4
      %v1613 = vshll.u32 %v1385, 16
      %v1615 = vrot.slane %v1613, 5
      %v1616 = vor.u32 %v1612, %v1615
      %v1617 = vrot.slane %v1616, 4
      %v1619 = vshll.u32 %v1386, 16
      %v1621 = vrot.slane %v1619, 5
      %v1622 = vsel %vm195, %v1617, %v1621
      %v1623 = vshrl.u32 %v1386, 16
      %v1625 = vrot.slane %v1623, 4
      %v1626 = vor.u32 %v1625, %v1621
      %v1627 = vrot.slane %v1626, 4
      %v1629 = vshll.u32 %v1409, 16
      %v1631 = vrot.slane %v1629, 5
      %v1632 = vsel %vm195, %v1627, %v1631
      %v1634 = vshrl.u32 %v1387, 16
      %v1636 = vrot.slane %v1634, 4
      %v1637 = vshll.u32 %v1387, 16
      %v1639 = vrot.slane %v1637, 5
      %v1640 = vor.u32 %v1636, %v1639
      %v1641 = vrot.slane %v1640, 4
      %v1643 = vshll.u32 %v1388, 16
      %v1645 = vrot.slane %v1643, 5
      %v1646 = vsel %vm195, %v1641, %v1645
      %v1647 = vshrl.u32 %v1388, 16
      %v1649 = vrot.slane %v1647, 4
      %v1650 = vor.u32 %v1649, %v1645
      %v1651 = vrot.slane %v1650, 4
      %v1653 = vshll.u32 %v1410, 16
      %v1655 = vrot.slane %v1653, 5
      %v1656 = vsel %vm195, %v1651, %v1655
      %v1658 = vshrl.u32 %v1389, 16
      %v1660 = vrot.slane %v1658, 4
      %v1661 = vshll.u32 %v1389, 16
      %v1663 = vrot.slane %v1661, 5
      %v1664 = vor.u32 %v1660, %v1663
      %v1665 = vrot.slane %v1664, 4
      %v1667 = vshll.u32 %v1390, 16
      %v1669 = vrot.slane %v1667, 5
      %v1670 = vsel %vm195, %v1665, %v1669
      %v1671 = vshrl.u32 %v1390, 16
      %v1673 = vrot.slane %v1671, 4
      %v1674 = vor.u32 %v1673, %v1669
      %v1675 = vrot.slane %v1674, 4
      %v1677 = vshll.u32 %v1411, 16
      %v1679 = vrot.slane %v1677, 5
      %v1680 = vsel %vm195, %v1675, %v1679
      %v1682 = vshrl.u32 %v1391, 16
      %v1684 = vrot.slane %v1682, 4
      %v1685 = vshll.u32 %v1391, 16
      %v1687 = vrot.slane %v1685, 5
      %v1688 = vor.u32 %v1684, %v1687
      %v1689 = vrot.slane %v1688, 4
      %v1691 = vshll.u32 %v1392, 16
      %v1693 = vrot.slane %v1691, 5
      %v1694 = vsel %vm195, %v1689, %v1693
      %v1695 = vshrl.u32 %v1392, 16
      %v1697 = vrot.slane %v1695, 4
      %v1698 = vor.u32 %v1697, %v1693
      %v1699 = vrot.slane %v1698, 4
      %v1701 = vshll.u32 %v1412, 16
      %v1703 = vrot.slane %v1701, 5
      %v1704 = vsel %vm195, %v1699, %v1703
      %v1706 = vshrl.u32 %v1393, 16
      %v1708 = vrot.slane %v1706, 4
      %v1709 = vshll.u32 %v1393, 16
      %v1711 = vrot.slane %v1709, 5
      %v1712 = vor.u32 %v1708, %v1711
      %v1713 = vrot.slane %v1712, 4
      %v1715 = vshll.u32 %v1394, 16
      %v1717 = vrot.slane %v1715, 5
      %v1718 = vsel %vm195, %v1713, %v1717
      %v1719 = vshrl.u32 %v1394, 16
      %v1721 = vrot.slane %v1719, 4
      %v1722 = vor.u32 %v1721, %v1717
      %v1723 = vrot.slane %v1722, 4
      %v1725 = vshll.u32 %v1413, 16
      %v1727 = vrot.slane %v1725, 5
      %v1728 = vsel %vm195, %v1723, %v1727
      %v1730 = vshrl.u32 %v1395, 16
      %v1732 = vrot.slane %v1730, 4
      %v1733 = vshll.u32 %v1395, 16
      %v1735 = vrot.slane %v1733, 5
      %v1736 = vor.u32 %v1732, %v1735
      %v1737 = vrot.slane %v1736, 4
      %v1739 = vshll.u32 %v1396, 16
      %v1741 = vrot.slane %v1739, 5
      %v1742 = vsel %vm195, %v1737, %v1741
      %v1743 = vshrl.u32 %v1396, 16
      %v1745 = vrot.slane %v1743, 4
      %v1746 = vor.u32 %v1745, %v1741
      %v1747 = vrot.slane %v1746, 4
      %v1749 = vshll.u32 %v1414, 16
      %v1751 = vrot.slane %v1749, 5
      %v1752 = vsel %vm195, %v1747, %v1751
      %v1754 = vshrl.u32 %v1397, 16
      %v1756 = vrot.slane %v1754, 4
      %v1757 = vshll.u32 %v1397, 16
      %v1759 = vrot.slane %v1757, 5
      %v1760 = vor.u32 %v1756, %v1759
      %v1761 = vrot.slane %v1760, 4
      %v1763 = vshll.u32 %v1398, 16
      %v1765 = vrot.slane %v1763, 5
      %v1766 = vsel %vm195, %v1761, %v1765
      %v1767 = vshrl.u32 %v1398, 16
      %v1769 = vrot.slane %v1767, 4
      %v1770 = vor.u32 %v1769, %v1765
      %v1771 = vrot.slane %v1770, 4
      %v1773 = vshll.u32 %v1415, 16
      %v1775 = vrot.slane %v1773, 5
      %v1776 = vsel %vm195, %v1771, %v1775
      %v1778 = vshrl.u32 %v1399, 16
      %v1780 = vrot.slane %v1778, 4
      %v1781 = vshll.u32 %v1399, 16
      %v1783 = vrot.slane %v1781, 5
      %v1784 = vor.u32 %v1780, %v1783
      %v1785 = vrot.slane %v1784, 4
      %v1787 = vshll.u32 %v1400, 16
      %v1789 = vrot.slane %v1787, 5
      %v1790 = vsel %vm195, %v1785, %v1789
      %v1791 = vshrl.u32 %v1400, 16
      %v1793 = vrot.slane %v1791, 4
      %v1794 = vor.u32 %v1793, %v1789
      %v1795 = vrot.slane %v1794, 4
      %v1797 = vshll.u32 %v1416, 16
      %v1799 = vrot.slane %v1797, 5
      %v1800 = vsel %vm195, %v1795, %v1799
      %v1801 = vld [vmem:[%s1368] sm:$0xe]
      %v1802 = vld [vmem:[%s1368 + $0xc] sm:$0xe]
      %v1803 = vld [vmem:[%s1368 + $0x18] sm:$0xe]
      %v1804 = vld [vmem:[%s1368 + $0x24] sm:$0xe]
      %v1805 = vld [vmem:[%s1368 + $0x30] sm:$0xe]
      %v1806 = vld [vmem:[%s1368 + $0x3c] sm:$0xe]
      %v1807 = vld [vmem:[%s1368 + $0x48] sm:$0xe]
      %v1808 = vld [vmem:[%s1368 + $0x54] sm:$0xe]
      %v1809 = vld [vmem:[%s1368 + $0x60] sm:$0xe]
      %v1810 = vld [vmem:[%s1368 + $0x6c] sm:$0xe]
      %v1811 = vld [vmem:[%s1368 + $0x78] sm:$0xe]
      %v1812 = vld [vmem:[%s1368 + $0x84] sm:$0xe]
      %v1813 = vld [vmem:[%s1368 + $0x90] sm:$0xe]
      %v1814 = vld [vmem:[%s1368 + $0x9c] sm:$0xe]
      %v1815 = vld [vmem:[%s1368 + $0xa8] sm:$0xe]
      %v1816 = vld [vmem:[%s1368 + $0xb4] sm:$0xe]
      %v1865 = vrot.slane %v1801, 5
      %v1866 = vrot.slane %v1865, 4
      %v1867 = vrot.slane %v1370, 5
      %v1868 = vsel %vm646, %v1866, %v1867
      %v1869 = vrot.slane %v1867, 4
      %v1870 = vrot.slane %v1401, 5
      %v1871 = vsel %vm646, %v1869, %v1870
      %v1872 = vrot.slane %v1802, 5
      %v1873 = vrot.slane %v1872, 4
      %v1874 = vrot.slane %v1372, 5
      %v1875 = vsel %vm646, %v1873, %v1874
      %v1876 = vrot.slane %v1874, 4
      %v1877 = vrot.slane %v1402, 5
      %v1878 = vsel %vm646, %v1876, %v1877
      %v1879 = vrot.slane %v1803, 5
      %v1880 = vrot.slane %v1879, 4
      %v1881 = vrot.slane %v1374, 5
      %v1882 = vsel %vm646, %v1880, %v1881
      %v1883 = vrot.slane %v1881, 4
      %v1884 = vrot.slane %v1403, 5
      %v1885 = vsel %vm646, %v1883, %v1884
      %v1886 = vrot.slane %v1804, 5
      %v1887 = vrot.slane %v1886, 4
      %v1888 = vrot.slane %v1376, 5
      %v1889 = vsel %vm646, %v1887, %v1888
      %v1890 = vrot.slane %v1888, 4
      %v1891 = vrot.slane %v1404, 5
      %v1892 = vsel %vm646, %v1890, %v1891
      %v1893 = vrot.slane %v1805, 5
      %v1894 = vrot.slane %v1893, 4
      %v1895 = vrot.slane %v1378, 5
      %v1896 = vsel %vm646, %v1894, %v1895
      %v1897 = vrot.slane %v1895, 4
      %v1898 = vrot.slane %v1405, 5
      %v1899 = vsel %vm646, %v1897, %v1898
      %v1900 = vrot.slane %v1806, 5
      %v1901 = vrot.slane %v1900, 4
      %v1902 = vrot.slane %v1380, 5
      %v1903 = vsel %vm646, %v1901, %v1902
      %v1904 = vrot.slane %v1902, 4
      %v1905 = vrot.slane %v1406, 5
      %v1906 = vsel %vm646, %v1904, %v1905
      %v1907 = vrot.slane %v1807, 5
      %v1908 = vrot.slane %v1907, 4
      %v1909 = vrot.slane %v1382, 5
      %v1910 = vsel %vm646, %v1908, %v1909
      %v1911 = vrot.slane %v1909, 4
      %v1912 = vrot.slane %v1407, 5
      %v1913 = vsel %vm646, %v1911, %v1912
      %v1914 = vrot.slane %v1808, 5
      %v1915 = vrot.slane %v1914, 4
      %v1916 = vrot.slane %v1384, 5
      %v1917 = vsel %vm646, %v1915, %v1916
      %v1918 = vrot.slane %v1916, 4
      %v1919 = vrot.slane %v1408, 5
      %v1920 = vsel %vm646, %v1918, %v1919
      %v1921 = vrot.slane %v1809, 5
      %v1922 = vrot.slane %v1921, 4
      %v1923 = vrot.slane %v1386, 5
      %v1924 = vsel %vm646, %v1922, %v1923
      %v1925 = vrot.slane %v1923, 4
      %v1926 = vrot.slane %v1409, 5
      %v1927 = vsel %vm646, %v1925, %v1926
      %v1928 = vrot.slane %v1810, 5
      %v1929 = vrot.slane %v1928, 4
      %v1930 = vrot.slane %v1388, 5
      %v1931 = vsel %vm646, %v1929, %v1930
      %v1932 = vrot.slane %v1930, 4
      %v1933 = vrot.slane %v1410, 5
      %v1934 = vsel %vm646, %v1932, %v1933
      %v1935 = vrot.slane %v1811, 5
      %v1936 = vrot.slane %v1935, 4
      %v1937 = vrot.slane %v1390, 5
      %v1938 = vsel %vm646, %v1936, %v1937
      %v1939 = vrot.slane %v1937, 4
      %v1940 = vrot.slane %v1411, 5
      %v1941 = vsel %vm646, %v1939, %v1940
      %v1942 = vrot.slane %v1812, 5
      %v1943 = vrot.slane %v1942, 4
      %v1944 = vrot.slane %v1392, 5
      %v1945 = vsel %vm646, %v1943, %v1944
      %v1946 = vrot.slane %v1944, 4
      %v1947 = vrot.slane %v1412, 5
      %v1948 = vsel %vm646, %v1946, %v1947
      %v1949 = vrot.slane %v1813, 5
      %v1950 = vrot.slane %v1949, 4
      %v1951 = vrot.slane %v1394, 5
      %v1952 = vsel %vm646, %v1950, %v1951
      %v1953 = vrot.slane %v1951, 4
      %v1954 = vrot.slane %v1413, 5
      %v1955 = vsel %vm646, %v1953, %v1954
      %v1956 = vrot.slane %v1814, 5
      %v1957 = vrot.slane %v1956, 4
      %v1958 = vrot.slane %v1396, 5
      %v1959 = vsel %vm646, %v1957, %v1958
      %v1960 = vrot.slane %v1958, 4
      %v1961 = vrot.slane %v1414, 5
      %v1962 = vsel %vm646, %v1960, %v1961
      %v1963 = vrot.slane %v1815, 5
      %v1964 = vrot.slane %v1963, 4
      %v1965 = vrot.slane %v1398, 5
      %v1966 = vsel %vm646, %v1964, %v1965
      %v1967 = vrot.slane %v1965, 4
      %v1968 = vrot.slane %v1415, 5
      %v1969 = vsel %vm646, %v1967, %v1968
      %v1970 = vrot.slane %v1816, 5
      %v1971 = vrot.slane %v1970, 4
      %v1972 = vrot.slane %v1400, 5
      %v1973 = vsel %vm646, %v1971, %v1972
      %v1974 = vrot.slane %v1972, 4
      %v1975 = vrot.slane %v1416, 5
      %v1976 = vsel %vm646, %v1974, %v1975
      %v1977 = vld [vmem:[%s1] sm:$0x3]
      %s1978 = scalar_lea.vmem %s1, 2
      %v1979 = vld [vmem:[%s1978] sm:$0x3]
      %v1980 = vunpack.c.l.b16 %v209
      %v1981 = vunpack.c.l.b16 %v219
      %v1982 = vunpack.c.l.b16 %v233
      %v1983 = vunpack.c.l.b16 %v243
      %v1984 = vunpack.c.l.b16 %v257
      %v1985 = vunpack.c.l.b16 %v267
      %v1986 = vunpack.c.l.b16 %v281
      %v1987 = vunpack.c.l.b16 %v291
      %v1988 = vunpack.c.l.b16 %v305
      %v1989 = vunpack.c.l.b16 %v315
      %v1990 = vunpack.c.l.b16 %v329
      %v1991 = vunpack.c.l.b16 %v339
      %v1992 = vunpack.c.l.b16 %v353
      %v1993 = vunpack.c.l.b16 %v363
      %v1994 = vunpack.c.l.b16 %v377
      %v1995 = vunpack.c.l.b16 %v387
      %v1996 = vunpack.c.l.b16 %v401
      %v1997 = vunpack.c.l.b16 %v411
      %v1998 = vunpack.c.l.b16 %v425
      %v1999 = vunpack.c.l.b16 %v435
      %v2000 = vunpack.c.l.b16 %v449
      %v2001 = vunpack.c.l.b16 %v459
      %v2002 = vunpack.c.l.b16 %v473
      %v2003 = vunpack.c.l.b16 %v483
      %v2004 = vunpack.c.l.b16 %v497
      %v2005 = vunpack.c.l.b16 %v507
      %v2006 = vunpack.c.l.b16 %v521
      %v2007 = vunpack.c.l.b16 %v531
      %v2008 = vunpack.c.l.b16 %v545
      %v2009 = vunpack.c.l.b16 %v555
      %v2010 = vunpack.c.l.b16 %v569
      %v2011 = vunpack.c.l.b16 %v579
      %v2012 = vpack.c.b16 %v1981, %v1980
      %v2013 = vpack.c.b16 %v1983, %v1982
      %v2014 = vpack.c.b16 %v1985, %v1984
      %v2015 = vpack.c.b16 %v1987, %v1986
      %v2016 = vpack.c.b16 %v1989, %v1988
      %v2017 = vpack.c.b16 %v1991, %v1990
      %v2018 = vpack.c.b16 %v1993, %v1992
      %v2019 = vpack.c.b16 %v1995, %v1994
      %v2020 = vpack.c.b16 %v1997, %v1996
      %v2021 = vpack.c.b16 %v1999, %v1998
      %v2022 = vpack.c.b16 %v2001, %v2000
      %v2023 = vpack.c.b16 %v2003, %v2002
      %v2024 = vpack.c.b16 %v2005, %v2004
      %v2025 = vpack.c.b16 %v2007, %v2006
      %v2026 = vpack.c.b16 %v2009, %v2008
      %v2027 = vpack.c.b16 %v2011, %v2010
      %vm2028 = vcmask 31744
      %v2030 = vsel %vm2028, %v2012, 0
      %v2033 = vsel %vm2028, %v2013, 0
      %v2036 = vsel %vm2028, %v2014, 0
      %v2039 = vsel %vm2028, %v2015, 0
      %v2042 = vsel %vm2028, %v2016, 0
      %v2045 = vsel %vm2028, %v2017, 0
      %v2048 = vsel %vm2028, %v2018, 0
      %v2051 = vsel %vm2028, %v2019, 0
      %v2054 = vsel %vm2028, %v2020, 0
      %v2057 = vsel %vm2028, %v2021, 0
      %v2060 = vsel %vm2028, %v2022, 0
      %v2063 = vsel %vm2028, %v2023, 0
      %v2066 = vsel %vm2028, %v2024, 0
      %v2069 = vsel %vm2028, %v2025, 0
      %v2072 = vsel %vm2028, %v2026, 0
      %v2075 = vsel %vm2028, %v2027, 0
      %vm2077 = vcmask 1041408
      %v2079 = vsel %vm2077, %v1979, 0
      %2081 = vmatpush.bf16.msra.mxu0 0
      %2082 = vmatpush.bf16.msra.mxu0 0
      %2083 = vmatpush.bf16.msra.mxu0 0
      %2084 = vmatpush.bf16.msra.mxu0 0
      %2085 = vmatpush.bf16.msra.mxu0 0
      %2086 = vmatpush.bf16.msra.mxu0 0
      %2087 = vmatpush.bf16.msra.mxu0 0
      %2088 = vmatpush.bf16.msra.mxu0 %v2079
      %2089 = vmatmul.bf16.gmra.mxu0 %v2030
      %v2090 = vpop.f32.mrf.mxu0
      %v2091 = vadd.f32 0.0, %v2090
      %v2092 = vpop.f32.mrf.mxu0
      %v2093 = vadd.f32 0.0, %v2092
      %2094 = vmatmul.bf16.gmra.mxu0 %v2033
      %v2095 = vpop.f32.mrf.mxu0
      %v2096 = vadd.f32 0.0, %v2095
      %v2097 = vpop.f32.mrf.mxu0
      %v2098 = vadd.f32 0.0, %v2097
      %2099 = vmatmul.bf16.gmra.mxu0 %v2036
      %v2100 = vpop.f32.mrf.mxu0
      %v2101 = vadd.f32 0.0, %v2100
      %v2102 = vpop.f32.mrf.mxu0
      %v2103 = vadd.f32 0.0, %v2102
      %2104 = vmatmul.bf16.gmra.mxu0 %v2039
      %v2105 = vpop.f32.mrf.mxu0
      %v2106 = vadd.f32 0.0, %v2105
      %v2107 = vpop.f32.mrf.mxu0
      %v2108 = vadd.f32 0.0, %v2107
      %2109 = vmatmul.bf16.gmra.mxu0 %v2042
      %v2110 = vpop.f32.mrf.mxu0
      %v2111 = vadd.f32 0.0, %v2110
      %v2112 = vpop.f32.mrf.mxu0
      %v2113 = vadd.f32 0.0, %v2112
      %2114 = vmatmul.bf16.gmra.mxu0 %v2045
      %v2115 = vpop.f32.mrf.mxu0
      %v2116 = vadd.f32 0.0, %v2115
      %v2117 = vpop.f32.mrf.mxu0
      %v2118 = vadd.f32 0.0, %v2117
      %2119 = vmatmul.bf16.gmra.mxu0 %v2048
      %v2120 = vpop.f32.mrf.mxu0
      %v2121 = vadd.f32 0.0, %v2120
      %v2122 = vpop.f32.mrf.mxu0
      %v2123 = vadd.f32 0.0, %v2122
      %2124 = vmatmul.bf16.gmra.mxu0 %v2051
      %v2125 = vpop.f32.mrf.mxu0
      %v2126 = vadd.f32 0.0, %v2125
      %v2127 = vpop.f32.mrf.mxu0
      %v2128 = vadd.f32 0.0, %v2127
      %2129 = vmatmul.bf16.gmra.mxu0 %v2054
      %v2130 = vpop.f32.mrf.mxu0
      %v2131 = vadd.f32 0.0, %v2130
      %v2132 = vpop.f32.mrf.mxu0
      %v2133 = vadd.f32 0.0, %v2132
      %2134 = vmatmul.bf16.gmra.mxu0 %v2057
      %v2135 = vpop.f32.mrf.mxu0
      %v2136 = vadd.f32 0.0, %v2135
      %v2137 = vpop.f32.mrf.mxu0
      %v2138 = vadd.f32 0.0, %v2137
      %2139 = vmatmul.bf16.gmra.mxu0 %v2060
      %v2140 = vpop.f32.mrf.mxu0
      %v2141 = vadd.f32 0.0, %v2140
      %v2142 = vpop.f32.mrf.mxu0
      %v2143 = vadd.f32 0.0, %v2142
      %2144 = vmatmul.bf16.gmra.mxu0 %v2063
      %v2145 = vpop.f32.mrf.mxu0
      %v2146 = vadd.f32 0.0, %v2145
      %v2147 = vpop.f32.mrf.mxu0
      %v2148 = vadd.f32 0.0, %v2147
      %2149 = vmatmul.bf16.gmra.mxu0 %v2066
      %v2150 = vpop.f32.mrf.mxu0
      %v2151 = vadd.f32 0.0, %v2150
      %v2152 = vpop.f32.mrf.mxu0
      %v2153 = vadd.f32 0.0, %v2152
      %2154 = vmatmul.bf16.gmra.mxu0 %v2069
      %v2155 = vpop.f32.mrf.mxu0
      %v2156 = vadd.f32 0.0, %v2155
      %v2157 = vpop.f32.mrf.mxu0
      %v2158 = vadd.f32 0.0, %v2157
      %2159 = vmatmul.bf16.gmra.mxu0 %v2072
      %v2160 = vpop.f32.mrf.mxu0
      %v2161 = vadd.f32 0.0, %v2160
      %v2162 = vpop.f32.mrf.mxu0
      %v2163 = vadd.f32 0.0, %v2162
      %2164 = vmatmul.bf16.gmra.mxu0 %v2075
      %v2165 = vpop.f32.mrf.mxu0
      %v2166 = vadd.f32 0.0, %v2165
      %v2167 = vpop.f32.mrf.mxu0
      %v2168 = vadd.f32 0.0, %v2167
      %2169 = vdwg.mxu0
      %v2186 = vunpack.c.l.b16 %v145
      %v2187 = vunpack.c.l.b16 %v146
      %v2188 = vunpack.c.l.b16 %v147
      %v2189 = vunpack.c.l.b16 %v148
      %v2190 = vunpack.c.l.b16 %v149
      %v2191 = vunpack.c.l.b16 %v150
      %v2192 = vunpack.c.l.b16 %v151
      %v2193 = vunpack.c.l.b16 %v152
      %v2194 = vunpack.c.l.b16 %v153
      %v2195 = vunpack.c.l.b16 %v154
      %v2196 = vunpack.c.l.b16 %v155
      %v2197 = vunpack.c.l.b16 %v156
      %v2198 = vunpack.c.l.b16 %v157
      %v2199 = vunpack.c.l.b16 %v158
      %v2200 = vunpack.c.l.b16 %v159
      %v2201 = vunpack.c.l.b16 %v160
      %v2202 = vunpack.c.l.b16 %v161
      %v2203 = vunpack.c.l.b16 %v162
      %v2204 = vunpack.c.l.b16 %v163
      %v2205 = vunpack.c.l.b16 %v164
      %v2206 = vunpack.c.l.b16 %v165
      %v2207 = vunpack.c.l.b16 %v166
      %v2208 = vunpack.c.l.b16 %v167
      %v2209 = vunpack.c.l.b16 %v168
      %v2210 = vunpack.c.l.b16 %v169
      %v2211 = vunpack.c.l.b16 %v170
      %v2212 = vunpack.c.l.b16 %v171
      %v2213 = vunpack.c.l.b16 %v172
      %v2214 = vunpack.c.l.b16 %v173
      %v2215 = vunpack.c.l.b16 %v174
      %v2216 = vunpack.c.l.b16 %v175
      %v2217 = vunpack.c.l.b16 %v176
      %v2218 = vpack.c.b16 %v2187, %v2186
      %v2219 = vpack.c.b16 %v2189, %v2188
      %v2220 = vpack.c.b16 %v2191, %v2190
      %v2221 = vpack.c.b16 %v2193, %v2192
      %v2222 = vpack.c.b16 %v2195, %v2194
      %v2223 = vpack.c.b16 %v2197, %v2196
      %v2224 = vpack.c.b16 %v2199, %v2198
      %v2225 = vpack.c.b16 %v2201, %v2200
      %v2226 = vpack.c.b16 %v2203, %v2202
      %v2227 = vpack.c.b16 %v2205, %v2204
      %v2228 = vpack.c.b16 %v2207, %v2206
      %v2229 = vpack.c.b16 %v2209, %v2208
      %v2230 = vpack.c.b16 %v2211, %v2210
      %v2231 = vpack.c.b16 %v2213, %v2212
      %v2232 = vpack.c.b16 %v2215, %v2214
      %v2233 = vpack.c.b16 %v2217, %v2216
      %v2235 = vsel %vm2028, %v2218, 0
      %v2238 = vsel %vm2028, %v2219, 0
      %v2241 = vsel %vm2028, %v2220, 0
      %v2244 = vsel %vm2028, %v2221, 0
      %v2247 = vsel %vm2028, %v2222, 0
      %v2250 = vsel %vm2028, %v2223, 0
      %v2253 = vsel %vm2028, %v2224, 0
      %v2256 = vsel %vm2028, %v2225, 0
      %v2259 = vsel %vm2028, %v2226, 0
      %v2262 = vsel %vm2028, %v2227, 0
      %v2265 = vsel %vm2028, %v2228, 0
      %v2268 = vsel %vm2028, %v2229, 0
      %v2271 = vsel %vm2028, %v2230, 0
      %v2274 = vsel %vm2028, %v2231, 0
      %v2277 = vsel %vm2028, %v2232, 0
      %v2280 = vsel %vm2028, %v2233, 0
      %v2283 = vsel %vm2077, %v1977, 0
      %2285 = vmatpush.bf16.msra.mxu0 0
      %2286 = vmatpush.bf16.msra.mxu0 0
      %2287 = vmatpush.bf16.msra.mxu0 0
      %2288 = vmatpush.bf16.msra.mxu0 0
      %2289 = vmatpush.bf16.msra.mxu0 0
      %2290 = vmatpush.bf16.msra.mxu0 0
      %2291 = vmatpush.bf16.msra.mxu0 0
      %2292 = vmatpush.bf16.msra.mxu0 %v2283
      %2293 = vmatmul.bf16.gmra.mxu0 %v2235
      %v2294 = vpop.f32.mrf.mxu0
      %v2295 = vadd.f32 %v2091, %v2294
      %v2296 = vpop.f32.mrf.mxu0
      %v2297 = vadd.f32 %v2093, %v2296
      %2298 = vmatmul.bf16.gmra.mxu0 %v2238
      %v2299 = vpop.f32.mrf.mxu0
      %v2300 = vadd.f32 %v2096, %v2299
      %v2301 = vpop.f32.mrf.mxu0
      %v2302 = vadd.f32 %v2098, %v2301
      %2303 = vmatmul.bf16.gmra.mxu0 %v2241
      %v2304 = vpop.f32.mrf.mxu0
      %v2305 = vadd.f32 %v2101, %v2304
      %v2306 = vpop.f32.mrf.mxu0
      %v2307 = vadd.f32 %v2103, %v2306
      %2308 = vmatmul.bf16.gmra.mxu0 %v2244
      %v2309 = vpop.f32.mrf.mxu0
      %v2310 = vadd.f32 %v2106, %v2309
      %v2311 = vpop.f32.mrf.mxu0
      %v2312 = vadd.f32 %v2108, %v2311
      %2313 = vmatmul.bf16.gmra.mxu0 %v2247
      %v2314 = vpop.f32.mrf.mxu0
      %v2315 = vadd.f32 %v2111, %v2314
      %v2316 = vpop.f32.mrf.mxu0
      %v2317 = vadd.f32 %v2113, %v2316
      %2318 = vmatmul.bf16.gmra.mxu0 %v2250
      %v2319 = vpop.f32.mrf.mxu0
      %v2320 = vadd.f32 %v2116, %v2319
      %v2321 = vpop.f32.mrf.mxu0
      %v2322 = vadd.f32 %v2118, %v2321
      %2323 = vmatmul.bf16.gmra.mxu0 %v2253
      %v2324 = vpop.f32.mrf.mxu0
      %v2325 = vadd.f32 %v2121, %v2324
      %v2326 = vpop.f32.mrf.mxu0
      %v2327 = vadd.f32 %v2123, %v2326
      %2328 = vmatmul.bf16.gmra.mxu0 %v2256
      %v2329 = vpop.f32.mrf.mxu0
      %v2330 = vadd.f32 %v2126, %v2329
      %v2331 = vpop.f32.mrf.mxu0
      %v2332 = vadd.f32 %v2128, %v2331
      %2333 = vmatmul.bf16.gmra.mxu0 %v2259
      %v2334 = vpop.f32.mrf.mxu0
      %v2335 = vadd.f32 %v2131, %v2334
      %v2336 = vpop.f32.mrf.mxu0
      %v2337 = vadd.f32 %v2133, %v2336
      %2338 = vmatmul.bf16.gmra.mxu0 %v2262
      %v2339 = vpop.f32.mrf.mxu0
      %v2340 = vadd.f32 %v2136, %v2339
      %v2341 = vpop.f32.mrf.mxu0
      %v2342 = vadd.f32 %v2138, %v2341
      %2343 = vmatmul.bf16.gmra.mxu0 %v2265
      %v2344 = vpop.f32.mrf.mxu0
      %v2345 = vadd.f32 %v2141, %v2344
      %v2346 = vpop.f32.mrf.mxu0
      %v2347 = vadd.f32 %v2143, %v2346
      %2348 = vmatmul.bf16.gmra.mxu0 %v2268
      %v2349 = vpop.f32.mrf.mxu0
      %v2350 = vadd.f32 %v2146, %v2349
      %v2351 = vpop.f32.mrf.mxu0
      %v2352 = vadd.f32 %v2148, %v2351
      %2353 = vmatmul.bf16.gmra.mxu0 %v2271
      %v2354 = vpop.f32.mrf.mxu0
      %v2355 = vadd.f32 %v2151, %v2354
      %v2356 = vpop.f32.mrf.mxu0
      %v2357 = vadd.f32 %v2153, %v2356
      %2358 = vmatmul.bf16.gmra.mxu0 %v2274
      %v2359 = vpop.f32.mrf.mxu0
      %v2360 = vadd.f32 %v2156, %v2359
      %v2361 = vpop.f32.mrf.mxu0
      %v2362 = vadd.f32 %v2158, %v2361
      %2363 = vmatmul.bf16.gmra.mxu0 %v2277
      %v2364 = vpop.f32.mrf.mxu0
      %v2365 = vadd.f32 %v2161, %v2364
      %v2366 = vpop.f32.mrf.mxu0
      %v2367 = vadd.f32 %v2163, %v2366
      %2368 = vmatmul.bf16.gmra.mxu0 %v2280
      %v2369 = vpop.f32.mrf.mxu0
      %v2370 = vadd.f32 %v2166, %v2369
      %v2371 = vpop.f32.mrf.mxu0
      %v2372 = vadd.f32 %v2168, %v2371
      %2373 = vdwg.mxu0
      %s2374 = scalar_lea.vmem %s1, 4
      %v2375 = vld [vmem:[%s2374] sm:$0x3]
      %v2392 = vunpack.c.l.b16 %v760
      %v2393 = vunpack.c.l.b16 %v761
      %v2394 = vunpack.c.l.b16 %v762
      %v2395 = vunpack.c.l.b16 %v763
      %v2396 = vunpack.c.l.b16 %v764
      %v2397 = vunpack.c.l.b16 %v765
      %v2398 = vunpack.c.l.b16 %v766
      %v2399 = vunpack.c.l.b16 %v767
      %v2400 = vunpack.c.l.b16 %v768
      %v2401 = vunpack.c.l.b16 %v769
      %v2402 = vunpack.c.l.b16 %v770
      %v2403 = vunpack.c.l.b16 %v771
      %v2404 = vunpack.c.l.b16 %v772
      %v2405 = vunpack.c.l.b16 %v773
      %v2406 = vunpack.c.l.b16 %v774
      %v2407 = vunpack.c.l.b16 %v775
      %v2408 = vunpack.c.l.b16 %v776
      %v2409 = vunpack.c.l.b16 %v777
      %v2410 = vunpack.c.l.b16 %v778
      %v2411 = vunpack.c.l.b16 %v779
      %v2412 = vunpack.c.l.b16 %v780
      %v2413 = vunpack.c.l.b16 %v781
      %v2414 = vunpack.c.l.b16 %v782
      %v2415 = vunpack.c.l.b16 %v783
      %v2416 = vunpack.c.l.b16 %v784
      %v2417 = vunpack.c.l.b16 %v785
      %v2418 = vunpack.c.l.b16 %v786
      %v2419 = vunpack.c.l.b16 %v787
      %v2420 = vunpack.c.l.b16 %v788
      %v2421 = vunpack.c.l.b16 %v789
      %v2422 = vunpack.c.l.b16 %v790
      %v2423 = vunpack.c.l.b16 %v791
      %v2424 = vpack.c.b16 %v2393, %v2392
      %v2425 = vpack.c.b16 %v2395, %v2394
      %v2426 = vpack.c.b16 %v2397, %v2396
      %v2427 = vpack.c.b16 %v2399, %v2398
      %v2428 = vpack.c.b16 %v2401, %v2400
      %v2429 = vpack.c.b16 %v2403, %v2402
      %v2430 = vpack.c.b16 %v2405, %v2404
      %v2431 = vpack.c.b16 %v2407, %v2406
      %v2432 = vpack.c.b16 %v2409, %v2408
      %v2433 = vpack.c.b16 %v2411, %v2410
      %v2434 = vpack.c.b16 %v2413, %v2412
      %v2435 = vpack.c.b16 %v2415, %v2414
      %v2436 = vpack.c.b16 %v2417, %v2416
      %v2437 = vpack.c.b16 %v2419, %v2418
      %v2438 = vpack.c.b16 %v2421, %v2420
      %v2439 = vpack.c.b16 %v2423, %v2422
      %v2441 = vsel %vm2028, %v2424, 0
      %v2444 = vsel %vm2028, %v2425, 0
      %v2447 = vsel %vm2028, %v2426, 0
      %v2450 = vsel %vm2028, %v2427, 0
      %v2453 = vsel %vm2028, %v2428, 0
      %v2456 = vsel %vm2028, %v2429, 0
      %v2459 = vsel %vm2028, %v2430, 0
      %v2462 = vsel %vm2028, %v2431, 0
      %v2465 = vsel %vm2028, %v2432, 0
      %v2468 = vsel %vm2028, %v2433, 0
      %v2471 = vsel %vm2028, %v2434, 0
      %v2474 = vsel %vm2028, %v2435, 0
      %v2477 = vsel %vm2028, %v2436, 0
      %v2480 = vsel %vm2028, %v2437, 0
      %v2483 = vsel %vm2028, %v2438, 0
      %v2486 = vsel %vm2028, %v2439, 0
      %v2489 = vsel %vm2077, %v2375, 0
      %2491 = vmatpush.bf16.msra.mxu0 0
      %2492 = vmatpush.bf16.msra.mxu0 0
      %2493 = vmatpush.bf16.msra.mxu0 0
      %2494 = vmatpush.bf16.msra.mxu0 0
      %2495 = vmatpush.bf16.msra.mxu0 0
      %2496 = vmatpush.bf16.msra.mxu0 0
      %2497 = vmatpush.bf16.msra.mxu0 0
      %2498 = vmatpush.bf16.msra.mxu0 %v2489
      %2499 = vmatmul.bf16.gmra.mxu0 %v2441
      %v2500 = vpop.f32.mrf.mxu0
      %v2501 = vadd.f32 0.0, %v2500
      %v2502 = vpop.f32.mrf.mxu0
      %v2503 = vadd.f32 0.0, %v2502
      %2504 = vmatmul.bf16.gmra.mxu0 %v2444
      %v2505 = vpop.f32.mrf.mxu0
      %v2506 = vadd.f32 0.0, %v2505
      %v2507 = vpop.f32.mrf.mxu0
      %v2508 = vadd.f32 0.0, %v2507
      %2509 = vmatmul.bf16.gmra.mxu0 %v2447
      %v2510 = vpop.f32.mrf.mxu0
      %v2511 = vadd.f32 0.0, %v2510
      %v2512 = vpop.f32.mrf.mxu0
      %v2513 = vadd.f32 0.0, %v2512
      %2514 = vmatmul.bf16.gmra.mxu0 %v2450
      %v2515 = vpop.f32.mrf.mxu0
      %v2516 = vadd.f32 0.0, %v2515
      %v2517 = vpop.f32.mrf.mxu0
      %v2518 = vadd.f32 0.0, %v2517
      %2519 = vmatmul.bf16.gmra.mxu0 %v2453
      %v2520 = vpop.f32.mrf.mxu0
      %v2521 = vadd.f32 0.0, %v2520
      %v2522 = vpop.f32.mrf.mxu0
      %v2523 = vadd.f32 0.0, %v2522
      %2524 = vmatmul.bf16.gmra.mxu0 %v2456
      %v2525 = vpop.f32.mrf.mxu0
      %v2526 = vadd.f32 0.0, %v2525
      %v2527 = vpop.f32.mrf.mxu0
      %v2528 = vadd.f32 0.0, %v2527
      %2529 = vmatmul.bf16.gmra.mxu0 %v2459
      %v2530 = vpop.f32.mrf.mxu0
      %v2531 = vadd.f32 0.0, %v2530
      %v2532 = vpop.f32.mrf.mxu0
      %v2533 = vadd.f32 0.0, %v2532
      %2534 = vmatmul.bf16.gmra.mxu0 %v2462
      %v2535 = vpop.f32.mrf.mxu0
      %v2536 = vadd.f32 0.0, %v2535
      %v2537 = vpop.f32.mrf.mxu0
      %v2538 = vadd.f32 0.0, %v2537
      %2539 = vmatmul.bf16.gmra.mxu0 %v2465
      %v2540 = vpop.f32.mrf.mxu0
      %v2541 = vadd.f32 0.0, %v2540
      %v2542 = vpop.f32.mrf.mxu0
      %v2543 = vadd.f32 0.0, %v2542
      %2544 = vmatmul.bf16.gmra.mxu0 %v2468
      %v2545 = vpop.f32.mrf.mxu0
      %v2546 = vadd.f32 0.0, %v2545
      %v2547 = vpop.f32.mrf.mxu0
      %v2548 = vadd.f32 0.0, %v2547
      %2549 = vmatmul.bf16.gmra.mxu0 %v2471
      %v2550 = vpop.f32.mrf.mxu0
      %v2551 = vadd.f32 0.0, %v2550
      %v2552 = vpop.f32.mrf.mxu0
      %v2553 = vadd.f32 0.0, %v2552
      %2554 = vmatmul.bf16.gmra.mxu0 %v2474
      %v2555 = vpop.f32.mrf.mxu0
      %v2556 = vadd.f32 0.0, %v2555
      %v2557 = vpop.f32.mrf.mxu0
      %v2558 = vadd.f32 0.0, %v2557
      %2559 = vmatmul.bf16.gmra.mxu0 %v2477
      %v2560 = vpop.f32.mrf.mxu0
      %v2561 = vadd.f32 0.0, %v2560
      %v2562 = vpop.f32.mrf.mxu0
      %v2563 = vadd.f32 0.0, %v2562
      %2564 = vmatmul.bf16.gmra.mxu0 %v2480
      %v2565 = vpop.f32.mrf.mxu0
      %v2566 = vadd.f32 0.0, %v2565
      %v2567 = vpop.f32.mrf.mxu0
      %v2568 = vadd.f32 0.0, %v2567
      %2569 = vmatmul.bf16.gmra.mxu0 %v2483
      %v2570 = vpop.f32.mrf.mxu0
      %v2571 = vadd.f32 0.0, %v2570
      %v2572 = vpop.f32.mrf.mxu0
      %v2573 = vadd.f32 0.0, %v2572
      %2574 = vmatmul.bf16.gmra.mxu0 %v2486
      %v2575 = vpop.f32.mrf.mxu0
      %v2576 = vadd.f32 0.0, %v2575
      %v2577 = vpop.f32.mrf.mxu0
      %v2578 = vadd.f32 0.0, %v2577
      %2579 = vdwg.mxu0
      %v2580 = vadd.f32 %v2295, %v2501
      %v2581 = vadd.f32 %v2297, %v2503
      %v2582 = vadd.f32 %v2300, %v2506
      %v2583 = vadd.f32 %v2302, %v2508
      %v2584 = vadd.f32 %v2305, %v2511
      %v2585 = vadd.f32 %v2307, %v2513
      %v2586 = vadd.f32 %v2310, %v2516
      %v2587 = vadd.f32 %v2312, %v2518
      %v2588 = vadd.f32 %v2315, %v2521
      %v2589 = vadd.f32 %v2317, %v2523
      %v2590 = vadd.f32 %v2320, %v2526
      %v2591 = vadd.f32 %v2322, %v2528
      %v2592 = vadd.f32 %v2325, %v2531
      %v2593 = vadd.f32 %v2327, %v2533
      %v2594 = vadd.f32 %v2330, %v2536
      %v2595 = vadd.f32 %v2332, %v2538
      %v2596 = vadd.f32 %v2335, %v2541
      %v2597 = vadd.f32 %v2337, %v2543
      %v2598 = vadd.f32 %v2340, %v2546
      %v2599 = vadd.f32 %v2342, %v2548
      %v2600 = vadd.f32 %v2345, %v2551
      %v2601 = vadd.f32 %v2347, %v2553
      %v2602 = vadd.f32 %v2350, %v2556
      %v2603 = vadd.f32 %v2352, %v2558
      %v2604 = vadd.f32 %v2355, %v2561
      %v2605 = vadd.f32 %v2357, %v2563
      %v2606 = vadd.f32 %v2360, %v2566
      %v2607 = vadd.f32 %v2362, %v2568
      %v2608 = vadd.f32 %v2365, %v2571
      %v2609 = vadd.f32 %v2367, %v2573
      %v2610 = vadd.f32 %v2370, %v2576
      %v2611 = vadd.f32 %v2372, %v2578
      %s2612 = scalar_lea.vmem %s1, 6
      %v2613 = vld [vmem:[%s2612] sm:$0x3]
      %v2614 = vunpack.c.l.b16 %v821
      %v2615 = vunpack.c.l.b16 %v831
      %v2616 = vunpack.c.l.b16 %v845
      %v2617 = vunpack.c.l.b16 %v855
      %v2618 = vunpack.c.l.b16 %v869
      %v2619 = vunpack.c.l.b16 %v879
      %v2620 = vunpack.c.l.b16 %v893
      %v2621 = vunpack.c.l.b16 %v903
      %v2622 = vunpack.c.l.b16 %v917
      %v2623 = vunpack.c.l.b16 %v927
      %v2624 = vunpack.c.l.b16 %v941
      %v2625 = vunpack.c.l.b16 %v951
      %v2626 = vunpack.c.l.b16 %v965
      %v2627 = vunpack.c.l.b16 %v975
      %v2628 = vunpack.c.l.b16 %v989
      %v2629 = vunpack.c.l.b16 %v999
      %v2630 = vunpack.c.l.b16 %v1013
      %v2631 = vunpack.c.l.b16 %v1023
      %v2632 = vunpack.c.l.b16 %v1037
      %v2633 = vunpack.c.l.b16 %v1047
      %v2634 = vunpack.c.l.b16 %v1061
      %v2635 = vunpack.c.l.b16 %v1071
      %v2636 = vunpack.c.l.b16 %v1085
      %v2637 = vunpack.c.l.b16 %v1095
      %v2638 = vunpack.c.l.b16 %v1109
      %v2639 = vunpack.c.l.b16 %v1119
      %v2640 = vunpack.c.l.b16 %v1133
      %v2641 = vunpack.c.l.b16 %v1143
      %v2642 = vunpack.c.l.b16 %v1157
      %v2643 = vunpack.c.l.b16 %v1167
      %v2644 = vunpack.c.l.b16 %v1181
      %v2645 = vunpack.c.l.b16 %v1191
      %v2646 = vpack.c.b16 %v2615, %v2614
      %v2647 = vpack.c.b16 %v2617, %v2616
      %v2648 = vpack.c.b16 %v2619, %v2618
      %v2649 = vpack.c.b16 %v2621, %v2620
      %v2650 = vpack.c.b16 %v2623, %v2622
      %v2651 = vpack.c.b16 %v2625, %v2624
      %v2652 = vpack.c.b16 %v2627, %v2626
      %v2653 = vpack.c.b16 %v2629, %v2628
      %v2654 = vpack.c.b16 %v2631, %v2630
      %v2655 = vpack.c.b16 %v2633, %v2632
      %v2656 = vpack.c.b16 %v2635, %v2634
      %v2657 = vpack.c.b16 %v2637, %v2636
      %v2658 = vpack.c.b16 %v2639, %v2638
      %v2659 = vpack.c.b16 %v2641, %v2640
      %v2660 = vpack.c.b16 %v2643, %v2642
      %v2661 = vpack.c.b16 %v2645, %v2644
      %v2663 = vsel %vm2028, %v2646, 0
      %v2666 = vsel %vm2028, %v2647, 0
      %v2669 = vsel %vm2028, %v2648, 0
      %v2672 = vsel %vm2028, %v2649, 0
      %v2675 = vsel %vm2028, %v2650, 0
      %v2678 = vsel %vm2028, %v2651, 0
      %v2681 = vsel %vm2028, %v2652, 0
      %v2684 = vsel %vm2028, %v2653, 0
      %v2687 = vsel %vm2028, %v2654, 0
      %v2690 = vsel %vm2028, %v2655, 0
      %v2693 = vsel %vm2028, %v2656, 0
      %v2696 = vsel %vm2028, %v2657, 0
      %v2699 = vsel %vm2028, %v2658, 0
      %v2702 = vsel %vm2028, %v2659, 0
      %v2705 = vsel %vm2028, %v2660, 0
      %v2708 = vsel %vm2028, %v2661, 0
      %v2711 = vsel %vm2077, %v2613, 0
      %2713 = vmatpush.bf16.msra.mxu0 0
      %2714 = vmatpush.bf16.msra.mxu0 0
      %2715 = vmatpush.bf16.msra.mxu0 0
      %2716 = vmatpush.bf16.msra.mxu0 0
      %2717 = vmatpush.bf16.msra.mxu0 0
      %2718 = vmatpush.bf16.msra.mxu0 0
      %2719 = vmatpush.bf16.msra.mxu0 0
      %2720 = vmatpush.bf16.msra.mxu0 %v2711
      %2721 = vmatmul.bf16.gmra.mxu0 %v2663
      %v2722 = vpop.f32.mrf.mxu0
      %v2723 = vadd.f32 0.0, %v2722
      %v2724 = vpop.f32.mrf.mxu0
      %v2725 = vadd.f32 0.0, %v2724
      %2726 = vmatmul.bf16.gmra.mxu0 %v2666
      %v2727 = vpop.f32.mrf.mxu0
      %v2728 = vadd.f32 0.0, %v2727
      %v2729 = vpop.f32.mrf.mxu0
      %v2730 = vadd.f32 0.0, %v2729
      %2731 = vmatmul.bf16.gmra.mxu0 %v2669
      %v2732 = vpop.f32.mrf.mxu0
      %v2733 = vadd.f32 0.0, %v2732
      %v2734 = vpop.f32.mrf.mxu0
      %v2735 = vadd.f32 0.0, %v2734
      %2736 = vmatmul.bf16.gmra.mxu0 %v2672
      %v2737 = vpop.f32.mrf.mxu0
      %v2738 = vadd.f32 0.0, %v2737
      %v2739 = vpop.f32.mrf.mxu0
      %v2740 = vadd.f32 0.0, %v2739
      %2741 = vmatmul.bf16.gmra.mxu0 %v2675
      %v2742 = vpop.f32.mrf.mxu0
      %v2743 = vadd.f32 0.0, %v2742
      %v2744 = vpop.f32.mrf.mxu0
      %v2745 = vadd.f32 0.0, %v2744
      %2746 = vmatmul.bf16.gmra.mxu0 %v2678
      %v2747 = vpop.f32.mrf.mxu0
      %v2748 = vadd.f32 0.0, %v2747
      %v2749 = vpop.f32.mrf.mxu0
      %v2750 = vadd.f32 0.0, %v2749
      %2751 = vmatmul.bf16.gmra.mxu0 %v2681
      %v2752 = vpop.f32.mrf.mxu0
      %v2753 = vadd.f32 0.0, %v2752
      %v2754 = vpop.f32.mrf.mxu0
      %v2755 = vadd.f32 0.0, %v2754
      %2756 = vmatmul.bf16.gmra.mxu0 %v2684
      %v2757 = vpop.f32.mrf.mxu0
      %v2758 = vadd.f32 0.0, %v2757
      %v2759 = vpop.f32.mrf.mxu0
      %v2760 = vadd.f32 0.0, %v2759
      %2761 = vmatmul.bf16.gmra.mxu0 %v2687
      %v2762 = vpop.f32.mrf.mxu0
      %v2763 = vadd.f32 0.0, %v2762
      %v2764 = vpop.f32.mrf.mxu0
      %v2765 = vadd.f32 0.0, %v2764
      %2766 = vmatmul.bf16.gmra.mxu0 %v2690
      %v2767 = vpop.f32.mrf.mxu0
      %v2768 = vadd.f32 0.0, %v2767
      %v2769 = vpop.f32.mrf.mxu0
      %v2770 = vadd.f32 0.0, %v2769
      %2771 = vmatmul.bf16.gmra.mxu0 %v2693
      %v2772 = vpop.f32.mrf.mxu0
      %v2773 = vadd.f32 0.0, %v2772
      %v2774 = vpop.f32.mrf.mxu0
      %v2775 = vadd.f32 0.0, %v2774
      %2776 = vmatmul.bf16.gmra.mxu0 %v2696
      %v2777 = vpop.f32.mrf.mxu0
      %v2778 = vadd.f32 0.0, %v2777
      %v2779 = vpop.f32.mrf.mxu0
      %v2780 = vadd.f32 0.0, %v2779
      %2781 = vmatmul.bf16.gmra.mxu0 %v2699
      %v2782 = vpop.f32.mrf.mxu0
      %v2783 = vadd.f32 0.0, %v2782
      %v2784 = vpop.f32.mrf.mxu0
      %v2785 = vadd.f32 0.0, %v2784
      %2786 = vmatmul.bf16.gmra.mxu0 %v2702
      %v2787 = vpop.f32.mrf.mxu0
      %v2788 = vadd.f32 0.0, %v2787
      %v2789 = vpop.f32.mrf.mxu0
      %v2790 = vadd.f32 0.0, %v2789
      %2791 = vmatmul.bf16.gmra.mxu0 %v2705
      %v2792 = vpop.f32.mrf.mxu0
      %v2793 = vadd.f32 0.0, %v2792
      %v2794 = vpop.f32.mrf.mxu0
      %v2795 = vadd.f32 0.0, %v2794
      %2796 = vmatmul.bf16.gmra.mxu0 %v2708
      %v2797 = vpop.f32.mrf.mxu0
      %v2798 = vadd.f32 0.0, %v2797
      %v2799 = vpop.f32.mrf.mxu0
      %v2800 = vadd.f32 0.0, %v2799
      %2801 = vdwg.mxu0
      %v2802 = vadd.f32 %v2580, %v2723
      %v2803 = vadd.f32 %v2581, %v2725
      %v2804 = vadd.f32 %v2582, %v2728
      %v2805 = vadd.f32 %v2583, %v2730
      %v2806 = vadd.f32 %v2584, %v2733
      %v2807 = vadd.f32 %v2585, %v2735
      %v2808 = vadd.f32 %v2586, %v2738
      %v2809 = vadd.f32 %v2587, %v2740
      %v2810 = vadd.f32 %v2588, %v2743
      %v2811 = vadd.f32 %v2589, %v2745
      %v2812 = vadd.f32 %v2590, %v2748
      %v2813 = vadd.f32 %v2591, %v2750
      %v2814 = vadd.f32 %v2592, %v2753
      %v2815 = vadd.f32 %v2593, %v2755
      %v2816 = vadd.f32 %v2594, %v2758
      %v2817 = vadd.f32 %v2595, %v2760
      %v2818 = vadd.f32 %v2596, %v2763
      %v2819 = vadd.f32 %v2597, %v2765
      %v2820 = vadd.f32 %v2598, %v2768
      %v2821 = vadd.f32 %v2599, %v2770
      %v2822 = vadd.f32 %v2600, %v2773
      %v2823 = vadd.f32 %v2601, %v2775
      %v2824 = vadd.f32 %v2602, %v2778
      %v2825 = vadd.f32 %v2603, %v2780
      %v2826 = vadd.f32 %v2604, %v2783
      %v2827 = vadd.f32 %v2605, %v2785
      %v2828 = vadd.f32 %v2606, %v2788
      %v2829 = vadd.f32 %v2607, %v2790
      %v2830 = vadd.f32 %v2608, %v2793
      %v2831 = vadd.f32 %v2609, %v2795
      %v2832 = vadd.f32 %v2610, %v2798
      %v2833 = vadd.f32 %v2611, %v2800
      %s2834 = scalar_lea.vmem %s1, 8
      %v2835 = vld [vmem:[%s2834] sm:$0x3]
      %s2836 = scalar_lea.vmem %s1, 10
      %v2837 = vld [vmem:[%s2836] sm:$0x3]
      %v2838 = vunpack.c.l.b16 %v650
      %v2839 = vunpack.c.l.b16 %v653
      %v2840 = vunpack.c.l.b16 %v657
      %v2841 = vunpack.c.l.b16 %v660
      %v2842 = vunpack.c.l.b16 %v664
      %v2843 = vunpack.c.l.b16 %v667
      %v2844 = vunpack.c.l.b16 %v671
      %v2845 = vunpack.c.l.b16 %v674
      %v2846 = vunpack.c.l.b16 %v678
      %v2847 = vunpack.c.l.b16 %v681
      %v2848 = vunpack.c.l.b16 %v685
      %v2849 = vunpack.c.l.b16 %v688
      %v2850 = vunpack.c.l.b16 %v692
      %v2851 = vunpack.c.l.b16 %v695
      %v2852 = vunpack.c.l.b16 %v699
      %v2853 = vunpack.c.l.b16 %v702
      %v2854 = vunpack.c.l.b16 %v706
      %v2855 = vunpack.c.l.b16 %v709
      %v2856 = vunpack.c.l.b16 %v713
      %v2857 = vunpack.c.l.b16 %v716
      %v2858 = vunpack.c.l.b16 %v720
      %v2859 = vunpack.c.l.b16 %v723
      %v2860 = vunpack.c.l.b16 %v727
      %v2861 = vunpack.c.l.b16 %v730
      %v2862 = vunpack.c.l.b16 %v734
      %v2863 = vunpack.c.l.b16 %v737
      %v2864 = vunpack.c.l.b16 %v741
      %v2865 = vunpack.c.l.b16 %v744
      %v2866 = vunpack.c.l.b16 %v748
      %v2867 = vunpack.c.l.b16 %v751
      %v2868 = vunpack.c.l.b16 %v755
      %v2869 = vunpack.c.l.b16 %v758
      %v2870 = vpack.c.b16 %v2839, %v2838
      %v2871 = vpack.c.b16 %v2841, %v2840
      %v2872 = vpack.c.b16 %v2843, %v2842
      %v2873 = vpack.c.b16 %v2845, %v2844
      %v2874 = vpack.c.b16 %v2847, %v2846
      %v2875 = vpack.c.b16 %v2849, %v2848
      %v2876 = vpack.c.b16 %v2851, %v2850
      %v2877 = vpack.c.b16 %v2853, %v2852
      %v2878 = vpack.c.b16 %v2855, %v2854
      %v2879 = vpack.c.b16 %v2857, %v2856
      %v2880 = vpack.c.b16 %v2859, %v2858
      %v2881 = vpack.c.b16 %v2861, %v2860
      %v2882 = vpack.c.b16 %v2863, %v2862
      %v2883 = vpack.c.b16 %v2865, %v2864
      %v2884 = vpack.c.b16 %v2867, %v2866
      %v2885 = vpack.c.b16 %v2869, %v2868
      %v2887 = vsel %vm2028, %v2870, 0
      %v2890 = vsel %vm2028, %v2871, 0
      %v2893 = vsel %vm2028, %v2872, 0
      %v2896 = vsel %vm2028, %v2873, 0
      %v2899 = vsel %vm2028, %v2874, 0
      %v2902 = vsel %vm2028, %v2875, 0
      %v2905 = vsel %vm2028, %v2876, 0
      %v2908 = vsel %vm2028, %v2877, 0
      %v2911 = vsel %vm2028, %v2878, 0
      %v2914 = vsel %vm2028, %v2879, 0
      %v2917 = vsel %vm2028, %v2880, 0
      %v2920 = vsel %vm2028, %v2881, 0
      %v2923 = vsel %vm2028, %v2882, 0
      %v2926 = vsel %vm2028, %v2883, 0
      %v2929 = vsel %vm2028, %v2884, 0
      %v2932 = vsel %vm2028, %v2885, 0
      %v2935 = vsel %vm2077, %v2837, 0
      %2937 = vmatpush.bf16.msra.mxu0 0
      %2938 = vmatpush.bf16.msra.mxu0 0
      %2939 = vmatpush.bf16.msra.mxu0 0
      %2940 = vmatpush.bf16.msra.mxu0 0
      %2941 = vmatpush.bf16.msra.mxu0 0
      %2942 = vmatpush.bf16.msra.mxu0 0
      %2943 = vmatpush.bf16.msra.mxu0 0
      %2944 = vmatpush.bf16.msra.mxu0 %v2935
      %2945 = vmatmul.bf16.gmra.mxu0 %v2887
      %v2946 = vpop.f32.mrf.mxu0
      %v2947 = vadd.f32 0.0, %v2946
      %v2948 = vpop.f32.mrf.mxu0
      %v2949 = vadd.f32 0.0, %v2948
      %2950 = vmatmul.bf16.gmra.mxu0 %v2890
      %v2951 = vpop.f32.mrf.mxu0
      %v2952 = vadd.f32 0.0, %v2951
      %v2953 = vpop.f32.mrf.mxu0
      %v2954 = vadd.f32 0.0, %v2953
      %2955 = vmatmul.bf16.gmra.mxu0 %v2893
      %v2956 = vpop.f32.mrf.mxu0
      %v2957 = vadd.f32 0.0, %v2956
      %v2958 = vpop.f32.mrf.mxu0
      %v2959 = vadd.f32 0.0, %v2958
      %2960 = vmatmul.bf16.gmra.mxu0 %v2896
      %v2961 = vpop.f32.mrf.mxu0
      %v2962 = vadd.f32 0.0, %v2961
      %v2963 = vpop.f32.mrf.mxu0
      %v2964 = vadd.f32 0.0, %v2963
      %2965 = vmatmul.bf16.gmra.mxu0 %v2899
      %v2966 = vpop.f32.mrf.mxu0
      %v2967 = vadd.f32 0.0, %v2966
      %v2968 = vpop.f32.mrf.mxu0
      %v2969 = vadd.f32 0.0, %v2968
      %2970 = vmatmul.bf16.gmra.mxu0 %v2902
      %v2971 = vpop.f32.mrf.mxu0
      %v2972 = vadd.f32 0.0, %v2971
      %v2973 = vpop.f32.mrf.mxu0
      %v2974 = vadd.f32 0.0, %v2973
      %2975 = vmatmul.bf16.gmra.mxu0 %v2905
      %v2976 = vpop.f32.mrf.mxu0
      %v2977 = vadd.f32 0.0, %v2976
      %v2978 = vpop.f32.mrf.mxu0
      %v2979 = vadd.f32 0.0, %v2978
      %2980 = vmatmul.bf16.gmra.mxu0 %v2908
      %v2981 = vpop.f32.mrf.mxu0
      %v2982 = vadd.f32 0.0, %v2981
      %v2983 = vpop.f32.mrf.mxu0
      %v2984 = vadd.f32 0.0, %v2983
      %2985 = vmatmul.bf16.gmra.mxu0 %v2911
      %v2986 = vpop.f32.mrf.mxu0
      %v2987 = vadd.f32 0.0, %v2986
      %v2988 = vpop.f32.mrf.mxu0
      %v2989 = vadd.f32 0.0, %v2988
      %2990 = vmatmul.bf16.gmra.mxu0 %v2914
      %v2991 = vpop.f32.mrf.mxu0
      %v2992 = vadd.f32 0.0, %v2991
      %v2993 = vpop.f32.mrf.mxu0
      %v2994 = vadd.f32 0.0, %v2993
      %2995 = vmatmul.bf16.gmra.mxu0 %v2917
      %v2996 = vpop.f32.mrf.mxu0
      %v2997 = vadd.f32 0.0, %v2996
      %v2998 = vpop.f32.mrf.mxu0
      %v2999 = vadd.f32 0.0, %v2998
      %3000 = vmatmul.bf16.gmra.mxu0 %v2920
      %v3001 = vpop.f32.mrf.mxu0
      %v3002 = vadd.f32 0.0, %v3001
      %v3003 = vpop.f32.mrf.mxu0
      %v3004 = vadd.f32 0.0, %v3003
      %3005 = vmatmul.bf16.gmra.mxu0 %v2923
      %v3006 = vpop.f32.mrf.mxu0
      %v3007 = vadd.f32 0.0, %v3006
      %v3008 = vpop.f32.mrf.mxu0
      %v3009 = vadd.f32 0.0, %v3008
      %3010 = vmatmul.bf16.gmra.mxu0 %v2926
      %v3011 = vpop.f32.mrf.mxu0
      %v3012 = vadd.f32 0.0, %v3011
      %v3013 = vpop.f32.mrf.mxu0
      %v3014 = vadd.f32 0.0, %v3013
      %3015 = vmatmul.bf16.gmra.mxu0 %v2929
      %v3016 = vpop.f32.mrf.mxu0
      %v3017 = vadd.f32 0.0, %v3016
      %v3018 = vpop.f32.mrf.mxu0
      %v3019 = vadd.f32 0.0, %v3018
      %3020 = vmatmul.bf16.gmra.mxu0 %v2932
      %v3021 = vpop.f32.mrf.mxu0
      %v3022 = vadd.f32 0.0, %v3021
      %v3023 = vpop.f32.mrf.mxu0
      %v3024 = vadd.f32 0.0, %v3023
      %3025 = vdwg.mxu0
      %v3027 = vsel %vm2077, %v2835, 0
      %3029 = vmatpush.bf16.msra.mxu0 0
      %3030 = vmatpush.bf16.msra.mxu0 0
      %3031 = vmatpush.bf16.msra.mxu0 0
      %3032 = vmatpush.bf16.msra.mxu0 0
      %3033 = vmatpush.bf16.msra.mxu0 0
      %3034 = vmatpush.bf16.msra.mxu0 0
      %3035 = vmatpush.bf16.msra.mxu0 0
      %3036 = vmatpush.bf16.msra.mxu0 %v3027
      %3037 = vmatmul.bf16.gmra.mxu0 %v2030
      %v3038 = vpop.f32.mrf.mxu0
      %v3039 = vadd.f32 %v2947, %v3038
      %v3040 = vpop.f32.mrf.mxu0
      %v3041 = vadd.f32 %v2949, %v3040
      %3042 = vmatmul.bf16.gmra.mxu0 %v2033
      %v3043 = vpop.f32.mrf.mxu0
      %v3044 = vadd.f32 %v2952, %v3043
      %v3045 = vpop.f32.mrf.mxu0
      %v3046 = vadd.f32 %v2954, %v3045
      %3047 = vmatmul.bf16.gmra.mxu0 %v2036
      %v3048 = vpop.f32.mrf.mxu0
      %v3049 = vadd.f32 %v2957, %v3048
      %v3050 = vpop.f32.mrf.mxu0
      %v3051 = vadd.f32 %v2959, %v3050
      %3052 = vmatmul.bf16.gmra.mxu0 %v2039
      %v3053 = vpop.f32.mrf.mxu0
      %v3054 = vadd.f32 %v2962, %v3053
      %v3055 = vpop.f32.mrf.mxu0
      %v3056 = vadd.f32 %v2964, %v3055
      %3057 = vmatmul.bf16.gmra.mxu0 %v2042
      %v3058 = vpop.f32.mrf.mxu0
      %v3059 = vadd.f32 %v2967, %v3058
      %v3060 = vpop.f32.mrf.mxu0
      %v3061 = vadd.f32 %v2969, %v3060
      %3062 = vmatmul.bf16.gmra.mxu0 %v2045
      %v3063 = vpop.f32.mrf.mxu0
      %v3064 = vadd.f32 %v2972, %v3063
      %v3065 = vpop.f32.mrf.mxu0
      %v3066 = vadd.f32 %v2974, %v3065
      %3067 = vmatmul.bf16.gmra.mxu0 %v2048
      %v3068 = vpop.f32.mrf.mxu0
      %v3069 = vadd.f32 %v2977, %v3068
      %v3070 = vpop.f32.mrf.mxu0
      %v3071 = vadd.f32 %v2979, %v3070
      %3072 = vmatmul.bf16.gmra.mxu0 %v2051
      %v3073 = vpop.f32.mrf.mxu0
      %v3074 = vadd.f32 %v2982, %v3073
      %v3075 = vpop.f32.mrf.mxu0
      %v3076 = vadd.f32 %v2984, %v3075
      %3077 = vmatmul.bf16.gmra.mxu0 %v2054
      %v3078 = vpop.f32.mrf.mxu0
      %v3079 = vadd.f32 %v2987, %v3078
      %v3080 = vpop.f32.mrf.mxu0
      %v3081 = vadd.f32 %v2989, %v3080
      %3082 = vmatmul.bf16.gmra.mxu0 %v2057
      %v3083 = vpop.f32.mrf.mxu0
      %v3084 = vadd.f32 %v2992, %v3083
      %v3085 = vpop.f32.mrf.mxu0
      %v3086 = vadd.f32 %v2994, %v3085
      %3087 = vmatmul.bf16.gmra.mxu0 %v2060
      %v3088 = vpop.f32.mrf.mxu0
      %v3089 = vadd.f32 %v2997, %v3088
      %v3090 = vpop.f32.mrf.mxu0
      %v3091 = vadd.f32 %v2999, %v3090
      %3092 = vmatmul.bf16.gmra.mxu0 %v2063
      %v3093 = vpop.f32.mrf.mxu0
      %v3094 = vadd.f32 %v3002, %v3093
      %v3095 = vpop.f32.mrf.mxu0
      %v3096 = vadd.f32 %v3004, %v3095
      %3097 = vmatmul.bf16.gmra.mxu0 %v2066
      %v3098 = vpop.f32.mrf.mxu0
      %v3099 = vadd.f32 %v3007, %v3098
      %v3100 = vpop.f32.mrf.mxu0
      %v3101 = vadd.f32 %v3009, %v3100
      %3102 = vmatmul.bf16.gmra.mxu0 %v2069
      %v3103 = vpop.f32.mrf.mxu0
      %v3104 = vadd.f32 %v3012, %v3103
      %v3105 = vpop.f32.mrf.mxu0
      %v3106 = vadd.f32 %v3014, %v3105
      %3107 = vmatmul.bf16.gmra.mxu0 %v2072
      %v3108 = vpop.f32.mrf.mxu0
      %v3109 = vadd.f32 %v3017, %v3108
      %v3110 = vpop.f32.mrf.mxu0
      %v3111 = vadd.f32 %v3019, %v3110
      %3112 = vmatmul.bf16.gmra.mxu0 %v2075
      %v3113 = vpop.f32.mrf.mxu0
      %v3114 = vadd.f32 %v3022, %v3113
      %v3115 = vpop.f32.mrf.mxu0
      %v3116 = vadd.f32 %v3024, %v3115
      %3117 = vdwg.mxu0
      %s3118 = scalar_lea.vmem %s1, 12
      %v3119 = vld [vmem:[%s3118] sm:$0x3]
      %v3121 = vsel %vm2077, %v3119, 0
      %3123 = vmatpush.bf16.msra.mxu0 0
      %3124 = vmatpush.bf16.msra.mxu0 0
      %3125 = vmatpush.bf16.msra.mxu0 0
      %3126 = vmatpush.bf16.msra.mxu0 0
      %3127 = vmatpush.bf16.msra.mxu0 0
      %3128 = vmatpush.bf16.msra.mxu0 0
      %3129 = vmatpush.bf16.msra.mxu0 0
      %3130 = vmatpush.bf16.msra.mxu0 %v3121
      %3131 = vmatmul.bf16.gmra.mxu0 %v2663
      %v3132 = vpop.f32.mrf.mxu0
      %v3133 = vadd.f32 0.0, %v3132
      %v3134 = vpop.f32.mrf.mxu0
      %v3135 = vadd.f32 0.0, %v3134
      %3136 = vmatmul.bf16.gmra.mxu0 %v2666
      %v3137 = vpop.f32.mrf.mxu0
      %v3138 = vadd.f32 0.0, %v3137
      %v3139 = vpop.f32.mrf.mxu0
      %v3140 = vadd.f32 0.0, %v3139
      %3141 = vmatmul.bf16.gmra.mxu0 %v2669
      %v3142 = vpop.f32.mrf.mxu0
      %v3143 = vadd.f32 0.0, %v3142
      %v3144 = vpop.f32.mrf.mxu0
      %v3145 = vadd.f32 0.0, %v3144
      %3146 = vmatmul.bf16.gmra.mxu0 %v2672
      %v3147 = vpop.f32.mrf.mxu0
      %v3148 = vadd.f32 0.0, %v3147
      %v3149 = vpop.f32.mrf.mxu0
      %v3150 = vadd.f32 0.0, %v3149
      %3151 = vmatmul.bf16.gmra.mxu0 %v2675
      %v3152 = vpop.f32.mrf.mxu0
      %v3153 = vadd.f32 0.0, %v3152
      %v3154 = vpop.f32.mrf.mxu0
      %v3155 = vadd.f32 0.0, %v3154
      %3156 = vmatmul.bf16.gmra.mxu0 %v2678
      %v3157 = vpop.f32.mrf.mxu0
      %v3158 = vadd.f32 0.0, %v3157
      %v3159 = vpop.f32.mrf.mxu0
      %v3160 = vadd.f32 0.0, %v3159
      %3161 = vmatmul.bf16.gmra.mxu0 %v2681
      %v3162 = vpop.f32.mrf.mxu0
      %v3163 = vadd.f32 0.0, %v3162
      %v3164 = vpop.f32.mrf.mxu0
      %v3165 = vadd.f32 0.0, %v3164
      %3166 = vmatmul.bf16.gmra.mxu0 %v2684
      %v3167 = vpop.f32.mrf.mxu0
      %v3168 = vadd.f32 0.0, %v3167
      %v3169 = vpop.f32.mrf.mxu0
      %v3170 = vadd.f32 0.0, %v3169
      %3171 = vmatmul.bf16.gmra.mxu0 %v2687
      %v3172 = vpop.f32.mrf.mxu0
      %v3173 = vadd.f32 0.0, %v3172
      %v3174 = vpop.f32.mrf.mxu0
      %v3175 = vadd.f32 0.0, %v3174
      %3176 = vmatmul.bf16.gmra.mxu0 %v2690
      %v3177 = vpop.f32.mrf.mxu0
      %v3178 = vadd.f32 0.0, %v3177
      %v3179 = vpop.f32.mrf.mxu0
      %v3180 = vadd.f32 0.0, %v3179
      %3181 = vmatmul.bf16.gmra.mxu0 %v2693
      %v3182 = vpop.f32.mrf.mxu0
      %v3183 = vadd.f32 0.0, %v3182
      %v3184 = vpop.f32.mrf.mxu0
      %v3185 = vadd.f32 0.0, %v3184
      %3186 = vmatmul.bf16.gmra.mxu0 %v2696
      %v3187 = vpop.f32.mrf.mxu0
      %v3188 = vadd.f32 0.0, %v3187
      %v3189 = vpop.f32.mrf.mxu0
      %v3190 = vadd.f32 0.0, %v3189
      %3191 = vmatmul.bf16.gmra.mxu0 %v2699
      %v3192 = vpop.f32.mrf.mxu0
      %v3193 = vadd.f32 0.0, %v3192
      %v3194 = vpop.f32.mrf.mxu0
      %v3195 = vadd.f32 0.0, %v3194
      %3196 = vmatmul.bf16.gmra.mxu0 %v2702
      %v3197 = vpop.f32.mrf.mxu0
      %v3198 = vadd.f32 0.0, %v3197
      %v3199 = vpop.f32.mrf.mxu0
      %v3200 = vadd.f32 0.0, %v3199
      %3201 = vmatmul.bf16.gmra.mxu0 %v2705
      %v3202 = vpop.f32.mrf.mxu0
      %v3203 = vadd.f32 0.0, %v3202
      %v3204 = vpop.f32.mrf.mxu0
      %v3205 = vadd.f32 0.0, %v3204
      %3206 = vmatmul.bf16.gmra.mxu0 %v2708
      %v3207 = vpop.f32.mrf.mxu0
      %v3208 = vadd.f32 0.0, %v3207
      %v3209 = vpop.f32.mrf.mxu0
      %v3210 = vadd.f32 0.0, %v3209
      %3211 = vdwg.mxu0
      %v3212 = vadd.f32 %v3039, %v3133
      %v3213 = vadd.f32 %v3041, %v3135
      %v3214 = vadd.f32 %v3044, %v3138
      %v3215 = vadd.f32 %v3046, %v3140
      %v3216 = vadd.f32 %v3049, %v3143
      %v3217 = vadd.f32 %v3051, %v3145
      %v3218 = vadd.f32 %v3054, %v3148
      %v3219 = vadd.f32 %v3056, %v3150
      %v3220 = vadd.f32 %v3059, %v3153
      %v3221 = vadd.f32 %v3061, %v3155
      %v3222 = vadd.f32 %v3064, %v3158
      %v3223 = vadd.f32 %v3066, %v3160
      %v3224 = vadd.f32 %v3069, %v3163
      %v3225 = vadd.f32 %v3071, %v3165
      %v3226 = vadd.f32 %v3074, %v3168
      %v3227 = vadd.f32 %v3076, %v3170
      %v3228 = vadd.f32 %v3079, %v3173
      %v3229 = vadd.f32 %v3081, %v3175
      %v3230 = vadd.f32 %v3084, %v3178
      %v3231 = vadd.f32 %v3086, %v3180
      %v3232 = vadd.f32 %v3089, %v3183
      %v3233 = vadd.f32 %v3091, %v3185
      %v3234 = vadd.f32 %v3094, %v3188
      %v3235 = vadd.f32 %v3096, %v3190
      %v3236 = vadd.f32 %v3099, %v3193
      %v3237 = vadd.f32 %v3101, %v3195
      %v3238 = vadd.f32 %v3104, %v3198
      %v3239 = vadd.f32 %v3106, %v3200
      %v3240 = vadd.f32 %v3109, %v3203
      %v3241 = vadd.f32 %v3111, %v3205
      %v3242 = vadd.f32 %v3114, %v3208
      %v3243 = vadd.f32 %v3116, %v3210
      %s3244 = scalar_lea.vmem %s1, 14
      %v3245 = vld [vmem:[%s3244] sm:$0x3]
      %v3246 = vunpack.c.l.b16 %v1259
      %v3247 = vunpack.c.l.b16 %v1262
      %v3248 = vunpack.c.l.b16 %v1266
      %v3249 = vunpack.c.l.b16 %v1269
      %v3250 = vunpack.c.l.b16 %v1273
      %v3251 = vunpack.c.l.b16 %v1276
      %v3252 = vunpack.c.l.b16 %v1280
      %v3253 = vunpack.c.l.b16 %v1283
      %v3254 = vunpack.c.l.b16 %v1287
      %v3255 = vunpack.c.l.b16 %v1290
      %v3256 = vunpack.c.l.b16 %v1294
      %v3257 = vunpack.c.l.b16 %v1297
      %v3258 = vunpack.c.l.b16 %v1301
      %v3259 = vunpack.c.l.b16 %v1304
      %v3260 = vunpack.c.l.b16 %v1308
      %v3261 = vunpack.c.l.b16 %v1311
      %v3262 = vunpack.c.l.b16 %v1315
      %v3263 = vunpack.c.l.b16 %v1318
      %v3264 = vunpack.c.l.b16 %v1322
      %v3265 = vunpack.c.l.b16 %v1325
      %v3266 = vunpack.c.l.b16 %v1329
      %v3267 = vunpack.c.l.b16 %v1332
      %v3268 = vunpack.c.l.b16 %v1336
      %v3269 = vunpack.c.l.b16 %v1339
      %v3270 = vunpack.c.l.b16 %v1343
      %v3271 = vunpack.c.l.b16 %v1346
      %v3272 = vunpack.c.l.b16 %v1350
      %v3273 = vunpack.c.l.b16 %v1353
      %v3274 = vunpack.c.l.b16 %v1357
      %v3275 = vunpack.c.l.b16 %v1360
      %v3276 = vunpack.c.l.b16 %v1364
      %v3277 = vunpack.c.l.b16 %v1367
      %v3278 = vpack.c.b16 %v3247, %v3246
      %v3279 = vpack.c.b16 %v3249, %v3248
      %v3280 = vpack.c.b16 %v3251, %v3250
      %v3281 = vpack.c.b16 %v3253, %v3252
      %v3282 = vpack.c.b16 %v3255, %v3254
      %v3283 = vpack.c.b16 %v3257, %v3256
      %v3284 = vpack.c.b16 %v3259, %v3258
      %v3285 = vpack.c.b16 %v3261, %v3260
      %v3286 = vpack.c.b16 %v3263, %v3262
      %v3287 = vpack.c.b16 %v3265, %v3264
      %v3288 = vpack.c.b16 %v3267, %v3266
      %v3289 = vpack.c.b16 %v3269, %v3268
      %v3290 = vpack.c.b16 %v3271, %v3270
      %v3291 = vpack.c.b16 %v3273, %v3272
      %v3292 = vpack.c.b16 %v3275, %v3274
      %v3293 = vpack.c.b16 %v3277, %v3276
      %v3295 = vsel %vm2028, %v3278, 0
      %v3298 = vsel %vm2028, %v3279, 0
      %v3301 = vsel %vm2028, %v3280, 0
      %v3304 = vsel %vm2028, %v3281, 0
      %v3307 = vsel %vm2028, %v3282, 0
      %v3310 = vsel %vm2028, %v3283, 0
      %v3313 = vsel %vm2028, %v3284, 0
      %v3316 = vsel %vm2028, %v3285, 0
      %v3319 = vsel %vm2028, %v3286, 0
      %v3322 = vsel %vm2028, %v3287, 0
      %v3325 = vsel %vm2028, %v3288, 0
      %v3328 = vsel %vm2028, %v3289, 0
      %v3331 = vsel %vm2028, %v3290, 0
      %v3334 = vsel %vm2028, %v3291, 0
      %v3337 = vsel %vm2028, %v3292, 0
      %v3340 = vsel %vm2028, %v3293, 0
      %v3343 = vsel %vm2077, %v3245, 0
      %3345 = vmatpush.bf16.msra.mxu0 0
      %3346 = vmatpush.bf16.msra.mxu0 0
      %3347 = vmatpush.bf16.msra.mxu0 0
      %3348 = vmatpush.bf16.msra.mxu0 0
      %3349 = vmatpush.bf16.msra.mxu0 0
      %3350 = vmatpush.bf16.msra.mxu0 0
      %3351 = vmatpush.bf16.msra.mxu0 0
      %3352 = vmatpush.bf16.msra.mxu0 %v3343
      %3353 = vmatmul.bf16.gmra.mxu0 %v3295
      %v3354 = vpop.f32.mrf.mxu0
      %v3355 = vadd.f32 0.0, %v3354
      %v3356 = vpop.f32.mrf.mxu0
      %v3357 = vadd.f32 0.0, %v3356
      %3358 = vmatmul.bf16.gmra.mxu0 %v3298
      %v3359 = vpop.f32.mrf.mxu0
      %v3360 = vadd.f32 0.0, %v3359
      %v3361 = vpop.f32.mrf.mxu0
      %v3362 = vadd.f32 0.0, %v3361
      %3363 = vmatmul.bf16.gmra.mxu0 %v3301
      %v3364 = vpop.f32.mrf.mxu0
      %v3365 = vadd.f32 0.0, %v3364
      %v3366 = vpop.f32.mrf.mxu0
      %v3367 = vadd.f32 0.0, %v3366
      %3368 = vmatmul.bf16.gmra.mxu0 %v3304
      %v3369 = vpop.f32.mrf.mxu0
      %v3370 = vadd.f32 0.0, %v3369
      %v3371 = vpop.f32.mrf.mxu0
      %v3372 = vadd.f32 0.0, %v3371
      %3373 = vmatmul.bf16.gmra.mxu0 %v3307
      %v3374 = vpop.f32.mrf.mxu0
      %v3375 = vadd.f32 0.0, %v3374
      %v3376 = vpop.f32.mrf.mxu0
      %v3377 = vadd.f32 0.0, %v3376
      %3378 = vmatmul.bf16.gmra.mxu0 %v3310
      %v3379 = vpop.f32.mrf.mxu0
      %v3380 = vadd.f32 0.0, %v3379
      %v3381 = vpop.f32.mrf.mxu0
      %v3382 = vadd.f32 0.0, %v3381
      %3383 = vmatmul.bf16.gmra.mxu0 %v3313
      %v3384 = vpop.f32.mrf.mxu0
      %v3385 = vadd.f32 0.0, %v3384
      %v3386 = vpop.f32.mrf.mxu0
      %v3387 = vadd.f32 0.0, %v3386
      %3388 = vmatmul.bf16.gmra.mxu0 %v3316
      %v3389 = vpop.f32.mrf.mxu0
      %v3390 = vadd.f32 0.0, %v3389
      %v3391 = vpop.f32.mrf.mxu0
      %v3392 = vadd.f32 0.0, %v3391
      %3393 = vmatmul.bf16.gmra.mxu0 %v3319
      %v3394 = vpop.f32.mrf.mxu0
      %v3395 = vadd.f32 0.0, %v3394
      %v3396 = vpop.f32.mrf.mxu0
      %v3397 = vadd.f32 0.0, %v3396
      %3398 = vmatmul.bf16.gmra.mxu0 %v3322
      %v3399 = vpop.f32.mrf.mxu0
      %v3400 = vadd.f32 0.0, %v3399
      %v3401 = vpop.f32.mrf.mxu0
      %v3402 = vadd.f32 0.0, %v3401
      %3403 = vmatmul.bf16.gmra.mxu0 %v3325
      %v3404 = vpop.f32.mrf.mxu0
      %v3405 = vadd.f32 0.0, %v3404
      %v3406 = vpop.f32.mrf.mxu0
      %v3407 = vadd.f32 0.0, %v3406
      %3408 = vmatmul.bf16.gmra.mxu0 %v3328
      %v3409 = vpop.f32.mrf.mxu0
      %v3410 = vadd.f32 0.0, %v3409
      %v3411 = vpop.f32.mrf.mxu0
      %v3412 = vadd.f32 0.0, %v3411
      %3413 = vmatmul.bf16.gmra.mxu0 %v3331
      %v3414 = vpop.f32.mrf.mxu0
      %v3415 = vadd.f32 0.0, %v3414
      %v3416 = vpop.f32.mrf.mxu0
      %v3417 = vadd.f32 0.0, %v3416
      %3418 = vmatmul.bf16.gmra.mxu0 %v3334
      %v3419 = vpop.f32.mrf.mxu0
      %v3420 = vadd.f32 0.0, %v3419
      %v3421 = vpop.f32.mrf.mxu0
      %v3422 = vadd.f32 0.0, %v3421
      %3423 = vmatmul.bf16.gmra.mxu0 %v3337
      %v3424 = vpop.f32.mrf.mxu0
      %v3425 = vadd.f32 0.0, %v3424
      %v3426 = vpop.f32.mrf.mxu0
      %v3427 = vadd.f32 0.0, %v3426
      %3428 = vmatmul.bf16.gmra.mxu0 %v3340
      %v3429 = vpop.f32.mrf.mxu0
      %v3430 = vadd.f32 0.0, %v3429
      %v3431 = vpop.f32.mrf.mxu0
      %v3432 = vadd.f32 0.0, %v3431
      %3433 = vdwg.mxu0
      %v3434 = vadd.f32 %v3212, %v3355
      %v3435 = vadd.f32 %v3213, %v3357
      %v3436 = vadd.f32 %v3214, %v3360
      %v3437 = vadd.f32 %v3215, %v3362
      %v3438 = vadd.f32 %v3216, %v3365
      %v3439 = vadd.f32 %v3217, %v3367
      %v3440 = vadd.f32 %v3218, %v3370
      %v3441 = vadd.f32 %v3219, %v3372
      %v3442 = vadd.f32 %v3220, %v3375
      %v3443 = vadd.f32 %v3221, %v3377
      %v3444 = vadd.f32 %v3222, %v3380
      %v3445 = vadd.f32 %v3223, %v3382
      %v3446 = vadd.f32 %v3224, %v3385
      %v3447 = vadd.f32 %v3225, %v3387
      %v3448 = vadd.f32 %v3226, %v3390
      %v3449 = vadd.f32 %v3227, %v3392
      %v3450 = vadd.f32 %v3228, %v3395
      %v3451 = vadd.f32 %v3229, %v3397
      %v3452 = vadd.f32 %v3230, %v3400
      %v3453 = vadd.f32 %v3231, %v3402
      %v3454 = vadd.f32 %v3232, %v3405
      %v3455 = vadd.f32 %v3233, %v3407
      %v3456 = vadd.f32 %v3234, %v3410
      %v3457 = vadd.f32 %v3235, %v3412
      %v3458 = vadd.f32 %v3236, %v3415
      %v3459 = vadd.f32 %v3237, %v3417
      %v3460 = vadd.f32 %v3238, %v3420
      %v3461 = vadd.f32 %v3239, %v3422
      %v3462 = vadd.f32 %v3240, %v3425
      %v3463 = vadd.f32 %v3241, %v3427
      %v3464 = vadd.f32 %v3242, %v3430
      %v3465 = vadd.f32 %v3243, %v3432
      %s3466 = scalar_lea.vmem %s1, 16
      %v3467 = vld [vmem:[%s3466] sm:$0x3]
      %s3468 = scalar_lea.vmem %s1, 18
      %v3469 = vld [vmem:[%s3468] sm:$0x3]
      %v3471 = vsel %vm2077, %v3469, 0
      %3473 = vmatpush.bf16.msra.mxu0 0
      %3474 = vmatpush.bf16.msra.mxu0 0
      %3475 = vmatpush.bf16.msra.mxu0 0
      %3476 = vmatpush.bf16.msra.mxu0 0
      %3477 = vmatpush.bf16.msra.mxu0 0
      %3478 = vmatpush.bf16.msra.mxu0 0
      %3479 = vmatpush.bf16.msra.mxu0 0
      %3480 = vmatpush.bf16.msra.mxu0 %v3471
      %3481 = vmatmul.bf16.gmra.mxu0 %v2663
      %v3482 = vpop.f32.mrf.mxu0
      %v3483 = vadd.f32 0.0, %v3482
      %v3484 = vpop.f32.mrf.mxu0
      %v3485 = vadd.f32 0.0, %v3484
      %3486 = vmatmul.bf16.gmra.mxu0 %v2666
      %v3487 = vpop.f32.mrf.mxu0
      %v3488 = vadd.f32 0.0, %v3487
      %v3489 = vpop.f32.mrf.mxu0
      %v3490 = vadd.f32 0.0, %v3489
      %3491 = vmatmul.bf16.gmra.mxu0 %v2669
      %v3492 = vpop.f32.mrf.mxu0
      %v3493 = vadd.f32 0.0, %v3492
      %v3494 = vpop.f32.mrf.mxu0
      %v3495 = vadd.f32 0.0, %v3494
      %3496 = vmatmul.bf16.gmra.mxu0 %v2672
      %v3497 = vpop.f32.mrf.mxu0
      %v3498 = vadd.f32 0.0, %v3497
      %v3499 = vpop.f32.mrf.mxu0
      %v3500 = vadd.f32 0.0, %v3499
      %3501 = vmatmul.bf16.gmra.mxu0 %v2675
      %v3502 = vpop.f32.mrf.mxu0
      %v3503 = vadd.f32 0.0, %v3502
      %v3504 = vpop.f32.mrf.mxu0
      %v3505 = vadd.f32 0.0, %v3504
      %3506 = vmatmul.bf16.gmra.mxu0 %v2678
      %v3507 = vpop.f32.mrf.mxu0
      %v3508 = vadd.f32 0.0, %v3507
      %v3509 = vpop.f32.mrf.mxu0
      %v3510 = vadd.f32 0.0, %v3509
      %3511 = vmatmul.bf16.gmra.mxu0 %v2681
      %v3512 = vpop.f32.mrf.mxu0
      %v3513 = vadd.f32 0.0, %v3512
      %v3514 = vpop.f32.mrf.mxu0
      %v3515 = vadd.f32 0.0, %v3514
      %3516 = vmatmul.bf16.gmra.mxu0 %v2684
      %v3517 = vpop.f32.mrf.mxu0
      %v3518 = vadd.f32 0.0, %v3517
      %v3519 = vpop.f32.mrf.mxu0
      %v3520 = vadd.f32 0.0, %v3519
      %3521 = vmatmul.bf16.gmra.mxu0 %v2687
      %v3522 = vpop.f32.mrf.mxu0
      %v3523 = vadd.f32 0.0, %v3522
      %v3524 = vpop.f32.mrf.mxu0
      %v3525 = vadd.f32 0.0, %v3524
      %3526 = vmatmul.bf16.gmra.mxu0 %v2690
      %v3527 = vpop.f32.mrf.mxu0
      %v3528 = vadd.f32 0.0, %v3527
      %v3529 = vpop.f32.mrf.mxu0
      %v3530 = vadd.f32 0.0, %v3529
      %3531 = vmatmul.bf16.gmra.mxu0 %v2693
      %v3532 = vpop.f32.mrf.mxu0
      %v3533 = vadd.f32 0.0, %v3532
      %v3534 = vpop.f32.mrf.mxu0
      %v3535 = vadd.f32 0.0, %v3534
      %3536 = vmatmul.bf16.gmra.mxu0 %v2696
      %v3537 = vpop.f32.mrf.mxu0
      %v3538 = vadd.f32 0.0, %v3537
      %v3539 = vpop.f32.mrf.mxu0
      %v3540 = vadd.f32 0.0, %v3539
      %3541 = vmatmul.bf16.gmra.mxu0 %v2699
      %v3542 = vpop.f32.mrf.mxu0
      %v3543 = vadd.f32 0.0, %v3542
      %v3544 = vpop.f32.mrf.mxu0
      %v3545 = vadd.f32 0.0, %v3544
      %3546 = vmatmul.bf16.gmra.mxu0 %v2702
      %v3547 = vpop.f32.mrf.mxu0
      %v3548 = vadd.f32 0.0, %v3547
      %v3549 = vpop.f32.mrf.mxu0
      %v3550 = vadd.f32 0.0, %v3549
      %3551 = vmatmul.bf16.gmra.mxu0 %v2705
      %v3552 = vpop.f32.mrf.mxu0
      %v3553 = vadd.f32 0.0, %v3552
      %v3554 = vpop.f32.mrf.mxu0
      %v3555 = vadd.f32 0.0, %v3554
      %3556 = vmatmul.bf16.gmra.mxu0 %v2708
      %v3557 = vpop.f32.mrf.mxu0
      %v3558 = vadd.f32 0.0, %v3557
      %v3559 = vpop.f32.mrf.mxu0
      %v3560 = vadd.f32 0.0, %v3559
      %3561 = vdwg.mxu0
      %v3563 = vsel %vm2077, %v3467, 0
      %3565 = vmatpush.bf16.msra.mxu0 0
      %3566 = vmatpush.bf16.msra.mxu0 0
      %3567 = vmatpush.bf16.msra.mxu0 0
      %3568 = vmatpush.bf16.msra.mxu0 0
      %3569 = vmatpush.bf16.msra.mxu0 0
      %3570 = vmatpush.bf16.msra.mxu0 0
      %3571 = vmatpush.bf16.msra.mxu0 0
      %3572 = vmatpush.bf16.msra.mxu0 %v3563
      %3573 = vmatmul.bf16.gmra.mxu0 %v2441
      %v3574 = vpop.f32.mrf.mxu0
      %v3575 = vadd.f32 %v3483, %v3574
      %v3576 = vpop.f32.mrf.mxu0
      %v3577 = vadd.f32 %v3485, %v3576
      %3578 = vmatmul.bf16.gmra.mxu0 %v2444
      %v3579 = vpop.f32.mrf.mxu0
      %v3580 = vadd.f32 %v3488, %v3579
      %v3581 = vpop.f32.mrf.mxu0
      %v3582 = vadd.f32 %v3490, %v3581
      %3583 = vmatmul.bf16.gmra.mxu0 %v2447
      %v3584 = vpop.f32.mrf.mxu0
      %v3585 = vadd.f32 %v3493, %v3584
      %v3586 = vpop.f32.mrf.mxu0
      %v3587 = vadd.f32 %v3495, %v3586
      %3588 = vmatmul.bf16.gmra.mxu0 %v2450
      %v3589 = vpop.f32.mrf.mxu0
      %v3590 = vadd.f32 %v3498, %v3589
      %v3591 = vpop.f32.mrf.mxu0
      %v3592 = vadd.f32 %v3500, %v3591
      %3593 = vmatmul.bf16.gmra.mxu0 %v2453
      %v3594 = vpop.f32.mrf.mxu0
      %v3595 = vadd.f32 %v3503, %v3594
      %v3596 = vpop.f32.mrf.mxu0
      %v3597 = vadd.f32 %v3505, %v3596
      %3598 = vmatmul.bf16.gmra.mxu0 %v2456
      %v3599 = vpop.f32.mrf.mxu0
      %v3600 = vadd.f32 %v3508, %v3599
      %v3601 = vpop.f32.mrf.mxu0
      %v3602 = vadd.f32 %v3510, %v3601
      %3603 = vmatmul.bf16.gmra.mxu0 %v2459
      %v3604 = vpop.f32.mrf.mxu0
      %v3605 = vadd.f32 %v3513, %v3604
      %v3606 = vpop.f32.mrf.mxu0
      %v3607 = vadd.f32 %v3515, %v3606
      %3608 = vmatmul.bf16.gmra.mxu0 %v2462
      %v3609 = vpop.f32.mrf.mxu0
      %v3610 = vadd.f32 %v3518, %v3609
      %v3611 = vpop.f32.mrf.mxu0
      %v3612 = vadd.f32 %v3520, %v3611
      %3613 = vmatmul.bf16.gmra.mxu0 %v2465
      %v3614 = vpop.f32.mrf.mxu0
      %v3615 = vadd.f32 %v3523, %v3614
      %v3616 = vpop.f32.mrf.mxu0
      %v3617 = vadd.f32 %v3525, %v3616
      %3618 = vmatmul.bf16.gmra.mxu0 %v2468
      %v3619 = vpop.f32.mrf.mxu0
      %v3620 = vadd.f32 %v3528, %v3619
      %v3621 = vpop.f32.mrf.mxu0
      %v3622 = vadd.f32 %v3530, %v3621
      %3623 = vmatmul.bf16.gmra.mxu0 %v2471
      %v3624 = vpop.f32.mrf.mxu0
      %v3625 = vadd.f32 %v3533, %v3624
      %v3626 = vpop.f32.mrf.mxu0
      %v3627 = vadd.f32 %v3535, %v3626
      %3628 = vmatmul.bf16.gmra.mxu0 %v2474
      %v3629 = vpop.f32.mrf.mxu0
      %v3630 = vadd.f32 %v3538, %v3629
      %v3631 = vpop.f32.mrf.mxu0
      %v3632 = vadd.f32 %v3540, %v3631
      %3633 = vmatmul.bf16.gmra.mxu0 %v2477
      %v3634 = vpop.f32.mrf.mxu0
      %v3635 = vadd.f32 %v3543, %v3634
      %v3636 = vpop.f32.mrf.mxu0
      %v3637 = vadd.f32 %v3545, %v3636
      %3638 = vmatmul.bf16.gmra.mxu0 %v2480
      %v3639 = vpop.f32.mrf.mxu0
      %v3640 = vadd.f32 %v3548, %v3639
      %v3641 = vpop.f32.mrf.mxu0
      %v3642 = vadd.f32 %v3550, %v3641
      %3643 = vmatmul.bf16.gmra.mxu0 %v2483
      %v3644 = vpop.f32.mrf.mxu0
      %v3645 = vadd.f32 %v3553, %v3644
      %v3646 = vpop.f32.mrf.mxu0
      %v3647 = vadd.f32 %v3555, %v3646
      %3648 = vmatmul.bf16.gmra.mxu0 %v2486
      %v3649 = vpop.f32.mrf.mxu0
      %v3650 = vadd.f32 %v3558, %v3649
      %v3651 = vpop.f32.mrf.mxu0
      %v3652 = vadd.f32 %v3560, %v3651
      %3653 = vdwg.mxu0
      %s3654 = scalar_lea.vmem %s1, 20
      %v3655 = vld [vmem:[%s3654] sm:$0x3]
      %v3672 = vunpack.c.l.b16 %v1369
      %v3673 = vunpack.c.l.b16 %v1370
      %v3674 = vunpack.c.l.b16 %v1371
      %v3675 = vunpack.c.l.b16 %v1372
      %v3676 = vunpack.c.l.b16 %v1373
      %v3677 = vunpack.c.l.b16 %v1374
      %v3678 = vunpack.c.l.b16 %v1375
      %v3679 = vunpack.c.l.b16 %v1376
      %v3680 = vunpack.c.l.b16 %v1377
      %v3681 = vunpack.c.l.b16 %v1378
      %v3682 = vunpack.c.l.b16 %v1379
      %v3683 = vunpack.c.l.b16 %v1380
      %v3684 = vunpack.c.l.b16 %v1381
      %v3685 = vunpack.c.l.b16 %v1382
      %v3686 = vunpack.c.l.b16 %v1383
      %v3687 = vunpack.c.l.b16 %v1384
      %v3688 = vunpack.c.l.b16 %v1385
      %v3689 = vunpack.c.l.b16 %v1386
      %v3690 = vunpack.c.l.b16 %v1387
      %v3691 = vunpack.c.l.b16 %v1388
      %v3692 = vunpack.c.l.b16 %v1389
      %v3693 = vunpack.c.l.b16 %v1390
      %v3694 = vunpack.c.l.b16 %v1391
      %v3695 = vunpack.c.l.b16 %v1392
      %v3696 = vunpack.c.l.b16 %v1393
      %v3697 = vunpack.c.l.b16 %v1394
      %v3698 = vunpack.c.l.b16 %v1395
      %v3699 = vunpack.c.l.b16 %v1396
      %v3700 = vunpack.c.l.b16 %v1397
      %v3701 = vunpack.c.l.b16 %v1398
      %v3702 = vunpack.c.l.b16 %v1399
      %v3703 = vunpack.c.l.b16 %v1400
      %v3704 = vpack.c.b16 %v3673, %v3672
      %v3705 = vpack.c.b16 %v3675, %v3674
      %v3706 = vpack.c.b16 %v3677, %v3676
      %v3707 = vpack.c.b16 %v3679, %v3678
      %v3708 = vpack.c.b16 %v3681, %v3680
      %v3709 = vpack.c.b16 %v3683, %v3682
      %v3710 = vpack.c.b16 %v3685, %v3684
      %v3711 = vpack.c.b16 %v3687, %v3686
      %v3712 = vpack.c.b16 %v3689, %v3688
      %v3713 = vpack.c.b16 %v3691, %v3690
      %v3714 = vpack.c.b16 %v3693, %v3692
      %v3715 = vpack.c.b16 %v3695, %v3694
      %v3716 = vpack.c.b16 %v3697, %v3696
      %v3717 = vpack.c.b16 %v3699, %v3698
      %v3718 = vpack.c.b16 %v3701, %v3700
      %v3719 = vpack.c.b16 %v3703, %v3702
      %v3721 = vsel %vm2028, %v3704, 0
      %v3724 = vsel %vm2028, %v3705, 0
      %v3727 = vsel %vm2028, %v3706, 0
      %v3730 = vsel %vm2028, %v3707, 0
      %v3733 = vsel %vm2028, %v3708, 0
      %v3736 = vsel %vm2028, %v3709, 0
      %v3739 = vsel %vm2028, %v3710, 0
      %v3742 = vsel %vm2028, %v3711, 0
      %v3745 = vsel %vm2028, %v3712, 0
      %v3748 = vsel %vm2028, %v3713, 0
      %v3751 = vsel %vm2028, %v3714, 0
      %v3754 = vsel %vm2028, %v3715, 0
      %v3757 = vsel %vm2028, %v3716, 0
      %v3760 = vsel %vm2028, %v3717, 0
      %v3763 = vsel %vm2028, %v3718, 0
      %v3766 = vsel %vm2028, %v3719, 0
      %v3769 = vsel %vm2077, %v3655, 0
      %3771 = vmatpush.bf16.msra.mxu0 0
      %3772 = vmatpush.bf16.msra.mxu0 0
      %3773 = vmatpush.bf16.msra.mxu0 0
      %3774 = vmatpush.bf16.msra.mxu0 0
      %3775 = vmatpush.bf16.msra.mxu0 0
      %3776 = vmatpush.bf16.msra.mxu0 0
      %3777 = vmatpush.bf16.msra.mxu0 0
      %3778 = vmatpush.bf16.msra.mxu0 %v3769
      %3779 = vmatmul.bf16.gmra.mxu0 %v3721
      %v3780 = vpop.f32.mrf.mxu0
      %v3781 = vadd.f32 0.0, %v3780
      %v3782 = vpop.f32.mrf.mxu0
      %v3783 = vadd.f32 0.0, %v3782
      %3784 = vmatmul.bf16.gmra.mxu0 %v3724
      %v3785 = vpop.f32.mrf.mxu0
      %v3786 = vadd.f32 0.0, %v3785
      %v3787 = vpop.f32.mrf.mxu0
      %v3788 = vadd.f32 0.0, %v3787
      %3789 = vmatmul.bf16.gmra.mxu0 %v3727
      %v3790 = vpop.f32.mrf.mxu0
      %v3791 = vadd.f32 0.0, %v3790
      %v3792 = vpop.f32.mrf.mxu0
      %v3793 = vadd.f32 0.0, %v3792
      %3794 = vmatmul.bf16.gmra.mxu0 %v3730
      %v3795 = vpop.f32.mrf.mxu0
      %v3796 = vadd.f32 0.0, %v3795
      %v3797 = vpop.f32.mrf.mxu0
      %v3798 = vadd.f32 0.0, %v3797
      %3799 = vmatmul.bf16.gmra.mxu0 %v3733
      %v3800 = vpop.f32.mrf.mxu0
      %v3801 = vadd.f32 0.0, %v3800
      %v3802 = vpop.f32.mrf.mxu0
      %v3803 = vadd.f32 0.0, %v3802
      %3804 = vmatmul.bf16.gmra.mxu0 %v3736
      %v3805 = vpop.f32.mrf.mxu0
      %v3806 = vadd.f32 0.0, %v3805
      %v3807 = vpop.f32.mrf.mxu0
      %v3808 = vadd.f32 0.0, %v3807
      %3809 = vmatmul.bf16.gmra.mxu0 %v3739
      %v3810 = vpop.f32.mrf.mxu0
      %v3811 = vadd.f32 0.0, %v3810
      %v3812 = vpop.f32.mrf.mxu0
      %v3813 = vadd.f32 0.0, %v3812
      %3814 = vmatmul.bf16.gmra.mxu0 %v3742
      %v3815 = vpop.f32.mrf.mxu0
      %v3816 = vadd.f32 0.0, %v3815
      %v3817 = vpop.f32.mrf.mxu0
      %v3818 = vadd.f32 0.0, %v3817
      %3819 = vmatmul.bf16.gmra.mxu0 %v3745
      %v3820 = vpop.f32.mrf.mxu0
      %v3821 = vadd.f32 0.0, %v3820
      %v3822 = vpop.f32.mrf.mxu0
      %v3823 = vadd.f32 0.0, %v3822
      %3824 = vmatmul.bf16.gmra.mxu0 %v3748
      %v3825 = vpop.f32.mrf.mxu0
      %v3826 = vadd.f32 0.0, %v3825
      %v3827 = vpop.f32.mrf.mxu0
      %v3828 = vadd.f32 0.0, %v3827
      %3829 = vmatmul.bf16.gmra.mxu0 %v3751
      %v3830 = vpop.f32.mrf.mxu0
      %v3831 = vadd.f32 0.0, %v3830
      %v3832 = vpop.f32.mrf.mxu0
      %v3833 = vadd.f32 0.0, %v3832
      %3834 = vmatmul.bf16.gmra.mxu0 %v3754
      %v3835 = vpop.f32.mrf.mxu0
      %v3836 = vadd.f32 0.0, %v3835
      %v3837 = vpop.f32.mrf.mxu0
      %v3838 = vadd.f32 0.0, %v3837
      %3839 = vmatmul.bf16.gmra.mxu0 %v3757
      %v3840 = vpop.f32.mrf.mxu0
      %v3841 = vadd.f32 0.0, %v3840
      %v3842 = vpop.f32.mrf.mxu0
      %v3843 = vadd.f32 0.0, %v3842
      %3844 = vmatmul.bf16.gmra.mxu0 %v3760
      %v3845 = vpop.f32.mrf.mxu0
      %v3846 = vadd.f32 0.0, %v3845
      %v3847 = vpop.f32.mrf.mxu0
      %v3848 = vadd.f32 0.0, %v3847
      %3849 = vmatmul.bf16.gmra.mxu0 %v3763
      %v3850 = vpop.f32.mrf.mxu0
      %v3851 = vadd.f32 0.0, %v3850
      %v3852 = vpop.f32.mrf.mxu0
      %v3853 = vadd.f32 0.0, %v3852
      %3854 = vmatmul.bf16.gmra.mxu0 %v3766
      %v3855 = vpop.f32.mrf.mxu0
      %v3856 = vadd.f32 0.0, %v3855
      %v3857 = vpop.f32.mrf.mxu0
      %v3858 = vadd.f32 0.0, %v3857
      %3859 = vdwg.mxu0
      %v3860 = vadd.f32 %v3575, %v3781
      %v3861 = vadd.f32 %v3577, %v3783
      %v3862 = vadd.f32 %v3580, %v3786
      %v3863 = vadd.f32 %v3582, %v3788
      %v3864 = vadd.f32 %v3585, %v3791
      %v3865 = vadd.f32 %v3587, %v3793
      %v3866 = vadd.f32 %v3590, %v3796
      %v3867 = vadd.f32 %v3592, %v3798
      %v3868 = vadd.f32 %v3595, %v3801
      %v3869 = vadd.f32 %v3597, %v3803
      %v3870 = vadd.f32 %v3600, %v3806
      %v3871 = vadd.f32 %v3602, %v3808
      %v3872 = vadd.f32 %v3605, %v3811
      %v3873 = vadd.f32 %v3607, %v3813
      %v3874 = vadd.f32 %v3610, %v3816
      %v3875 = vadd.f32 %v3612, %v3818
      %v3876 = vadd.f32 %v3615, %v3821
      %v3877 = vadd.f32 %v3617, %v3823
      %v3878 = vadd.f32 %v3620, %v3826
      %v3879 = vadd.f32 %v3622, %v3828
      %v3880 = vadd.f32 %v3625, %v3831
      %v3881 = vadd.f32 %v3627, %v3833
      %v3882 = vadd.f32 %v3630, %v3836
      %v3883 = vadd.f32 %v3632, %v3838
      %v3884 = vadd.f32 %v3635, %v3841
      %v3885 = vadd.f32 %v3637, %v3843
      %v3886 = vadd.f32 %v3640, %v3846
      %v3887 = vadd.f32 %v3642, %v3848
      %v3888 = vadd.f32 %v3645, %v3851
      %v3889 = vadd.f32 %v3647, %v3853
      %v3890 = vadd.f32 %v3650, %v3856
      %v3891 = vadd.f32 %v3652, %v3858
      %s3892 = scalar_lea.vmem %s1, 22
      %v3893 = vld [vmem:[%s3892] sm:$0x3]
      %v3894 = vunpack.c.l.b16 %v1430
      %v3895 = vunpack.c.l.b16 %v1440
      %v3896 = vunpack.c.l.b16 %v1454
      %v3897 = vunpack.c.l.b16 %v1464
      %v3898 = vunpack.c.l.b16 %v1478
      %v3899 = vunpack.c.l.b16 %v1488
      %v3900 = vunpack.c.l.b16 %v1502
      %v3901 = vunpack.c.l.b16 %v1512
      %v3902 = vunpack.c.l.b16 %v1526
      %v3903 = vunpack.c.l.b16 %v1536
      %v3904 = vunpack.c.l.b16 %v1550
      %v3905 = vunpack.c.l.b16 %v1560
      %v3906 = vunpack.c.l.b16 %v1574
      %v3907 = vunpack.c.l.b16 %v1584
      %v3908 = vunpack.c.l.b16 %v1598
      %v3909 = vunpack.c.l.b16 %v1608
      %v3910 = vunpack.c.l.b16 %v1622
      %v3911 = vunpack.c.l.b16 %v1632
      %v3912 = vunpack.c.l.b16 %v1646
      %v3913 = vunpack.c.l.b16 %v1656
      %v3914 = vunpack.c.l.b16 %v1670
      %v3915 = vunpack.c.l.b16 %v1680
      %v3916 = vunpack.c.l.b16 %v1694
      %v3917 = vunpack.c.l.b16 %v1704
      %v3918 = vunpack.c.l.b16 %v1718
      %v3919 = vunpack.c.l.b16 %v1728
      %v3920 = vunpack.c.l.b16 %v1742
      %v3921 = vunpack.c.l.b16 %v1752
      %v3922 = vunpack.c.l.b16 %v1766
      %v3923 = vunpack.c.l.b16 %v1776
      %v3924 = vunpack.c.l.b16 %v1790
      %v3925 = vunpack.c.l.b16 %v1800
      %v3926 = vpack.c.b16 %v3895, %v3894
      %v3927 = vpack.c.b16 %v3897, %v3896
      %v3928 = vpack.c.b16 %v3899, %v3898
      %v3929 = vpack.c.b16 %v3901, %v3900
      %v3930 = vpack.c.b16 %v3903, %v3902
      %v3931 = vpack.c.b16 %v3905, %v3904
      %v3932 = vpack.c.b16 %v3907, %v3906
      %v3933 = vpack.c.b16 %v3909, %v3908
      %v3934 = vpack.c.b16 %v3911, %v3910
      %v3935 = vpack.c.b16 %v3913, %v3912
      %v3936 = vpack.c.b16 %v3915, %v3914
      %v3937 = vpack.c.b16 %v3917, %v3916
      %v3938 = vpack.c.b16 %v3919, %v3918
      %v3939 = vpack.c.b16 %v3921, %v3920
      %v3940 = vpack.c.b16 %v3923, %v3922
      %v3941 = vpack.c.b16 %v3925, %v3924
      %v3943 = vsel %vm2028, %v3926, 0
      %v3946 = vsel %vm2028, %v3927, 0
      %v3949 = vsel %vm2028, %v3928, 0
      %v3952 = vsel %vm2028, %v3929, 0
      %v3955 = vsel %vm2028, %v3930, 0
      %v3958 = vsel %vm2028, %v3931, 0
      %v3961 = vsel %vm2028, %v3932, 0
      %v3964 = vsel %vm2028, %v3933, 0
      %v3967 = vsel %vm2028, %v3934, 0
      %v3970 = vsel %vm2028, %v3935, 0
      %v3973 = vsel %vm2028, %v3936, 0
      %v3976 = vsel %vm2028, %v3937, 0
      %v3979 = vsel %vm2028, %v3938, 0
      %v3982 = vsel %vm2028, %v3939, 0
      %v3985 = vsel %vm2028, %v3940, 0
      %v3988 = vsel %vm2028, %v3941, 0
      %v3991 = vsel %vm2077, %v3893, 0
      %3993 = vmatpush.bf16.msra.mxu0 0
      %3994 = vmatpush.bf16.msra.mxu0 0
      %3995 = vmatpush.bf16.msra.mxu0 0
      %3996 = vmatpush.bf16.msra.mxu0 0
      %3997 = vmatpush.bf16.msra.mxu0 0
      %3998 = vmatpush.bf16.msra.mxu0 0
      %3999 = vmatpush.bf16.msra.mxu0 0
      %4000 = vmatpush.bf16.msra.mxu0 %v3991
      %4001 = vmatmul.bf16.gmra.mxu0 %v3943
      %v4002 = vpop.f32.mrf.mxu0
      %v4003 = vadd.f32 0.0, %v4002
      %v4004 = vpop.f32.mrf.mxu0
      %v4005 = vadd.f32 0.0, %v4004
      %4006 = vmatmul.bf16.gmra.mxu0 %v3946
      %v4007 = vpop.f32.mrf.mxu0
      %v4008 = vadd.f32 0.0, %v4007
      %v4009 = vpop.f32.mrf.mxu0
      %v4010 = vadd.f32 0.0, %v4009
      %4011 = vmatmul.bf16.gmra.mxu0 %v3949
      %v4012 = vpop.f32.mrf.mxu0
      %v4013 = vadd.f32 0.0, %v4012
      %v4014 = vpop.f32.mrf.mxu0
      %v4015 = vadd.f32 0.0, %v4014
      %4016 = vmatmul.bf16.gmra.mxu0 %v3952
      %v4017 = vpop.f32.mrf.mxu0
      %v4018 = vadd.f32 0.0, %v4017
      %v4019 = vpop.f32.mrf.mxu0
      %v4020 = vadd.f32 0.0, %v4019
      %4021 = vmatmul.bf16.gmra.mxu0 %v3955
      %v4022 = vpop.f32.mrf.mxu0
      %v4023 = vadd.f32 0.0, %v4022
      %v4024 = vpop.f32.mrf.mxu0
      %v4025 = vadd.f32 0.0, %v4024
      %4026 = vmatmul.bf16.gmra.mxu0 %v3958
      %v4027 = vpop.f32.mrf.mxu0
      %v4028 = vadd.f32 0.0, %v4027
      %v4029 = vpop.f32.mrf.mxu0
      %v4030 = vadd.f32 0.0, %v4029
      %4031 = vmatmul.bf16.gmra.mxu0 %v3961
      %v4032 = vpop.f32.mrf.mxu0
      %v4033 = vadd.f32 0.0, %v4032
      %v4034 = vpop.f32.mrf.mxu0
      %v4035 = vadd.f32 0.0, %v4034
      %4036 = vmatmul.bf16.gmra.mxu0 %v3964
      %v4037 = vpop.f32.mrf.mxu0
      %v4038 = vadd.f32 0.0, %v4037
      %v4039 = vpop.f32.mrf.mxu0
      %v4040 = vadd.f32 0.0, %v4039
      %4041 = vmatmul.bf16.gmra.mxu0 %v3967
      %v4042 = vpop.f32.mrf.mxu0
      %v4043 = vadd.f32 0.0, %v4042
      %v4044 = vpop.f32.mrf.mxu0
      %v4045 = vadd.f32 0.0, %v4044
      %4046 = vmatmul.bf16.gmra.mxu0 %v3970
      %v4047 = vpop.f32.mrf.mxu0
      %v4048 = vadd.f32 0.0, %v4047
      %v4049 = vpop.f32.mrf.mxu0
      %v4050 = vadd.f32 0.0, %v4049
      %4051 = vmatmul.bf16.gmra.mxu0 %v3973
      %v4052 = vpop.f32.mrf.mxu0
      %v4053 = vadd.f32 0.0, %v4052
      %v4054 = vpop.f32.mrf.mxu0
      %v4055 = vadd.f32 0.0, %v4054
      %4056 = vmatmul.bf16.gmra.mxu0 %v3976
      %v4057 = vpop.f32.mrf.mxu0
      %v4058 = vadd.f32 0.0, %v4057
      %v4059 = vpop.f32.mrf.mxu0
      %v4060 = vadd.f32 0.0, %v4059
      %4061 = vmatmul.bf16.gmra.mxu0 %v3979
      %v4062 = vpop.f32.mrf.mxu0
      %v4063 = vadd.f32 0.0, %v4062
      %v4064 = vpop.f32.mrf.mxu0
      %v4065 = vadd.f32 0.0, %v4064
      %4066 = vmatmul.bf16.gmra.mxu0 %v3982
      %v4067 = vpop.f32.mrf.mxu0
      %v4068 = vadd.f32 0.0, %v4067
      %v4069 = vpop.f32.mrf.mxu0
      %v4070 = vadd.f32 0.0, %v4069
      %4071 = vmatmul.bf16.gmra.mxu0 %v3985
      %v4072 = vpop.f32.mrf.mxu0
      %v4073 = vadd.f32 0.0, %v4072
      %v4074 = vpop.f32.mrf.mxu0
      %v4075 = vadd.f32 0.0, %v4074
      %4076 = vmatmul.bf16.gmra.mxu0 %v3988
      %v4077 = vpop.f32.mrf.mxu0
      %v4078 = vadd.f32 0.0, %v4077
      %v4079 = vpop.f32.mrf.mxu0
      %v4080 = vadd.f32 0.0, %v4079
      %4081 = vdwg.mxu0
      %v4082 = vadd.f32 %v3860, %v4003
      %v4083 = vadd.f32 %v3861, %v4005
      %v4084 = vadd.f32 %v3862, %v4008
      %v4085 = vadd.f32 %v3863, %v4010
      %v4086 = vadd.f32 %v3864, %v4013
      %v4087 = vadd.f32 %v3865, %v4015
      %v4088 = vadd.f32 %v3866, %v4018
      %v4089 = vadd.f32 %v3867, %v4020
      %v4090 = vadd.f32 %v3868, %v4023
      %v4091 = vadd.f32 %v3869, %v4025
      %v4092 = vadd.f32 %v3870, %v4028
      %v4093 = vadd.f32 %v3871, %v4030
      %v4094 = vadd.f32 %v3872, %v4033
      %v4095 = vadd.f32 %v3873, %v4035
      %v4096 = vadd.f32 %v3874, %v4038
      %v4097 = vadd.f32 %v3875, %v4040
      %v4098 = vadd.f32 %v3876, %v4043
      %v4099 = vadd.f32 %v3877, %v4045
      %v4100 = vadd.f32 %v3878, %v4048
      %v4101 = vadd.f32 %v3879, %v4050
      %v4102 = vadd.f32 %v3880, %v4053
      %v4103 = vadd.f32 %v3881, %v4055
      %v4104 = vadd.f32 %v3882, %v4058
      %v4105 = vadd.f32 %v3883, %v4060
      %v4106 = vadd.f32 %v3884, %v4063
      %v4107 = vadd.f32 %v3885, %v4065
      %v4108 = vadd.f32 %v3886, %v4068
      %v4109 = vadd.f32 %v3887, %v4070
      %v4110 = vadd.f32 %v3888, %v4073
      %v4111 = vadd.f32 %v3889, %v4075
      %v4112 = vadd.f32 %v3890, %v4078
      %v4113 = vadd.f32 %v3891, %v4080
      %s4114 = scalar_lea.vmem %s1, 24
      %v4115 = vld [vmem:[%s4114] sm:$0x3]
      %s4116 = scalar_lea.vmem %s1, 26
      %v4117 = vld [vmem:[%s4116] sm:$0x3]
      %v4119 = vsel %vm2077, %v4117, 0
      %4121 = vmatpush.bf16.msra.mxu0 0
      %4122 = vmatpush.bf16.msra.mxu0 0
      %4123 = vmatpush.bf16.msra.mxu0 0
      %4124 = vmatpush.bf16.msra.mxu0 0
      %4125 = vmatpush.bf16.msra.mxu0 0
      %4126 = vmatpush.bf16.msra.mxu0 0
      %4127 = vmatpush.bf16.msra.mxu0 0
      %4128 = vmatpush.bf16.msra.mxu0 %v4119
      %4129 = vmatmul.bf16.gmra.mxu0 %v3295
      %v4130 = vpop.f32.mrf.mxu0
      %v4131 = vadd.f32 0.0, %v4130
      %v4132 = vpop.f32.mrf.mxu0
      %v4133 = vadd.f32 0.0, %v4132
      %4134 = vmatmul.bf16.gmra.mxu0 %v3298
      %v4135 = vpop.f32.mrf.mxu0
      %v4136 = vadd.f32 0.0, %v4135
      %v4137 = vpop.f32.mrf.mxu0
      %v4138 = vadd.f32 0.0, %v4137
      %4139 = vmatmul.bf16.gmra.mxu0 %v3301
      %v4140 = vpop.f32.mrf.mxu0
      %v4141 = vadd.f32 0.0, %v4140
      %v4142 = vpop.f32.mrf.mxu0
      %v4143 = vadd.f32 0.0, %v4142
      %4144 = vmatmul.bf16.gmra.mxu0 %v3304
      %v4145 = vpop.f32.mrf.mxu0
      %v4146 = vadd.f32 0.0, %v4145
      %v4147 = vpop.f32.mrf.mxu0
      %v4148 = vadd.f32 0.0, %v4147
      %4149 = vmatmul.bf16.gmra.mxu0 %v3307
      %v4150 = vpop.f32.mrf.mxu0
      %v4151 = vadd.f32 0.0, %v4150
      %v4152 = vpop.f32.mrf.mxu0
      %v4153 = vadd.f32 0.0, %v4152
      %4154 = vmatmul.bf16.gmra.mxu0 %v3310
      %v4155 = vpop.f32.mrf.mxu0
      %v4156 = vadd.f32 0.0, %v4155
      %v4157 = vpop.f32.mrf.mxu0
      %v4158 = vadd.f32 0.0, %v4157
      %4159 = vmatmul.bf16.gmra.mxu0 %v3313
      %v4160 = vpop.f32.mrf.mxu0
      %v4161 = vadd.f32 0.0, %v4160
      %v4162 = vpop.f32.mrf.mxu0
      %v4163 = vadd.f32 0.0, %v4162
      %4164 = vmatmul.bf16.gmra.mxu0 %v3316
      %v4165 = vpop.f32.mrf.mxu0
      %v4166 = vadd.f32 0.0, %v4165
      %v4167 = vpop.f32.mrf.mxu0
      %v4168 = vadd.f32 0.0, %v4167
      %4169 = vmatmul.bf16.gmra.mxu0 %v3319
      %v4170 = vpop.f32.mrf.mxu0
      %v4171 = vadd.f32 0.0, %v4170
      %v4172 = vpop.f32.mrf.mxu0
      %v4173 = vadd.f32 0.0, %v4172
      %4174 = vmatmul.bf16.gmra.mxu0 %v3322
      %v4175 = vpop.f32.mrf.mxu0
      %v4176 = vadd.f32 0.0, %v4175
      %v4177 = vpop.f32.mrf.mxu0
      %v4178 = vadd.f32 0.0, %v4177
      %4179 = vmatmul.bf16.gmra.mxu0 %v3325
      %v4180 = vpop.f32.mrf.mxu0
      %v4181 = vadd.f32 0.0, %v4180
      %v4182 = vpop.f32.mrf.mxu0
      %v4183 = vadd.f32 0.0, %v4182
      %4184 = vmatmul.bf16.gmra.mxu0 %v3328
      %v4185 = vpop.f32.mrf.mxu0
      %v4186 = vadd.f32 0.0, %v4185
      %v4187 = vpop.f32.mrf.mxu0
      %v4188 = vadd.f32 0.0, %v4187
      %4189 = vmatmul.bf16.gmra.mxu0 %v3331
      %v4190 = vpop.f32.mrf.mxu0
      %v4191 = vadd.f32 0.0, %v4190
      %v4192 = vpop.f32.mrf.mxu0
      %v4193 = vadd.f32 0.0, %v4192
      %4194 = vmatmul.bf16.gmra.mxu0 %v3334
      %v4195 = vpop.f32.mrf.mxu0
      %v4196 = vadd.f32 0.0, %v4195
      %v4197 = vpop.f32.mrf.mxu0
      %v4198 = vadd.f32 0.0, %v4197
      %4199 = vmatmul.bf16.gmra.mxu0 %v3337
      %v4200 = vpop.f32.mrf.mxu0
      %v4201 = vadd.f32 0.0, %v4200
      %v4202 = vpop.f32.mrf.mxu0
      %v4203 = vadd.f32 0.0, %v4202
      %4204 = vmatmul.bf16.gmra.mxu0 %v3340
      %v4205 = vpop.f32.mrf.mxu0
      %v4206 = vadd.f32 0.0, %v4205
      %v4207 = vpop.f32.mrf.mxu0
      %v4208 = vadd.f32 0.0, %v4207
      %4209 = vdwg.mxu0
      %v4211 = vsel %vm2077, %v4115, 0
      %4213 = vmatpush.bf16.msra.mxu0 0
      %4214 = vmatpush.bf16.msra.mxu0 0
      %4215 = vmatpush.bf16.msra.mxu0 0
      %4216 = vmatpush.bf16.msra.mxu0 0
      %4217 = vmatpush.bf16.msra.mxu0 0
      %4218 = vmatpush.bf16.msra.mxu0 0
      %4219 = vmatpush.bf16.msra.mxu0 0
      %4220 = vmatpush.bf16.msra.mxu0 %v4211
      %4221 = vmatmul.bf16.gmra.mxu0 %v2663
      %v4222 = vpop.f32.mrf.mxu0
      %v4223 = vadd.f32 %v4131, %v4222
      %v4224 = vpop.f32.mrf.mxu0
      %v4225 = vadd.f32 %v4133, %v4224
      %4226 = vmatmul.bf16.gmra.mxu0 %v2666
      %v4227 = vpop.f32.mrf.mxu0
      %v4228 = vadd.f32 %v4136, %v4227
      %v4229 = vpop.f32.mrf.mxu0
      %v4230 = vadd.f32 %v4138, %v4229
      %4231 = vmatmul.bf16.gmra.mxu0 %v2669
      %v4232 = vpop.f32.mrf.mxu0
      %v4233 = vadd.f32 %v4141, %v4232
      %v4234 = vpop.f32.mrf.mxu0
      %v4235 = vadd.f32 %v4143, %v4234
      %4236 = vmatmul.bf16.gmra.mxu0 %v2672
      %v4237 = vpop.f32.mrf.mxu0
      %v4238 = vadd.f32 %v4146, %v4237
      %v4239 = vpop.f32.mrf.mxu0
      %v4240 = vadd.f32 %v4148, %v4239
      %4241 = vmatmul.bf16.gmra.mxu0 %v2675
      %v4242 = vpop.f32.mrf.mxu0
      %v4243 = vadd.f32 %v4151, %v4242
      %v4244 = vpop.f32.mrf.mxu0
      %v4245 = vadd.f32 %v4153, %v4244
      %4246 = vmatmul.bf16.gmra.mxu0 %v2678
      %v4247 = vpop.f32.mrf.mxu0
      %v4248 = vadd.f32 %v4156, %v4247
      %v4249 = vpop.f32.mrf.mxu0
      %v4250 = vadd.f32 %v4158, %v4249
      %4251 = vmatmul.bf16.gmra.mxu0 %v2681
      %v4252 = vpop.f32.mrf.mxu0
      %v4253 = vadd.f32 %v4161, %v4252
      %v4254 = vpop.f32.mrf.mxu0
      %v4255 = vadd.f32 %v4163, %v4254
      %4256 = vmatmul.bf16.gmra.mxu0 %v2684
      %v4257 = vpop.f32.mrf.mxu0
      %v4258 = vadd.f32 %v4166, %v4257
      %v4259 = vpop.f32.mrf.mxu0
      %v4260 = vadd.f32 %v4168, %v4259
      %4261 = vmatmul.bf16.gmra.mxu0 %v2687
      %v4262 = vpop.f32.mrf.mxu0
      %v4263 = vadd.f32 %v4171, %v4262
      %v4264 = vpop.f32.mrf.mxu0
      %v4265 = vadd.f32 %v4173, %v4264
      %4266 = vmatmul.bf16.gmra.mxu0 %v2690
      %v4267 = vpop.f32.mrf.mxu0
      %v4268 = vadd.f32 %v4176, %v4267
      %v4269 = vpop.f32.mrf.mxu0
      %v4270 = vadd.f32 %v4178, %v4269
      %4271 = vmatmul.bf16.gmra.mxu0 %v2693
      %v4272 = vpop.f32.mrf.mxu0
      %v4273 = vadd.f32 %v4181, %v4272
      %v4274 = vpop.f32.mrf.mxu0
      %v4275 = vadd.f32 %v4183, %v4274
      %4276 = vmatmul.bf16.gmra.mxu0 %v2696
      %v4277 = vpop.f32.mrf.mxu0
      %v4278 = vadd.f32 %v4186, %v4277
      %v4279 = vpop.f32.mrf.mxu0
      %v4280 = vadd.f32 %v4188, %v4279
      %4281 = vmatmul.bf16.gmra.mxu0 %v2699
      %v4282 = vpop.f32.mrf.mxu0
      %v4283 = vadd.f32 %v4191, %v4282
      %v4284 = vpop.f32.mrf.mxu0
      %v4285 = vadd.f32 %v4193, %v4284
      %4286 = vmatmul.bf16.gmra.mxu0 %v2702
      %v4287 = vpop.f32.mrf.mxu0
      %v4288 = vadd.f32 %v4196, %v4287
      %v4289 = vpop.f32.mrf.mxu0
      %v4290 = vadd.f32 %v4198, %v4289
      %4291 = vmatmul.bf16.gmra.mxu0 %v2705
      %v4292 = vpop.f32.mrf.mxu0
      %v4293 = vadd.f32 %v4201, %v4292
      %v4294 = vpop.f32.mrf.mxu0
      %v4295 = vadd.f32 %v4203, %v4294
      %4296 = vmatmul.bf16.gmra.mxu0 %v2708
      %v4297 = vpop.f32.mrf.mxu0
      %v4298 = vadd.f32 %v4206, %v4297
      %v4299 = vpop.f32.mrf.mxu0
      %v4300 = vadd.f32 %v4208, %v4299
      %4301 = vdwg.mxu0
      %s4302 = scalar_lea.vmem %s1, 28
      %v4303 = vld [vmem:[%s4302] sm:$0x3]
      %v4305 = vsel %vm2077, %v4303, 0
      %4307 = vmatpush.bf16.msra.mxu0 0
      %4308 = vmatpush.bf16.msra.mxu0 0
      %4309 = vmatpush.bf16.msra.mxu0 0
      %4310 = vmatpush.bf16.msra.mxu0 0
      %4311 = vmatpush.bf16.msra.mxu0 0
      %4312 = vmatpush.bf16.msra.mxu0 0
      %4313 = vmatpush.bf16.msra.mxu0 0
      %4314 = vmatpush.bf16.msra.mxu0 %v4305
      %4315 = vmatmul.bf16.gmra.mxu0 %v3943
      %v4316 = vpop.f32.mrf.mxu0
      %v4317 = vadd.f32 0.0, %v4316
      %v4318 = vpop.f32.mrf.mxu0
      %v4319 = vadd.f32 0.0, %v4318
      %4320 = vmatmul.bf16.gmra.mxu0 %v3946
      %v4321 = vpop.f32.mrf.mxu0
      %v4322 = vadd.f32 0.0, %v4321
      %v4323 = vpop.f32.mrf.mxu0
      %v4324 = vadd.f32 0.0, %v4323
      %4325 = vmatmul.bf16.gmra.mxu0 %v3949
      %v4326 = vpop.f32.mrf.mxu0
      %v4327 = vadd.f32 0.0, %v4326
      %v4328 = vpop.f32.mrf.mxu0
      %v4329 = vadd.f32 0.0, %v4328
      %4330 = vmatmul.bf16.gmra.mxu0 %v3952
      %v4331 = vpop.f32.mrf.mxu0
      %v4332 = vadd.f32 0.0, %v4331
      %v4333 = vpop.f32.mrf.mxu0
      %v4334 = vadd.f32 0.0, %v4333
      %4335 = vmatmul.bf16.gmra.mxu0 %v3955
      %v4336 = vpop.f32.mrf.mxu0
      %v4337 = vadd.f32 0.0, %v4336
      %v4338 = vpop.f32.mrf.mxu0
      %v4339 = vadd.f32 0.0, %v4338
      %4340 = vmatmul.bf16.gmra.mxu0 %v3958
      %v4341 = vpop.f32.mrf.mxu0
      %v4342 = vadd.f32 0.0, %v4341
      %v4343 = vpop.f32.mrf.mxu0
      %v4344 = vadd.f32 0.0, %v4343
      %4345 = vmatmul.bf16.gmra.mxu0 %v3961
      %v4346 = vpop.f32.mrf.mxu0
      %v4347 = vadd.f32 0.0, %v4346
      %v4348 = vpop.f32.mrf.mxu0
      %v4349 = vadd.f32 0.0, %v4348
      %4350 = vmatmul.bf16.gmra.mxu0 %v3964
      %v4351 = vpop.f32.mrf.mxu0
      %v4352 = vadd.f32 0.0, %v4351
      %v4353 = vpop.f32.mrf.mxu0
      %v4354 = vadd.f32 0.0, %v4353
      %4355 = vmatmul.bf16.gmra.mxu0 %v3967
      %v4356 = vpop.f32.mrf.mxu0
      %v4357 = vadd.f32 0.0, %v4356
      %v4358 = vpop.f32.mrf.mxu0
      %v4359 = vadd.f32 0.0, %v4358
      %4360 = vmatmul.bf16.gmra.mxu0 %v3970
      %v4361 = vpop.f32.mrf.mxu0
      %v4362 = vadd.f32 0.0, %v4361
      %v4363 = vpop.f32.mrf.mxu0
      %v4364 = vadd.f32 0.0, %v4363
      %4365 = vmatmul.bf16.gmra.mxu0 %v3973
      %v4366 = vpop.f32.mrf.mxu0
      %v4367 = vadd.f32 0.0, %v4366
      %v4368 = vpop.f32.mrf.mxu0
      %v4369 = vadd.f32 0.0, %v4368
      %4370 = vmatmul.bf16.gmra.mxu0 %v3976
      %v4371 = vpop.f32.mrf.mxu0
      %v4372 = vadd.f32 0.0, %v4371
      %v4373 = vpop.f32.mrf.mxu0
      %v4374 = vadd.f32 0.0, %v4373
      %4375 = vmatmul.bf16.gmra.mxu0 %v3979
      %v4376 = vpop.f32.mrf.mxu0
      %v4377 = vadd.f32 0.0, %v4376
      %v4378 = vpop.f32.mrf.mxu0
      %v4379 = vadd.f32 0.0, %v4378
      %4380 = vmatmul.bf16.gmra.mxu0 %v3982
      %v4381 = vpop.f32.mrf.mxu0
      %v4382 = vadd.f32 0.0, %v4381
      %v4383 = vpop.f32.mrf.mxu0
      %v4384 = vadd.f32 0.0, %v4383
      %4385 = vmatmul.bf16.gmra.mxu0 %v3985
      %v4386 = vpop.f32.mrf.mxu0
      %v4387 = vadd.f32 0.0, %v4386
      %v4388 = vpop.f32.mrf.mxu0
      %v4389 = vadd.f32 0.0, %v4388
      %4390 = vmatmul.bf16.gmra.mxu0 %v3988
      %v4391 = vpop.f32.mrf.mxu0
      %v4392 = vadd.f32 0.0, %v4391
      %v4393 = vpop.f32.mrf.mxu0
      %v4394 = vadd.f32 0.0, %v4393
      %4395 = vdwg.mxu0
      %v4396 = vadd.f32 %v4223, %v4317
      %v4397 = vadd.f32 %v4225, %v4319
      %v4398 = vadd.f32 %v4228, %v4322
      %v4399 = vadd.f32 %v4230, %v4324
      %v4400 = vadd.f32 %v4233, %v4327
      %v4401 = vadd.f32 %v4235, %v4329
      %v4402 = vadd.f32 %v4238, %v4332
      %v4403 = vadd.f32 %v4240, %v4334
      %v4404 = vadd.f32 %v4243, %v4337
      %v4405 = vadd.f32 %v4245, %v4339
      %v4406 = vadd.f32 %v4248, %v4342
      %v4407 = vadd.f32 %v4250, %v4344
      %v4408 = vadd.f32 %v4253, %v4347
      %v4409 = vadd.f32 %v4255, %v4349
      %v4410 = vadd.f32 %v4258, %v4352
      %v4411 = vadd.f32 %v4260, %v4354
      %v4412 = vadd.f32 %v4263, %v4357
      %v4413 = vadd.f32 %v4265, %v4359
      %v4414 = vadd.f32 %v4268, %v4362
      %v4415 = vadd.f32 %v4270, %v4364
      %v4416 = vadd.f32 %v4273, %v4367
      %v4417 = vadd.f32 %v4275, %v4369
      %v4418 = vadd.f32 %v4278, %v4372
      %v4419 = vadd.f32 %v4280, %v4374
      %v4420 = vadd.f32 %v4283, %v4377
      %v4421 = vadd.f32 %v4285, %v4379
      %v4422 = vadd.f32 %v4288, %v4382
      %v4423 = vadd.f32 %v4290, %v4384
      %v4424 = vadd.f32 %v4293, %v4387
      %v4425 = vadd.f32 %v4295, %v4389
      %v4426 = vadd.f32 %v4298, %v4392
      %v4427 = vadd.f32 %v4300, %v4394
      %s4428 = scalar_lea.vmem %s1, 30
      %v4429 = vld [vmem:[%s4428] sm:$0x3]
      %v4430 = vunpack.c.l.b16 %v1868
      %v4431 = vunpack.c.l.b16 %v1871
      %v4432 = vunpack.c.l.b16 %v1875
      %v4433 = vunpack.c.l.b16 %v1878
      %v4434 = vunpack.c.l.b16 %v1882
      %v4435 = vunpack.c.l.b16 %v1885
      %v4436 = vunpack.c.l.b16 %v1889
      %v4437 = vunpack.c.l.b16 %v1892
      %v4438 = vunpack.c.l.b16 %v1896
      %v4439 = vunpack.c.l.b16 %v1899
      %v4440 = vunpack.c.l.b16 %v1903
      %v4441 = vunpack.c.l.b16 %v1906
      %v4442 = vunpack.c.l.b16 %v1910
      %v4443 = vunpack.c.l.b16 %v1913
      %v4444 = vunpack.c.l.b16 %v1917
      %v4445 = vunpack.c.l.b16 %v1920
      %v4446 = vunpack.c.l.b16 %v1924
      %v4447 = vunpack.c.l.b16 %v1927
      %v4448 = vunpack.c.l.b16 %v1931
      %v4449 = vunpack.c.l.b16 %v1934
      %v4450 = vunpack.c.l.b16 %v1938
      %v4451 = vunpack.c.l.b16 %v1941
      %v4452 = vunpack.c.l.b16 %v1945
      %v4453 = vunpack.c.l.b16 %v1948
      %v4454 = vunpack.c.l.b16 %v1952
      %v4455 = vunpack.c.l.b16 %v1955
      %v4456 = vunpack.c.l.b16 %v1959
      %v4457 = vunpack.c.l.b16 %v1962
      %v4458 = vunpack.c.l.b16 %v1966
      %v4459 = vunpack.c.l.b16 %v1969
      %v4460 = vunpack.c.l.b16 %v1973
      %v4461 = vunpack.c.l.b16 %v1976
      %v4462 = vpack.c.b16 %v4431, %v4430
      %v4463 = vpack.c.b16 %v4433, %v4432
      %v4464 = vpack.c.b16 %v4435, %v4434
      %v4465 = vpack.c.b16 %v4437, %v4436
      %v4466 = vpack.c.b16 %v4439, %v4438
      %v4467 = vpack.c.b16 %v4441, %v4440
      %v4468 = vpack.c.b16 %v4443, %v4442
      %v4469 = vpack.c.b16 %v4445, %v4444
      %v4470 = vpack.c.b16 %v4447, %v4446
      %v4471 = vpack.c.b16 %v4449, %v4448
      %v4472 = vpack.c.b16 %v4451, %v4450
      %v4473 = vpack.c.b16 %v4453, %v4452
      %v4474 = vpack.c.b16 %v4455, %v4454
      %v4475 = vpack.c.b16 %v4457, %v4456
      %v4476 = vpack.c.b16 %v4459, %v4458
      %v4477 = vpack.c.b16 %v4461, %v4460
      %v4479 = vsel %vm2028, %v4462, 0
      %v4482 = vsel %vm2028, %v4463, 0
      %v4485 = vsel %vm2028, %v4464, 0
      %v4488 = vsel %vm2028, %v4465, 0
      %v4491 = vsel %vm2028, %v4466, 0
      %v4494 = vsel %vm2028, %v4467, 0
      %v4497 = vsel %vm2028, %v4468, 0
      %v4500 = vsel %vm2028, %v4469, 0
      %v4503 = vsel %vm2028, %v4470, 0
      %v4506 = vsel %vm2028, %v4471, 0
      %v4509 = vsel %vm2028, %v4472, 0
      %v4512 = vsel %vm2028, %v4473, 0
      %v4515 = vsel %vm2028, %v4474, 0
      %v4518 = vsel %vm2028, %v4475, 0
      %v4521 = vsel %vm2028, %v4476, 0
      %v4524 = vsel %vm2028, %v4477, 0
      %v4527 = vsel %vm2077, %v4429, 0
      %4529 = vmatpush.bf16.msra.mxu0 0
      %4530 = vmatpush.bf16.msra.mxu0 0
      %4531 = vmatpush.bf16.msra.mxu0 0
      %4532 = vmatpush.bf16.msra.mxu0 0
      %4533 = vmatpush.bf16.msra.mxu0 0
      %4534 = vmatpush.bf16.msra.mxu0 0
      %4535 = vmatpush.bf16.msra.mxu0 0
      %4536 = vmatpush.bf16.msra.mxu0 %v4527
      %4537 = vmatmul.bf16.gmra.mxu0 %v4479
      %v4538 = vpop.f32.mrf.mxu0
      %v4539 = vadd.f32 0.0, %v4538
      %v4540 = vpop.f32.mrf.mxu0
      %v4541 = vadd.f32 0.0, %v4540
      %4542 = vmatmul.bf16.gmra.mxu0 %v4482
      %v4543 = vpop.f32.mrf.mxu0
      %v4544 = vadd.f32 0.0, %v4543
      %v4545 = vpop.f32.mrf.mxu0
      %v4546 = vadd.f32 0.0, %v4545
      %4547 = vmatmul.bf16.gmra.mxu0 %v4485
      %v4548 = vpop.f32.mrf.mxu0
      %v4549 = vadd.f32 0.0, %v4548
      %v4550 = vpop.f32.mrf.mxu0
      %v4551 = vadd.f32 0.0, %v4550
      %4552 = vmatmul.bf16.gmra.mxu0 %v4488
      %v4553 = vpop.f32.mrf.mxu0
      %v4554 = vadd.f32 0.0, %v4553
      %v4555 = vpop.f32.mrf.mxu0
      %v4556 = vadd.f32 0.0, %v4555
      %4557 = vmatmul.bf16.gmra.mxu0 %v4491
      %v4558 = vpop.f32.mrf.mxu0
      %v4559 = vadd.f32 0.0, %v4558
      %v4560 = vpop.f32.mrf.mxu0
      %v4561 = vadd.f32 0.0, %v4560
      %4562 = vmatmul.bf16.gmra.mxu0 %v4494
      %v4563 = vpop.f32.mrf.mxu0
      %v4564 = vadd.f32 0.0, %v4563
      %v4565 = vpop.f32.mrf.mxu0
      %v4566 = vadd.f32 0.0, %v4565
      %4567 = vmatmul.bf16.gmra.mxu0 %v4497
      %v4568 = vpop.f32.mrf.mxu0
      %v4569 = vadd.f32 0.0, %v4568
      %v4570 = vpop.f32.mrf.mxu0
      %v4571 = vadd.f32 0.0, %v4570
      %4572 = vmatmul.bf16.gmra.mxu0 %v4500
      %v4573 = vpop.f32.mrf.mxu0
      %v4574 = vadd.f32 0.0, %v4573
      %v4575 = vpop.f32.mrf.mxu0
      %v4576 = vadd.f32 0.0, %v4575
      %4577 = vmatmul.bf16.gmra.mxu0 %v4503
      %v4578 = vpop.f32.mrf.mxu0
      %v4579 = vadd.f32 0.0, %v4578
      %v4580 = vpop.f32.mrf.mxu0
      %v4581 = vadd.f32 0.0, %v4580
      %4582 = vmatmul.bf16.gmra.mxu0 %v4506
      %v4583 = vpop.f32.mrf.mxu0
      %v4584 = vadd.f32 0.0, %v4583
      %v4585 = vpop.f32.mrf.mxu0
      %v4586 = vadd.f32 0.0, %v4585
      %4587 = vmatmul.bf16.gmra.mxu0 %v4509
      %v4588 = vpop.f32.mrf.mxu0
      %v4589 = vadd.f32 0.0, %v4588
      %v4590 = vpop.f32.mrf.mxu0
      %v4591 = vadd.f32 0.0, %v4590
      %4592 = vmatmul.bf16.gmra.mxu0 %v4512
      %v4593 = vpop.f32.mrf.mxu0
      %v4594 = vadd.f32 0.0, %v4593
      %v4595 = vpop.f32.mrf.mxu0
      %v4596 = vadd.f32 0.0, %v4595
      %4597 = vmatmul.bf16.gmra.mxu0 %v4515
      %v4598 = vpop.f32.mrf.mxu0
      %v4599 = vadd.f32 0.0, %v4598
      %v4600 = vpop.f32.mrf.mxu0
      %v4601 = vadd.f32 0.0, %v4600
      %4602 = vmatmul.bf16.gmra.mxu0 %v4518
      %v4603 = vpop.f32.mrf.mxu0
      %v4604 = vadd.f32 0.0, %v4603
      %v4605 = vpop.f32.mrf.mxu0
      %v4606 = vadd.f32 0.0, %v4605
      %4607 = vmatmul.bf16.gmra.mxu0 %v4521
      %v4608 = vpop.f32.mrf.mxu0
      %v4609 = vadd.f32 0.0, %v4608
      %v4610 = vpop.f32.mrf.mxu0
      %v4611 = vadd.f32 0.0, %v4610
      %4612 = vmatmul.bf16.gmra.mxu0 %v4524
      %v4613 = vpop.f32.mrf.mxu0
      %v4614 = vadd.f32 0.0, %v4613
      %v4615 = vpop.f32.mrf.mxu0
      %v4616 = vadd.f32 0.0, %v4615
      %4617 = vdwg.mxu0
      %v4618 = vadd.f32 %v4396, %v4539
      %v4619 = vadd.f32 %v4397, %v4541
      %v4620 = vadd.f32 %v4398, %v4544
      %v4621 = vadd.f32 %v4399, %v4546
      %v4622 = vadd.f32 %v4400, %v4549
      %v4623 = vadd.f32 %v4401, %v4551
      %v4624 = vadd.f32 %v4402, %v4554
      %v4625 = vadd.f32 %v4403, %v4556
      %v4626 = vadd.f32 %v4404, %v4559
      %v4627 = vadd.f32 %v4405, %v4561
      %v4628 = vadd.f32 %v4406, %v4564
      %v4629 = vadd.f32 %v4407, %v4566
      %v4630 = vadd.f32 %v4408, %v4569
      %v4631 = vadd.f32 %v4409, %v4571
      %v4632 = vadd.f32 %v4410, %v4574
      %v4633 = vadd.f32 %v4411, %v4576
      %v4634 = vadd.f32 %v4412, %v4579
      %v4635 = vadd.f32 %v4413, %v4581
      %v4636 = vadd.f32 %v4414, %v4584
      %v4637 = vadd.f32 %v4415, %v4586
      %v4638 = vadd.f32 %v4416, %v4589
      %v4639 = vadd.f32 %v4417, %v4591
      %v4640 = vadd.f32 %v4418, %v4594
      %v4641 = vadd.f32 %v4419, %v4596
      %v4642 = vadd.f32 %v4420, %v4599
      %v4643 = vadd.f32 %v4421, %v4601
      %v4644 = vadd.f32 %v4422, %v4604
      %v4645 = vadd.f32 %v4423, %v4606
      %v4646 = vadd.f32 %v4424, %v4609
      %v4647 = vadd.f32 %v4425, %v4611
      %v4648 = vadd.f32 %v4426, %v4614
      %v4649 = vadd.f32 %v4427, %v4616
      %v4650 = vadd.f32 %v2802, %v2803
      %v4651 = vadd.f32 %v4650, %v2804
      %v4652 = vadd.f32 %v4651, %v2805
      %v4653 = vadd.f32 %v4652, %v2806
      %v4654 = vadd.f32 %v4653, %v2807
      %v4655 = vadd.f32 %v4654, %v2808
      %v4656 = vadd.f32 %v4655, %v2809
      %v4657 = vadd.f32 %v4656, %v2810
      %v4658 = vadd.f32 %v4657, %v2811
      %v4659 = vadd.f32 %v4658, %v2812
      %v4660 = vadd.f32 %v4659, %v2813
      %v4661 = vadd.f32 %v4660, %v2814
      %v4662 = vadd.f32 %v4661, %v2815
      %v4663 = vadd.f32 %v4662, %v2816
      %v4664 = vadd.f32 %v4663, %v2817
      %v4665 = vadd.f32 %v4664, %v2818
      %v4666 = vadd.f32 %v4665, %v2819
      %v4667 = vadd.f32 %v4666, %v2820
      %v4668 = vadd.f32 %v4667, %v2821
      %v4669 = vadd.f32 %v4668, %v2822
      %v4670 = vadd.f32 %v4669, %v2823
      %v4671 = vadd.f32 %v4670, %v2824
      %v4672 = vadd.f32 %v4671, %v2825
      %v4673 = vadd.f32 %v4672, %v2826
      %v4674 = vadd.f32 %v4673, %v2827
      %v4675 = vadd.f32 %v4674, %v2828
      %v4676 = vadd.f32 %v4675, %v2829
      %v4677 = vadd.f32 %v4676, %v2830
      %v4678 = vadd.f32 %v4677, %v2831
      %v4679 = vadd.f32 %v4678, %v2832
      %v4680 = vadd.f32 %v4679, %v2833
      %v4681 = vrot.slane %v4680, 4
      %v4682 = vadd.f32 %v4680, %v4681
      %v4683 = vrot.slane %v4682, 2
      %v4684 = vadd.f32 %v4682, %v4683
      %v4685 = vrot.slane %v4684, 1
      %v4686 = vadd.f32 %v4684, %v4685
      %v4687 = vmul.f32 %v2802, %v2802
      %v4688 = vmul.f32 %v2803, %v2803
      %v4689 = vmul.f32 %v2804, %v2804
      %v4690 = vmul.f32 %v2805, %v2805
      %v4691 = vmul.f32 %v2806, %v2806
      %v4692 = vmul.f32 %v2807, %v2807
      %v4693 = vmul.f32 %v2808, %v2808
      %v4694 = vmul.f32 %v2809, %v2809
      %v4695 = vmul.f32 %v2810, %v2810
      %v4696 = vmul.f32 %v2811, %v2811
      %v4697 = vmul.f32 %v2812, %v2812
      %v4698 = vmul.f32 %v2813, %v2813
      %v4699 = vmul.f32 %v2814, %v2814
      %v4700 = vmul.f32 %v2815, %v2815
      %v4701 = vmul.f32 %v2816, %v2816
      %v4702 = vmul.f32 %v2817, %v2817
      %v4703 = vmul.f32 %v2818, %v2818
      %v4704 = vmul.f32 %v2819, %v2819
      %v4705 = vmul.f32 %v2820, %v2820
      %v4706 = vmul.f32 %v2821, %v2821
      %v4707 = vmul.f32 %v2822, %v2822
      %v4708 = vmul.f32 %v2823, %v2823
      %v4709 = vmul.f32 %v2824, %v2824
      %v4710 = vmul.f32 %v2825, %v2825
      %v4711 = vmul.f32 %v2826, %v2826
      %v4712 = vmul.f32 %v2827, %v2827
      %v4713 = vmul.f32 %v2828, %v2828
      %v4714 = vmul.f32 %v2829, %v2829
      %v4715 = vmul.f32 %v2830, %v2830
      %v4716 = vmul.f32 %v2831, %v2831
      %v4717 = vmul.f32 %v2832, %v2832
      %v4718 = vmul.f32 %v2833, %v2833
      %v4719 = vadd.f32 %v4687, %v4688
      %v4720 = vadd.f32 %v4719, %v4689
      %v4721 = vadd.f32 %v4720, %v4690
      %v4722 = vadd.f32 %v4721, %v4691
      %v4723 = vadd.f32 %v4722, %v4692
      %v4724 = vadd.f32 %v4723, %v4693
      %v4725 = vadd.f32 %v4724, %v4694
      %v4726 = vadd.f32 %v4725, %v4695
      %v4727 = vadd.f32 %v4726, %v4696
      %v4728 = vadd.f32 %v4727, %v4697
      %v4729 = vadd.f32 %v4728, %v4698
      %v4730 = vadd.f32 %v4729, %v4699
      %v4731 = vadd.f32 %v4730, %v4700
      %v4732 = vadd.f32 %v4731, %v4701
      %v4733 = vadd.f32 %v4732, %v4702
      %v4734 = vadd.f32 %v4733, %v4703
      %v4735 = vadd.f32 %v4734, %v4704
      %v4736 = vadd.f32 %v4735, %v4705
      %v4737 = vadd.f32 %v4736, %v4706
      %v4738 = vadd.f32 %v4737, %v4707
      %v4739 = vadd.f32 %v4738, %v4708
      %v4740 = vadd.f32 %v4739, %v4709
      %v4741 = vadd.f32 %v4740, %v4710
      %v4742 = vadd.f32 %v4741, %v4711
      %v4743 = vadd.f32 %v4742, %v4712
      %v4744 = vadd.f32 %v4743, %v4713
      %v4745 = vadd.f32 %v4744, %v4714
      %v4746 = vadd.f32 %v4745, %v4715
      %v4747 = vadd.f32 %v4746, %v4716
      %v4748 = vadd.f32 %v4747, %v4717
      %v4749 = vadd.f32 %v4748, %v4718
      %v4750 = vrot.slane %v4749, 4
      %v4751 = vadd.f32 %v4749, %v4750
      %v4752 = vrot.slane %v4751, 2
      %v4753 = vadd.f32 %v4751, %v4752
      %v4754 = vrot.slane %v4753, 1
      %v4755 = vadd.f32 %v4753, %v4754
      %v4756 = vadd.f32 %v3434, %v3435
      %v4757 = vadd.f32 %v4756, %v3436
      %v4758 = vadd.f32 %v4757, %v3437
      %v4759 = vadd.f32 %v4758, %v3438
      %v4760 = vadd.f32 %v4759, %v3439
      %v4761 = vadd.f32 %v4760, %v3440
      %v4762 = vadd.f32 %v4761, %v3441
      %v4763 = vadd.f32 %v4762, %v3442
      %v4764 = vadd.f32 %v4763, %v3443
      %v4765 = vadd.f32 %v4764, %v3444
      %v4766 = vadd.f32 %v4765, %v3445
      %v4767 = vadd.f32 %v4766, %v3446
      %v4768 = vadd.f32 %v4767, %v3447
      %v4769 = vadd.f32 %v4768, %v3448
      %v4770 = vadd.f32 %v4769, %v3449
      %v4771 = vadd.f32 %v4770, %v3450
      %v4772 = vadd.f32 %v4771, %v3451
      %v4773 = vadd.f32 %v4772, %v3452
      %v4774 = vadd.f32 %v4773, %v3453
      %v4775 = vadd.f32 %v4774, %v3454
      %v4776 = vadd.f32 %v4775, %v3455
      %v4777 = vadd.f32 %v4776, %v3456
      %v4778 = vadd.f32 %v4777, %v3457
      %v4779 = vadd.f32 %v4778, %v3458
      %v4780 = vadd.f32 %v4779, %v3459
      %v4781 = vadd.f32 %v4780, %v3460
      %v4782 = vadd.f32 %v4781, %v3461
      %v4783 = vadd.f32 %v4782, %v3462
      %v4784 = vadd.f32 %v4783, %v3463
      %v4785 = vadd.f32 %v4784, %v3464
      %v4786 = vadd.f32 %v4785, %v3465
      %v4787 = vrot.slane %v4786, 4
      %v4788 = vadd.f32 %v4786, %v4787
      %v4789 = vrot.slane %v4788, 2
      %v4790 = vadd.f32 %v4788, %v4789
      %v4791 = vrot.slane %v4790, 1
      %v4792 = vadd.f32 %v4790, %v4791
      %v4793 = vadd.f32 %v4686, %v4792
      %v4794 = vmul.f32 %v3434, %v3434
      %v4795 = vmul.f32 %v3435, %v3435
      %v4796 = vmul.f32 %v3436, %v3436
      %v4797 = vmul.f32 %v3437, %v3437
      %v4798 = vmul.f32 %v3438, %v3438
      %v4799 = vmul.f32 %v3439, %v3439
      %v4800 = vmul.f32 %v3440, %v3440
      %v4801 = vmul.f32 %v3441, %v3441
      %v4802 = vmul.f32 %v3442, %v3442
      %v4803 = vmul.f32 %v3443, %v3443
      %v4804 = vmul.f32 %v3444, %v3444
      %v4805 = vmul.f32 %v3445, %v3445
      %v4806 = vmul.f32 %v3446, %v3446
      %v4807 = vmul.f32 %v3447, %v3447
      %v4808 = vmul.f32 %v3448, %v3448
      %v4809 = vmul.f32 %v3449, %v3449
      %v4810 = vmul.f32 %v3450, %v3450
      %v4811 = vmul.f32 %v3451, %v3451
      %v4812 = vmul.f32 %v3452, %v3452
      %v4813 = vmul.f32 %v3453, %v3453
      %v4814 = vmul.f32 %v3454, %v3454
      %v4815 = vmul.f32 %v3455, %v3455
      %v4816 = vmul.f32 %v3456, %v3456
      %v4817 = vmul.f32 %v3457, %v3457
      %v4818 = vmul.f32 %v3458, %v3458
      %v4819 = vmul.f32 %v3459, %v3459
      %v4820 = vmul.f32 %v3460, %v3460
      %v4821 = vmul.f32 %v3461, %v3461
      %v4822 = vmul.f32 %v3462, %v3462
      %v4823 = vmul.f32 %v3463, %v3463
      %v4824 = vmul.f32 %v3464, %v3464
      %v4825 = vmul.f32 %v3465, %v3465
      %v4826 = vadd.f32 %v4794, %v4795
      %v4827 = vadd.f32 %v4826, %v4796
      %v4828 = vadd.f32 %v4827, %v4797
      %v4829 = vadd.f32 %v4828, %v4798
      %v4830 = vadd.f32 %v4829, %v4799
      %v4831 = vadd.f32 %v4830, %v4800
      %v4832 = vadd.f32 %v4831, %v4801
      %v4833 = vadd.f32 %v4832, %v4802
      %v4834 = vadd.f32 %v4833, %v4803
      %v4835 = vadd.f32 %v4834, %v4804
      %v4836 = vadd.f32 %v4835, %v4805
      %v4837 = vadd.f32 %v4836, %v4806
      %v4838 = vadd.f32 %v4837, %v4807
      %v4839 = vadd.f32 %v4838, %v4808
      %v4840 = vadd.f32 %v4839, %v4809
      %v4841 = vadd.f32 %v4840, %v4810
      %v4842 = vadd.f32 %v4841, %v4811
      %v4843 = vadd.f32 %v4842, %v4812
      %v4844 = vadd.f32 %v4843, %v4813
      %v4845 = vadd.f32 %v4844, %v4814
      %v4846 = vadd.f32 %v4845, %v4815
      %v4847 = vadd.f32 %v4846, %v4816
      %v4848 = vadd.f32 %v4847, %v4817
      %v4849 = vadd.f32 %v4848, %v4818
      %v4850 = vadd.f32 %v4849, %v4819
      %v4851 = vadd.f32 %v4850, %v4820
      %v4852 = vadd.f32 %v4851, %v4821
      %v4853 = vadd.f32 %v4852, %v4822
      %v4854 = vadd.f32 %v4853, %v4823
      %v4855 = vadd.f32 %v4854, %v4824
      %v4856 = vadd.f32 %v4855, %v4825
      %v4857 = vrot.slane %v4856, 4
      %v4858 = vadd.f32 %v4856, %v4857
      %v4859 = vrot.slane %v4858, 2
      %v4860 = vadd.f32 %v4858, %v4859
      %v4861 = vrot.slane %v4860, 1
      %v4862 = vadd.f32 %v4860, %v4861
      %v4863 = vadd.f32 %v4755, %v4862
      %v4864 = vadd.f32 %v4082, %v4083
      %v4865 = vadd.f32 %v4864, %v4084
      %v4866 = vadd.f32 %v4865, %v4085
      %v4867 = vadd.f32 %v4866, %v4086
      %v4868 = vadd.f32 %v4867, %v4087
      %v4869 = vadd.f32 %v4868, %v4088
      %v4870 = vadd.f32 %v4869, %v4089
      %v4871 = vadd.f32 %v4870, %v4090
      %v4872 = vadd.f32 %v4871, %v4091
      %v4873 = vadd.f32 %v4872, %v4092
      %v4874 = vadd.f32 %v4873, %v4093
      %v4875 = vadd.f32 %v4874, %v4094
      %v4876 = vadd.f32 %v4875, %v4095
      %v4877 = vadd.f32 %v4876, %v4096
      %v4878 = vadd.f32 %v4877, %v4097
      %v4879 = vadd.f32 %v4878, %v4098
      %v4880 = vadd.f32 %v4879, %v4099
      %v4881 = vadd.f32 %v4880, %v4100
      %v4882 = vadd.f32 %v4881, %v4101
      %v4883 = vadd.f32 %v4882, %v4102
      %v4884 = vadd.f32 %v4883, %v4103
      %v4885 = vadd.f32 %v4884, %v4104
      %v4886 = vadd.f32 %v4885, %v4105
      %v4887 = vadd.f32 %v4886, %v4106
      %v4888 = vadd.f32 %v4887, %v4107
      %v4889 = vadd.f32 %v4888, %v4108
      %v4890 = vadd.f32 %v4889, %v4109
      %v4891 = vadd.f32 %v4890, %v4110
      %v4892 = vadd.f32 %v4891, %v4111
      %v4893 = vadd.f32 %v4892, %v4112
      %v4894 = vadd.f32 %v4893, %v4113
      %v4895 = vrot.slane %v4894, 4
      %v4896 = vadd.f32 %v4894, %v4895
      %v4897 = vrot.slane %v4896, 2
      %v4898 = vadd.f32 %v4896, %v4897
      %v4899 = vrot.slane %v4898, 1
      %v4900 = vadd.f32 %v4898, %v4899
      %v4901 = vadd.f32 %v4793, %v4900
      %v4902 = vmul.f32 %v4082, %v4082
      %v4903 = vmul.f32 %v4083, %v4083
      %v4904 = vmul.f32 %v4084, %v4084
      %v4905 = vmul.f32 %v4085, %v4085
      %v4906 = vmul.f32 %v4086, %v4086
      %v4907 = vmul.f32 %v4087, %v4087
      %v4908 = vmul.f32 %v4088, %v4088
      %v4909 = vmul.f32 %v4089, %v4089
      %v4910 = vmul.f32 %v4090, %v4090
      %v4911 = vmul.f32 %v4091, %v4091
      %v4912 = vmul.f32 %v4092, %v4092
      %v4913 = vmul.f32 %v4093, %v4093
      %v4914 = vmul.f32 %v4094, %v4094
      %v4915 = vmul.f32 %v4095, %v4095
      %v4916 = vmul.f32 %v4096, %v4096
      %v4917 = vmul.f32 %v4097, %v4097
      %v4918 = vmul.f32 %v4098, %v4098
      %v4919 = vmul.f32 %v4099, %v4099
      %v4920 = vmul.f32 %v4100, %v4100
      %v4921 = vmul.f32 %v4101, %v4101
      %v4922 = vmul.f32 %v4102, %v4102
      %v4923 = vmul.f32 %v4103, %v4103
      %v4924 = vmul.f32 %v4104, %v4104
      %v4925 = vmul.f32 %v4105, %v4105
      %v4926 = vmul.f32 %v4106, %v4106
      %v4927 = vmul.f32 %v4107, %v4107
      %v4928 = vmul.f32 %v4108, %v4108
      %v4929 = vmul.f32 %v4109, %v4109
      %v4930 = vmul.f32 %v4110, %v4110
      %v4931 = vmul.f32 %v4111, %v4111
      %v4932 = vmul.f32 %v4112, %v4112
      %v4933 = vmul.f32 %v4113, %v4113
      %v4934 = vadd.f32 %v4902, %v4903
      %v4935 = vadd.f32 %v4934, %v4904
      %v4936 = vadd.f32 %v4935, %v4905
      %v4937 = vadd.f32 %v4936, %v4906
      %v4938 = vadd.f32 %v4937, %v4907
      %v4939 = vadd.f32 %v4938, %v4908
      %v4940 = vadd.f32 %v4939, %v4909
      %v4941 = vadd.f32 %v4940, %v4910
      %v4942 = vadd.f32 %v4941, %v4911
      %v4943 = vadd.f32 %v4942, %v4912
      %v4944 = vadd.f32 %v4943, %v4913
      %v4945 = vadd.f32 %v4944, %v4914
      %v4946 = vadd.f32 %v4945, %v4915
      %v4947 = vadd.f32 %v4946, %v4916
      %v4948 = vadd.f32 %v4947, %v4917
      %v4949 = vadd.f32 %v4948, %v4918
      %v4950 = vadd.f32 %v4949, %v4919
      %v4951 = vadd.f32 %v4950, %v4920
      %v4952 = vadd.f32 %v4951, %v4921
      %v4953 = vadd.f32 %v4952, %v4922
      %v4954 = vadd.f32 %v4953, %v4923
      %v4955 = vadd.f32 %v4954, %v4924
      %v4956 = vadd.f32 %v4955, %v4925
      %v4957 = vadd.f32 %v4956, %v4926
      %v4958 = vadd.f32 %v4957, %v4927
      %v4959 = vadd.f32 %v4958, %v4928
      %v4960 = vadd.f32 %v4959, %v4929
      %v4961 = vadd.f32 %v4960, %v4930
      %v4962 = vadd.f32 %v4961, %v4931
      %v4963 = vadd.f32 %v4962, %v4932
      %v4964 = vadd.f32 %v4963, %v4933
      %v4965 = vrot.slane %v4964, 4
      %v4966 = vadd.f32 %v4964, %v4965
      %v4967 = vrot.slane %v4966, 2
      %v4968 = vadd.f32 %v4966, %v4967
      %v4969 = vrot.slane %v4968, 1
      %v4970 = vadd.f32 %v4968, %v4969
      %v4971 = vadd.f32 %v4863, %v4970
      %v4972 = vadd.f32 %v4618, %v4619
      %v4973 = vadd.f32 %v4972, %v4620
      %v4974 = vadd.f32 %v4973, %v4621
      %v4975 = vadd.f32 %v4974, %v4622
      %v4976 = vadd.f32 %v4975, %v4623
      %v4977 = vadd.f32 %v4976, %v4624
      %v4978 = vadd.f32 %v4977, %v4625
      %v4979 = vadd.f32 %v4978, %v4626
      %v4980 = vadd.f32 %v4979, %v4627
      %v4981 = vadd.f32 %v4980, %v4628
      %v4982 = vadd.f32 %v4981, %v4629
      %v4983 = vadd.f32 %v4982, %v4630
      %v4984 = vadd.f32 %v4983, %v4631
      %v4985 = vadd.f32 %v4984, %v4632
      %v4986 = vadd.f32 %v4985, %v4633
      %v4987 = vadd.f32 %v4986, %v4634
      %v4988 = vadd.f32 %v4987, %v4635
      %v4989 = vadd.f32 %v4988, %v4636
      %v4990 = vadd.f32 %v4989, %v4637
      %v4991 = vadd.f32 %v4990, %v4638
      %v4992 = vadd.f32 %v4991, %v4639
      %v4993 = vadd.f32 %v4992, %v4640
      %v4994 = vadd.f32 %v4993, %v4641
      %v4995 = vadd.f32 %v4994, %v4642
      %v4996 = vadd.f32 %v4995, %v4643
      %v4997 = vadd.f32 %v4996, %v4644
      %v4998 = vadd.f32 %v4997, %v4645
      %v4999 = vadd.f32 %v4998, %v4646
      %v5000 = vadd.f32 %v4999, %v4647
      %v5001 = vadd.f32 %v5000, %v4648
      %v5002 = vadd.f32 %v5001, %v4649
      %v5003 = vrot.slane %v5002, 4
      %v5004 = vadd.f32 %v5002, %v5003
      %v5005 = vrot.slane %v5004, 2
      %v5006 = vadd.f32 %v5004, %v5005
      %v5007 = vrot.slane %v5006, 1
      %v5008 = vadd.f32 %v5006, %v5007
      %v5009 = vadd.f32 %v4901, %v5008
      %v5010 = vmul.f32 %v4618, %v4618
      %v5011 = vmul.f32 %v4619, %v4619
      %v5012 = vmul.f32 %v4620, %v4620
      %v5013 = vmul.f32 %v4621, %v4621
      %v5014 = vmul.f32 %v4622, %v4622
      %v5015 = vmul.f32 %v4623, %v4623
      %v5016 = vmul.f32 %v4624, %v4624
      %v5017 = vmul.f32 %v4625, %v4625
      %v5018 = vmul.f32 %v4626, %v4626
      %v5019 = vmul.f32 %v4627, %v4627
      %v5020 = vmul.f32 %v4628, %v4628
      %v5021 = vmul.f32 %v4629, %v4629
      %v5022 = vmul.f32 %v4630, %v4630
      %v5023 = vmul.f32 %v4631, %v4631
      %v5024 = vmul.f32 %v4632, %v4632
      %v5025 = vmul.f32 %v4633, %v4633
      %v5026 = vmul.f32 %v4634, %v4634
      %v5027 = vmul.f32 %v4635, %v4635
      %v5028 = vmul.f32 %v4636, %v4636
      %v5029 = vmul.f32 %v4637, %v4637
      %v5030 = vmul.f32 %v4638, %v4638
      %v5031 = vmul.f32 %v4639, %v4639
      %v5032 = vmul.f32 %v4640, %v4640
      %v5033 = vmul.f32 %v4641, %v4641
      %v5034 = vmul.f32 %v4642, %v4642
      %v5035 = vmul.f32 %v4643, %v4643
      %v5036 = vmul.f32 %v4644, %v4644
      %v5037 = vmul.f32 %v4645, %v4645
      %v5038 = vmul.f32 %v4646, %v4646
      %v5039 = vmul.f32 %v4647, %v4647
      %v5040 = vmul.f32 %v4648, %v4648
      %v5041 = vmul.f32 %v4649, %v4649
      %v5042 = vadd.f32 %v5010, %v5011
      %v5043 = vadd.f32 %v5042, %v5012
      %v5044 = vadd.f32 %v5043, %v5013
      %v5045 = vadd.f32 %v5044, %v5014
      %v5046 = vadd.f32 %v5045, %v5015
      %v5047 = vadd.f32 %v5046, %v5016
      %v5048 = vadd.f32 %v5047, %v5017
      %v5049 = vadd.f32 %v5048, %v5018
      %v5050 = vadd.f32 %v5049, %v5019
      %v5051 = vadd.f32 %v5050, %v5020
      %v5052 = vadd.f32 %v5051, %v5021
      %v5053 = vadd.f32 %v5052, %v5022
      %v5054 = vadd.f32 %v5053, %v5023
      %v5055 = vadd.f32 %v5054, %v5024
      %v5056 = vadd.f32 %v5055, %v5025
      %v5057 = vadd.f32 %v5056, %v5026
      %v5058 = vadd.f32 %v5057, %v5027
      %v5059 = vadd.f32 %v5058, %v5028
      %v5060 = vadd.f32 %v5059, %v5029
      %v5061 = vadd.f32 %v5060, %v5030
      %v5062 = vadd.f32 %v5061, %v5031
      %v5063 = vadd.f32 %v5062, %v5032
      %v5064 = vadd.f32 %v5063, %v5033
      %v5065 = vadd.f32 %v5064, %v5034
      %v5066 = vadd.f32 %v5065, %v5035
      %v5067 = vadd.f32 %v5066, %v5036
      %v5068 = vadd.f32 %v5067, %v5037
      %v5069 = vadd.f32 %v5068, %v5038
      %v5070 = vadd.f32 %v5069, %v5039
      %v5071 = vadd.f32 %v5070, %v5040
      %v5072 = vadd.f32 %v5071, %v5041
      %v5073 = vrot.slane %v5072, 4
      %v5074 = vadd.f32 %v5072, %v5073
      %v5075 = vrot.slane %v5074, 2
      %v5076 = vadd.f32 %v5074, %v5075
      %v5077 = vrot.slane %v5076, 1
      %v5078 = vadd.f32 %v5076, %v5077
      %v5079 = vadd.f32 %v4971, %v5078
      %v5080 = vrcp.pop 1024.0
      %v5081 = vmul.f32 1024.0, %v5080
      %v5082 = vsub.f32 1.0, %v5081
      %v5083 = vmul.f32 %v5080, %v5082
      %v5084 = vadd.f32 %v5080, %v5083
      %vm5085 = vweird.f32 %v5080
      %v5086 = vsel %vm5085, %v5080, %v5084
      %v5087 = vmul.f32 %v5009, %v5086
      %v5088 = vmul.f32 %v5079, %v5086
      %v5089 = vmul.f32 %v5087, %v5087
      %v5090 = vsub.f32 %v5088, %v5089
      %v5091 = vadd.f32 %v5090, 1e-05
      %v5092 = vrsqrt.pop %v5091
      %v5093 = vmul.f32 %v5092, %v5091
      %v5094 = vmul.f32 %v5093, %v5092
      %v5095 = vmul.f32 0.5, %v5094
      %v5096 = vsub.f32 1.5, %v5095
      %v5097 = vmul.f32 %v5092, %v5096
      %vm5098 = vweird.f32 %v5091
      %vm5099 = vweird.f32 %v5092
      %vm5100 = vmor %vm5098, %vm5099
      %v5101 = vsel %vm5100, %v5092, %v5097
      %v5102 = vsub.f32 0.0, %v5087
      %v5103 = vmul.f32 %v5102, %v5101
      %v5104 = vmul.f32 %v2802, %v5101
      %v5105 = vmul.f32 %v2803, %v5101
      %v5106 = vmul.f32 %v2804, %v5101
      %v5107 = vmul.f32 %v2805, %v5101
      %v5108 = vmul.f32 %v2806, %v5101
      %v5109 = vmul.f32 %v2807, %v5101
      %v5110 = vmul.f32 %v2808, %v5101
      %v5111 = vmul.f32 %v2809, %v5101
      %v5112 = vmul.f32 %v2810, %v5101
      %v5113 = vmul.f32 %v2811, %v5101
      %v5114 = vmul.f32 %v2812, %v5101
      %v5115 = vmul.f32 %v2813, %v5101
      %v5116 = vmul.f32 %v2814, %v5101
      %v5117 = vmul.f32 %v2815, %v5101
      %v5118 = vmul.f32 %v2816, %v5101
      %v5119 = vmul.f32 %v2817, %v5101
      %v5120 = vmul.f32 %v2818, %v5101
      %v5121 = vmul.f32 %v2819, %v5101
      %v5122 = vmul.f32 %v2820, %v5101
      %v5123 = vmul.f32 %v2821, %v5101
      %v5124 = vmul.f32 %v2822, %v5101
      %v5125 = vmul.f32 %v2823, %v5101
      %v5126 = vmul.f32 %v2824, %v5101
      %v5127 = vmul.f32 %v2825, %v5101
      %v5128 = vmul.f32 %v2826, %v5101
      %v5129 = vmul.f32 %v2827, %v5101
      %v5130 = vmul.f32 %v2828, %v5101
      %v5131 = vmul.f32 %v2829, %v5101
      %v5132 = vmul.f32 %v2830, %v5101
      %v5133 = vmul.f32 %v2831, %v5101
      %v5134 = vmul.f32 %v2832, %v5101
      %v5135 = vmul.f32 %v2833, %v5101
      %v5136 = vadd.f32 %v5104, %v5103
      %v5137 = vadd.f32 %v5105, %v5103
      %v5138 = vadd.f32 %v5106, %v5103
      %v5139 = vadd.f32 %v5107, %v5103
      %v5140 = vadd.f32 %v5108, %v5103
      %v5141 = vadd.f32 %v5109, %v5103
      %v5142 = vadd.f32 %v5110, %v5103
      %v5143 = vadd.f32 %v5111, %v5103
      %v5144 = vadd.f32 %v5112, %v5103
      %v5145 = vadd.f32 %v5113, %v5103
      %v5146 = vadd.f32 %v5114, %v5103
      %v5147 = vadd.f32 %v5115, %v5103
      %v5148 = vadd.f32 %v5116, %v5103
      %v5149 = vadd.f32 %v5117, %v5103
      %v5150 = vadd.f32 %v5118, %v5103
      %v5151 = vadd.f32 %v5119, %v5103
      %v5152 = vadd.f32 %v5120, %v5103
      %v5153 = vadd.f32 %v5121, %v5103
      %v5154 = vadd.f32 %v5122, %v5103
      %v5155 = vadd.f32 %v5123, %v5103
      %v5156 = vadd.f32 %v5124, %v5103
      %v5157 = vadd.f32 %v5125, %v5103
      %v5158 = vadd.f32 %v5126, %v5103
      %v5159 = vadd.f32 %v5127, %v5103
      %v5160 = vadd.f32 %v5128, %v5103
      %v5161 = vadd.f32 %v5129, %v5103
      %v5162 = vadd.f32 %v5130, %v5103
      %v5163 = vadd.f32 %v5131, %v5103
      %v5164 = vadd.f32 %v5132, %v5103
      %v5165 = vadd.f32 %v5133, %v5103
      %v5166 = vadd.f32 %v5134, %v5103
      %v5167 = vadd.f32 %v5135, %v5103
      %v5168 = vmax.f32 %v5136, 0.0
      %v5169 = vmax.f32 %v5137, 0.0
      %v5170 = vmax.f32 %v5138, 0.0
      %v5171 = vmax.f32 %v5139, 0.0
      %v5172 = vmax.f32 %v5140, 0.0
      %v5173 = vmax.f32 %v5141, 0.0
      %v5174 = vmax.f32 %v5142, 0.0
      %v5175 = vmax.f32 %v5143, 0.0
      %v5176 = vmax.f32 %v5144, 0.0
      %v5177 = vmax.f32 %v5145, 0.0
      %v5178 = vmax.f32 %v5146, 0.0
      %v5179 = vmax.f32 %v5147, 0.0
      %v5180 = vmax.f32 %v5148, 0.0
      %v5181 = vmax.f32 %v5149, 0.0
      %v5182 = vmax.f32 %v5150, 0.0
      %v5183 = vmax.f32 %v5151, 0.0
      %v5184 = vmax.f32 %v5152, 0.0
      %v5185 = vmax.f32 %v5153, 0.0
      %v5186 = vmax.f32 %v5154, 0.0
      %v5187 = vmax.f32 %v5155, 0.0
      %v5188 = vmax.f32 %v5156, 0.0
      %v5189 = vmax.f32 %v5157, 0.0
      %v5190 = vmax.f32 %v5158, 0.0
      %v5191 = vmax.f32 %v5159, 0.0
      %v5192 = vmax.f32 %v5160, 0.0
      %v5193 = vmax.f32 %v5161, 0.0
      %v5194 = vmax.f32 %v5162, 0.0
      %v5195 = vmax.f32 %v5163, 0.0
      %v5196 = vmax.f32 %v5164, 0.0
      %v5197 = vmax.f32 %v5165, 0.0
      %v5198 = vmax.f32 %v5166, 0.0
      %v5199 = vmax.f32 %v5167, 0.0
      %5200 = vst [vmem:[%s143] sm:$0xff] %v5168
      %5201 = vst [vmem:[%s143 + $0x8] sm:$0xff] %v5169
      %5202 = vst [vmem:[%s143 + $0x10] sm:$0xff] %v5170
      %5203 = vst [vmem:[%s143 + $0x18] sm:$0xff] %v5171
      %5204 = vst [vmem:[%s143 + $0x20] sm:$0xff] %v5172
      %5205 = vst [vmem:[%s143 + $0x28] sm:$0xff] %v5173
      %5206 = vst [vmem:[%s143 + $0x30] sm:$0xff] %v5174
      %5207 = vst [vmem:[%s143 + $0x38] sm:$0xff] %v5175
      %5208 = vst [vmem:[%s143 + $0x40] sm:$0xff] %v5176
      %5209 = vst [vmem:[%s143 + $0x48] sm:$0xff] %v5177
      %5210 = vst [vmem:[%s143 + $0x50] sm:$0xff] %v5178
      %5211 = vst [vmem:[%s143 + $0x58] sm:$0xff] %v5179
      %5212 = vst [vmem:[%s143 + $0x60] sm:$0xff] %v5180
      %5213 = vst [vmem:[%s143 + $0x68] sm:$0xff] %v5181
      %5214 = vst [vmem:[%s143 + $0x70] sm:$0xff] %v5182
      %5215 = vst [vmem:[%s143 + $0x78] sm:$0xff] %v5183
      %5216 = vst [vmem:[%s143 + $0x80] sm:$0xff] %v5184
      %5217 = vst [vmem:[%s143 + $0x88] sm:$0xff] %v5185
      %5218 = vst [vmem:[%s143 + $0x90] sm:$0xff] %v5186
      %5219 = vst [vmem:[%s143 + $0x98] sm:$0xff] %v5187
      %5220 = vst [vmem:[%s143 + $0xa0] sm:$0xff] %v5188
      %5221 = vst [vmem:[%s143 + $0xa8] sm:$0xff] %v5189
      %5222 = vst [vmem:[%s143 + $0xb0] sm:$0xff] %v5190
      %5223 = vst [vmem:[%s143 + $0xb8] sm:$0xff] %v5191
      %5224 = vst [vmem:[%s143 + $0xc0] sm:$0xff] %v5192
      %5225 = vst [vmem:[%s143 + $0xc8] sm:$0xff] %v5193
      %5226 = vst [vmem:[%s143 + $0xd0] sm:$0xff] %v5194
      %5227 = vst [vmem:[%s143 + $0xd8] sm:$0xff] %v5195
      %5228 = vst [vmem:[%s143 + $0xe0] sm:$0xff] %v5196
      %5229 = vst [vmem:[%s143 + $0xe8] sm:$0xff] %v5197
      %5230 = vst [vmem:[%s143 + $0xf0] sm:$0xff] %v5198
      %5231 = vst [vmem:[%s143 + $0xf8] sm:$0xff] %v5199
      %v5232 = vmul.f32 %v3434, %v5101
      %v5233 = vmul.f32 %v3435, %v5101
      %v5234 = vmul.f32 %v3436, %v5101
      %v5235 = vmul.f32 %v3437, %v5101
      %v5236 = vmul.f32 %v3438, %v5101
      %v5237 = vmul.f32 %v3439, %v5101
      %v5238 = vmul.f32 %v3440, %v5101
      %v5239 = vmul.f32 %v3441, %v5101
      %v5240 = vmul.f32 %v3442, %v5101
      %v5241 = vmul.f32 %v3443, %v5101
      %v5242 = vmul.f32 %v3444, %v5101
      %v5243 = vmul.f32 %v3445, %v5101
      %v5244 = vmul.f32 %v3446, %v5101
      %v5245 = vmul.f32 %v3447, %v5101
      %v5246 = vmul.f32 %v3448, %v5101
      %v5247 = vmul.f32 %v3449, %v5101
      %v5248 = vmul.f32 %v3450, %v5101
      %v5249 = vmul.f32 %v3451, %v5101
      %v5250 = vmul.f32 %v3452, %v5101
      %v5251 = vmul.f32 %v3453, %v5101
      %v5252 = vmul.f32 %v3454, %v5101
      %v5253 = vmul.f32 %v3455, %v5101
      %v5254 = vmul.f32 %v3456, %v5101
      %v5255 = vmul.f32 %v3457, %v5101
      %v5256 = vmul.f32 %v3458, %v5101
      %v5257 = vmul.f32 %v3459, %v5101
      %v5258 = vmul.f32 %v3460, %v5101
      %v5259 = vmul.f32 %v3461, %v5101
      %v5260 = vmul.f32 %v3462, %v5101
      %v5261 = vmul.f32 %v3463, %v5101
      %v5262 = vmul.f32 %v3464, %v5101
      %v5263 = vmul.f32 %v3465, %v5101
      %v5264 = vadd.f32 %v5232, %v5103
      %v5265 = vadd.f32 %v5233, %v5103
      %v5266 = vadd.f32 %v5234, %v5103
      %v5267 = vadd.f32 %v5235, %v5103
      %v5268 = vadd.f32 %v5236, %v5103
      %v5269 = vadd.f32 %v5237, %v5103
      %v5270 = vadd.f32 %v5238, %v5103
      %v5271 = vadd.f32 %v5239, %v5103
      %v5272 = vadd.f32 %v5240, %v5103
      %v5273 = vadd.f32 %v5241, %v5103
      %v5274 = vadd.f32 %v5242, %v5103
      %v5275 = vadd.f32 %v5243, %v5103
      %v5276 = vadd.f32 %v5244, %v5103
      %v5277 = vadd.f32 %v5245, %v5103
      %v5278 = vadd.f32 %v5246, %v5103
      %v5279 = vadd.f32 %v5247, %v5103
      %v5280 = vadd.f32 %v5248, %v5103
      %v5281 = vadd.f32 %v5249, %v5103
      %v5282 = vadd.f32 %v5250, %v5103
      %v5283 = vadd.f32 %v5251, %v5103
      %v5284 = vadd.f32 %v5252, %v5103
      %v5285 = vadd.f32 %v5253, %v5103
      %v5286 = vadd.f32 %v5254, %v5103
      %v5287 = vadd.f32 %v5255, %v5103
      %v5288 = vadd.f32 %v5256, %v5103
      %v5289 = vadd.f32 %v5257, %v5103
      %v5290 = vadd.f32 %v5258, %v5103
      %v5291 = vadd.f32 %v5259, %v5103
      %v5292 = vadd.f32 %v5260, %v5103
      %v5293 = vadd.f32 %v5261, %v5103
      %v5294 = vadd.f32 %v5262, %v5103
      %v5295 = vadd.f32 %v5263, %v5103
      %v5296 = vmax.f32 %v5264, 0.0
      %v5297 = vmax.f32 %v5265, 0.0
      %v5298 = vmax.f32 %v5266, 0.0
      %v5299 = vmax.f32 %v5267, 0.0
      %v5300 = vmax.f32 %v5268, 0.0
      %v5301 = vmax.f32 %v5269, 0.0
      %v5302 = vmax.f32 %v5270, 0.0
      %v5303 = vmax.f32 %v5271, 0.0
      %v5304 = vmax.f32 %v5272, 0.0
      %v5305 = vmax.f32 %v5273, 0.0
      %v5306 = vmax.f32 %v5274, 0.0
      %v5307 = vmax.f32 %v5275, 0.0
      %v5308 = vmax.f32 %v5276, 0.0
      %v5309 = vmax.f32 %v5277, 0.0
      %v5310 = vmax.f32 %v5278, 0.0
      %v5311 = vmax.f32 %v5279, 0.0
      %v5312 = vmax.f32 %v5280, 0.0
      %v5313 = vmax.f32 %v5281, 0.0
      %v5314 = vmax.f32 %v5282, 0.0
      %v5315 = vmax.f32 %v5283, 0.0
      %v5316 = vmax.f32 %v5284, 0.0
      %v5317 = vmax.f32 %v5285, 0.0
      %v5318 = vmax.f32 %v5286, 0.0
      %v5319 = vmax.f32 %v5287, 0.0
      %v5320 = vmax.f32 %v5288, 0.0
      %v5321 = vmax.f32 %v5289, 0.0
      %v5322 = vmax.f32 %v5290, 0.0
      %v5323 = vmax.f32 %v5291, 0.0
      %v5324 = vmax.f32 %v5292, 0.0
      %v5325 = vmax.f32 %v5293, 0.0
      %v5326 = vmax.f32 %v5294, 0.0
      %v5327 = vmax.f32 %v5295, 0.0
      %5328 = vst [vmem:[%s143 + $0x100] sm:$0xff] %v5296
      %5329 = vst [vmem:[%s143 + $0x108] sm:$0xff] %v5297
      %5330 = vst [vmem:[%s143 + $0x110] sm:$0xff] %v5298
      %5331 = vst [vmem:[%s143 + $0x118] sm:$0xff] %v5299
      %5332 = vst [vmem:[%s143 + $0x120] sm:$0xff] %v5300
      %5333 = vst [vmem:[%s143 + $0x128] sm:$0xff] %v5301
      %5334 = vst [vmem:[%s143 + $0x130] sm:$0xff] %v5302
      %5335 = vst [vmem:[%s143 + $0x138] sm:$0xff] %v5303
      %5336 = vst [vmem:[%s143 + $0x140] sm:$0xff] %v5304
      %5337 = vst [vmem:[%s143 + $0x148] sm:$0xff] %v5305
      %5338 = vst [vmem:[%s143 + $0x150] sm:$0xff] %v5306
      %5339 = vst [vmem:[%s143 + $0x158] sm:$0xff] %v5307
      %5340 = vst [vmem:[%s143 + $0x160] sm:$0xff] %v5308
      %5341 = vst [vmem:[%s143 + $0x168] sm:$0xff] %v5309
      %5342 = vst [vmem:[%s143 + $0x170] sm:$0xff] %v5310
      %5343 = vst [vmem:[%s143 + $0x178] sm:$0xff] %v5311
      %5344 = vst [vmem:[%s143 + $0x180] sm:$0xff] %v5312
      %5345 = vst [vmem:[%s143 + $0x188] sm:$0xff] %v5313
      %5346 = vst [vmem:[%s143 + $0x190] sm:$0xff] %v5314
      %5347 = vst [vmem:[%s143 + $0x198] sm:$0xff] %v5315
      %5348 = vst [vmem:[%s143 + $0x1a0] sm:$0xff] %v5316
      %5349 = vst [vmem:[%s143 + $0x1a8] sm:$0xff] %v5317
      %5350 = vst [vmem:[%s143 + $0x1b0] sm:$0xff] %v5318
      %5351 = vst [vmem:[%s143 + $0x1b8] sm:$0xff] %v5319
      %5352 = vst [vmem:[%s143 + $0x1c0] sm:$0xff] %v5320
      %5353 = vst [vmem:[%s143 + $0x1c8] sm:$0xff] %v5321
      %5354 = vst [vmem:[%s143 + $0x1d0] sm:$0xff] %v5322
      %5355 = vst [vmem:[%s143 + $0x1d8] sm:$0xff] %v5323
      %5356 = vst [vmem:[%s143 + $0x1e0] sm:$0xff] %v5324
      %5357 = vst [vmem:[%s143 + $0x1e8] sm:$0xff] %v5325
      %5358 = vst [vmem:[%s143 + $0x1f0] sm:$0xff] %v5326
      %5359 = vst [vmem:[%s143 + $0x1f8] sm:$0xff] %v5327
      %v5360 = vmul.f32 %v4082, %v5101
      %v5361 = vmul.f32 %v4083, %v5101
      %v5362 = vmul.f32 %v4084, %v5101
      %v5363 = vmul.f32 %v4085, %v5101
      %v5364 = vmul.f32 %v4086, %v5101
      %v5365 = vmul.f32 %v4087, %v5101
      %v5366 = vmul.f32 %v4088, %v5101
      %v5367 = vmul.f32 %v4089, %v5101
      %v5368 = vmul.f32 %v4090, %v5101
      %v5369 = vmul.f32 %v4091, %v5101
      %v5370 = vmul.f32 %v4092, %v5101
      %v5371 = vmul.f32 %v4093, %v5101
      %v5372 = vmul.f32 %v4094, %v5101
      %v5373 = vmul.f32 %v4095, %v5101
      %v5374 = vmul.f32 %v4096, %v5101
      %v5375 = vmul.f32 %v4097, %v5101
      %v5376 = vmul.f32 %v4098, %v5101
      %v5377 = vmul.f32 %v4099, %v5101
      %v5378 = vmul.f32 %v4100, %v5101
      %v5379 = vmul.f32 %v4101, %v5101
      %v5380 = vmul.f32 %v4102, %v5101
      %v5381 = vmul.f32 %v4103, %v5101
      %v5382 = vmul.f32 %v4104, %v5101
      %v5383 = vmul.f32 %v4105, %v5101
      %v5384 = vmul.f32 %v4106, %v5101
      %v5385 = vmul.f32 %v4107, %v5101
      %v5386 = vmul.f32 %v4108, %v5101
      %v5387 = vmul.f32 %v4109, %v5101
      %v5388 = vmul.f32 %v4110, %v5101
      %v5389 = vmul.f32 %v4111, %v5101
      %v5390 = vmul.f32 %v4112, %v5101
      %v5391 = vmul.f32 %v4113, %v5101
      %v5392 = vadd.f32 %v5360, %v5103
      %v5393 = vadd.f32 %v5361, %v5103
      %v5394 = vadd.f32 %v5362, %v5103
      %v5395 = vadd.f32 %v5363, %v5103
      %v5396 = vadd.f32 %v5364, %v5103
      %v5397 = vadd.f32 %v5365, %v5103
      %v5398 = vadd.f32 %v5366, %v5103
      %v5399 = vadd.f32 %v5367, %v5103
      %v5400 = vadd.f32 %v5368, %v5103
      %v5401 = vadd.f32 %v5369, %v5103
      %v5402 = vadd.f32 %v5370, %v5103
      %v5403 = vadd.f32 %v5371, %v5103
      %v5404 = vadd.f32 %v5372, %v5103
      %v5405 = vadd.f32 %v5373, %v5103
      %v5406 = vadd.f32 %v5374, %v5103
      %v5407 = vadd.f32 %v5375, %v5103
      %v5408 = vadd.f32 %v5376, %v5103
      %v5409 = vadd.f32 %v5377, %v5103
      %v5410 = vadd.f32 %v5378, %v5103
      %v5411 = vadd.f32 %v5379, %v5103
      %v5412 = vadd.f32 %v5380, %v5103
      %v5413 = vadd.f32 %v5381, %v5103
      %v5414 = vadd.f32 %v5382, %v5103
      %v5415 = vadd.f32 %v5383, %v5103
      %v5416 = vadd.f32 %v5384, %v5103
      %v5417 = vadd.f32 %v5385, %v5103
      %v5418 = vadd.f32 %v5386, %v5103
      %v5419 = vadd.f32 %v5387, %v5103
      %v5420 = vadd.f32 %v5388, %v5103
      %v5421 = vadd.f32 %v5389, %v5103
      %v5422 = vadd.f32 %v5390, %v5103
      %v5423 = vadd.f32 %v5391, %v5103
      %v5424 = vmax.f32 %v5392, 0.0
      %v5425 = vmax.f32 %v5393, 0.0
      %v5426 = vmax.f32 %v5394, 0.0
      %v5427 = vmax.f32 %v5395, 0.0
      %v5428 = vmax.f32 %v5396, 0.0
      %v5429 = vmax.f32 %v5397, 0.0
      %v5430 = vmax.f32 %v5398, 0.0
      %v5431 = vmax.f32 %v5399, 0.0
      %v5432 = vmax.f32 %v5400, 0.0
      %v5433 = vmax.f32 %v5401, 0.0
      %v5434 = vmax.f32 %v5402, 0.0
      %v5435 = vmax.f32 %v5403, 0.0
      %v5436 = vmax.f32 %v5404, 0.0
      %v5437 = vmax.f32 %v5405, 0.0
      %v5438 = vmax.f32 %v5406, 0.0
      %v5439 = vmax.f32 %v5407, 0.0
      %v5440 = vmax.f32 %v5408, 0.0
      %v5441 = vmax.f32 %v5409, 0.0
      %v5442 = vmax.f32 %v5410, 0.0
      %v5443 = vmax.f32 %v5411, 0.0
      %v5444 = vmax.f32 %v5412, 0.0
      %v5445 = vmax.f32 %v5413, 0.0
      %v5446 = vmax.f32 %v5414, 0.0
      %v5447 = vmax.f32 %v5415, 0.0
      %v5448 = vmax.f32 %v5416, 0.0
      %v5449 = vmax.f32 %v5417, 0.0
      %v5450 = vmax.f32 %v5418, 0.0
      %v5451 = vmax.f32 %v5419, 0.0
      %v5452 = vmax.f32 %v5420, 0.0
      %v5453 = vmax.f32 %v5421, 0.0
      %v5454 = vmax.f32 %v5422, 0.0
      %v5455 = vmax.f32 %v5423, 0.0
      %5456 = vst [vmem:[%s143 + $0x200] sm:$0xff] %v5424
      %5457 = vst [vmem:[%s143 + $0x208] sm:$0xff] %v5425
      %5458 = vst [vmem:[%s143 + $0x210] sm:$0xff] %v5426
      %5459 = vst [vmem:[%s143 + $0x218] sm:$0xff] %v5427
      %5460 = vst [vmem:[%s143 + $0x220] sm:$0xff] %v5428
      %5461 = vst [vmem:[%s143 + $0x228] sm:$0xff] %v5429
      %5462 = vst [vmem:[%s143 + $0x230] sm:$0xff] %v5430
      %5463 = vst [vmem:[%s143 + $0x238] sm:$0xff] %v5431
      %5464 = vst [vmem:[%s143 + $0x240] sm:$0xff] %v5432
      %5465 = vst [vmem:[%s143 + $0x248] sm:$0xff] %v5433
      %5466 = vst [vmem:[%s143 + $0x250] sm:$0xff] %v5434
      %5467 = vst [vmem:[%s143 + $0x258] sm:$0xff] %v5435
      %5468 = vst [vmem:[%s143 + $0x260] sm:$0xff] %v5436
      %5469 = vst [vmem:[%s143 + $0x268] sm:$0xff] %v5437
      %5470 = vst [vmem:[%s143 + $0x270] sm:$0xff] %v5438
      %5471 = vst [vmem:[%s143 + $0x278] sm:$0xff] %v5439
      %5472 = vst [vmem:[%s143 + $0x280] sm:$0xff] %v5440
      %5473 = vst [vmem:[%s143 + $0x288] sm:$0xff] %v5441
      %5474 = vst [vmem:[%s143 + $0x290] sm:$0xff] %v5442
      %5475 = vst [vmem:[%s143 + $0x298] sm:$0xff] %v5443
      %5476 = vst [vmem:[%s143 + $0x2a0] sm:$0xff] %v5444
      %5477 = vst [vmem:[%s143 + $0x2a8] sm:$0xff] %v5445
      %5478 = vst [vmem:[%s143 + $0x2b0] sm:$0xff] %v5446
      %5479 = vst [vmem:[%s143 + $0x2b8] sm:$0xff] %v5447
      %5480 = vst [vmem:[%s143 + $0x2c0] sm:$0xff] %v5448
      %5481 = vst [vmem:[%s143 + $0x2c8] sm:$0xff] %v5449
      %5482 = vst [vmem:[%s143 + $0x2d0] sm:$0xff] %v5450
      %5483 = vst [vmem:[%s143 + $0x2d8] sm:$0xff] %v5451
      %5484 = vst [vmem:[%s143 + $0x2e0] sm:$0xff] %v5452
      %5485 = vst [vmem:[%s143 + $0x2e8] sm:$0xff] %v5453
      %5486 = vst [vmem:[%s143 + $0x2f0] sm:$0xff] %v5454
      %5487 = vst [vmem:[%s143 + $0x2f8] sm:$0xff] %v5455
      %v5488 = vmul.f32 %v4618, %v5101
      %v5489 = vmul.f32 %v4619, %v5101
      %v5490 = vmul.f32 %v4620, %v5101
      %v5491 = vmul.f32 %v4621, %v5101
      %v5492 = vmul.f32 %v4622, %v5101
      %v5493 = vmul.f32 %v4623, %v5101
      %v5494 = vmul.f32 %v4624, %v5101
      %v5495 = vmul.f32 %v4625, %v5101
      %v5496 = vmul.f32 %v4626, %v5101
      %v5497 = vmul.f32 %v4627, %v5101
      %v5498 = vmul.f32 %v4628, %v5101
      %v5499 = vmul.f32 %v4629, %v5101
      %v5500 = vmul.f32 %v4630, %v5101
      %v5501 = vmul.f32 %v4631, %v5101
      %v5502 = vmul.f32 %v4632, %v5101
      %v5503 = vmul.f32 %v4633, %v5101
      %v5504 = vmul.f32 %v4634, %v5101
      %v5505 = vmul.f32 %v4635, %v5101
      %v5506 = vmul.f32 %v4636, %v5101
      %v5507 = vmul.f32 %v4637, %v5101
      %v5508 = vmul.f32 %v4638, %v5101
      %v5509 = vmul.f32 %v4639, %v5101
      %v5510 = vmul.f32 %v4640, %v5101
      %v5511 = vmul.f32 %v4641, %v5101
      %v5512 = vmul.f32 %v4642, %v5101
      %v5513 = vmul.f32 %v4643, %v5101
      %v5514 = vmul.f32 %v4644, %v5101
      %v5515 = vmul.f32 %v4645, %v5101
      %v5516 = vmul.f32 %v4646, %v5101
      %v5517 = vmul.f32 %v4647, %v5101
      %v5518 = vmul.f32 %v4648, %v5101
      %v5519 = vmul.f32 %v4649, %v5101
      %v5520 = vadd.f32 %v5488, %v5103
      %v5521 = vadd.f32 %v5489, %v5103
      %v5522 = vadd.f32 %v5490, %v5103
      %v5523 = vadd.f32 %v5491, %v5103
      %v5524 = vadd.f32 %v5492, %v5103
      %v5525 = vadd.f32 %v5493, %v5103
      %v5526 = vadd.f32 %v5494, %v5103
      %v5527 = vadd.f32 %v5495, %v5103
      %v5528 = vadd.f32 %v5496, %v5103
      %v5529 = vadd.f32 %v5497, %v5103
      %v5530 = vadd.f32 %v5498, %v5103
      %v5531 = vadd.f32 %v5499, %v5103
      %v5532 = vadd.f32 %v5500, %v5103
      %v5533 = vadd.f32 %v5501, %v5103
      %v5534 = vadd.f32 %v5502, %v5103
      %v5535 = vadd.f32 %v5503, %v5103
      %v5536 = vadd.f32 %v5504, %v5103
      %v5537 = vadd.f32 %v5505, %v5103
      %v5538 = vadd.f32 %v5506, %v5103
      %v5539 = vadd.f32 %v5507, %v5103
      %v5540 = vadd.f32 %v5508, %v5103
      %v5541 = vadd.f32 %v5509, %v5103
      %v5542 = vadd.f32 %v5510, %v5103
      %v5543 = vadd.f32 %v5511, %v5103
      %v5544 = vadd.f32 %v5512, %v5103
      %v5545 = vadd.f32 %v5513, %v5103
      %v5546 = vadd.f32 %v5514, %v5103
      %v5547 = vadd.f32 %v5515, %v5103
      %v5548 = vadd.f32 %v5516, %v5103
      %v5549 = vadd.f32 %v5517, %v5103
      %v5550 = vadd.f32 %v5518, %v5103
      %v5551 = vadd.f32 %v5519, %v5103
      %v5552 = vmax.f32 %v5520, 0.0
      %v5553 = vmax.f32 %v5521, 0.0
      %v5554 = vmax.f32 %v5522, 0.0
      %v5555 = vmax.f32 %v5523, 0.0
      %v5556 = vmax.f32 %v5524, 0.0
      %v5557 = vmax.f32 %v5525, 0.0
      %v5558 = vmax.f32 %v5526, 0.0
      %v5559 = vmax.f32 %v5527, 0.0
      %v5560 = vmax.f32 %v5528, 0.0
      %v5561 = vmax.f32 %v5529, 0.0
      %v5562 = vmax.f32 %v5530, 0.0
      %v5563 = vmax.f32 %v5531, 0.0
      %v5564 = vmax.f32 %v5532, 0.0
      %v5565 = vmax.f32 %v5533, 0.0
      %v5566 = vmax.f32 %v5534, 0.0
      %v5567 = vmax.f32 %v5535, 0.0
      %v5568 = vmax.f32 %v5536, 0.0
      %v5569 = vmax.f32 %v5537, 0.0
      %v5570 = vmax.f32 %v5538, 0.0
      %v5571 = vmax.f32 %v5539, 0.0
      %v5572 = vmax.f32 %v5540, 0.0
      %v5573 = vmax.f32 %v5541, 0.0
      %v5574 = vmax.f32 %v5542, 0.0
      %v5575 = vmax.f32 %v5543, 0.0
      %v5576 = vmax.f32 %v5544, 0.0
      %v5577 = vmax.f32 %v5545, 0.0
      %v5578 = vmax.f32 %v5546, 0.0
      %v5579 = vmax.f32 %v5547, 0.0
      %v5580 = vmax.f32 %v5548, 0.0
      %v5581 = vmax.f32 %v5549, 0.0
      %v5582 = vmax.f32 %v5550, 0.0
      %v5583 = vmax.f32 %v5551, 0.0
      %5584 = vst [vmem:[%s143 + $0x300] sm:$0xff] %v5552
      %5585 = vst [vmem:[%s143 + $0x308] sm:$0xff] %v5553
      %5586 = vst [vmem:[%s143 + $0x310] sm:$0xff] %v5554
      %5587 = vst [vmem:[%s143 + $0x318] sm:$0xff] %v5555
      %5588 = vst [vmem:[%s143 + $0x320] sm:$0xff] %v5556
      %5589 = vst [vmem:[%s143 + $0x328] sm:$0xff] %v5557
      %5590 = vst [vmem:[%s143 + $0x330] sm:$0xff] %v5558
      %5591 = vst [vmem:[%s143 + $0x338] sm:$0xff] %v5559
      %5592 = vst [vmem:[%s143 + $0x340] sm:$0xff] %v5560
      %5593 = vst [vmem:[%s143 + $0x348] sm:$0xff] %v5561
      %5594 = vst [vmem:[%s143 + $0x350] sm:$0xff] %v5562
      %5595 = vst [vmem:[%s143 + $0x358] sm:$0xff] %v5563
      %5596 = vst [vmem:[%s143 + $0x360] sm:$0xff] %v5564
      %5597 = vst [vmem:[%s143 + $0x368] sm:$0xff] %v5565
      %5598 = vst [vmem:[%s143 + $0x370] sm:$0xff] %v5566
      %5599 = vst [vmem:[%s143 + $0x378] sm:$0xff] %v5567
      %5600 = vst [vmem:[%s143 + $0x380] sm:$0xff] %v5568
      %5601 = vst [vmem:[%s143 + $0x388] sm:$0xff] %v5569
      %5602 = vst [vmem:[%s143 + $0x390] sm:$0xff] %v5570
      %5603 = vst [vmem:[%s143 + $0x398] sm:$0xff] %v5571
      %5604 = vst [vmem:[%s143 + $0x3a0] sm:$0xff] %v5572
      %5605 = vst [vmem:[%s143 + $0x3a8] sm:$0xff] %v5573
      %5606 = vst [vmem:[%s143 + $0x3b0] sm:$0xff] %v5574
      %5607 = vst [vmem:[%s143 + $0x3b8] sm:$0xff] %v5575
      %5608 = vst [vmem:[%s143 + $0x3c0] sm:$0xff] %v5576
      %5609 = vst [vmem:[%s143 + $0x3c8] sm:$0xff] %v5577
      %5610 = vst [vmem:[%s143 + $0x3d0] sm:$0xff] %v5578
      %5611 = vst [vmem:[%s143 + $0x3d8] sm:$0xff] %v5579
      %5612 = vst [vmem:[%s143 + $0x3e0] sm:$0xff] %v5580
      %5613 = vst [vmem:[%s143 + $0x3e8] sm:$0xff] %v5581
      %5614 = vst [vmem:[%s143 + $0x3f0] sm:$0xff] %v5582
      %5615 = vst [vmem:[%s143 + $0x3f8] sm:$0xff] %v5583
      %p5616 = scmp.lt.s32.totalorder %s13, 1
      %s5617 = scalar_select %p5616, %s13, 1
      %s5618 = smul.addr %s5617, 128
      %s5619 = smul.addr %s5618, 8
      %s5620 = scalar_lea.vmem %s2, %s5619
      // Predicated region
      $region29: #{unet_up.1} parent=27 // pred_check
        %p5621 = pneg %p78
      $region30: #{unet_up.1} parent=27 // pred_check_branch
        %5623 = sbr.rel (%p5621) target = $region32
      $region31: #{unet_up.1} parent=27 // pred_region
        _
      $region32: #{unet_up.1} parent=27 // pred_fallthru
        _
    $region28: #{unet_up.1} parent=5 // pred_fallthru
      _
    %p5624 = scmp.le.s32.totalorder 2, %s8
    // Predicated region
    $region33: #{unet_up.1} parent=5 // pred_check
      %p5625 = pneg %p5624
    $region34: #{unet_up.1} parent=5 // pred_check_branch
      %5627 = sbr.rel (%p5625) target = $region36
    $region35: #{unet_up.1} parent=5 // pred_region
      %s5628 = ssub.s32 %s8, 2
      // Predicated region
      $region37: #{unet_up.1} parent=35 // pred_check
        %p5629 = pneg %p84
      $region38: #{unet_up.1} parent=35 // pred_check_branch
        %5631 = sbr.rel (%p5629) target = $region40
      $region39: #{unet_up.1} parent=35 // pred_region
        %p5632 = scmp.lt.s32.totalorder %s14, 1
        %s5633 = scalar_select %p5632, %s14, 1
        %s5634 = smul.addr %s5633, 128
        %s5635 = smul.addr %s5634, 8
        %s5636 = scalar_lea.vmem %s2, %s5635
      $region40: #{unet_up.1} parent=35 // pred_fallthru
        _
    $region36: #{unet_up.1} parent=5 // pred_fallthru
      _
  $region6: #{unet_up.1} parent=0 // loop_footer
    %s12 = sadd.s32 1, %s8
  $region7: #{unet_up.1} parent=0 // loop_footer_branch
    %7 = sbr.rel target = $region3
  $region8: #{unet_up.1} parent=0 // loop_exit
    _

</llo_original>
